<compile_context>
chip_gen: v7x
topology: tpu7x:2x2x1
jax: 0.10.0
libtpu: 0.0.40
codegen_flags: <defaults>
</compile_context>

<pallas_src>
import jax
import jax.numpy as jnp
import numpy as np
from jax import lax
from jax.experimental import pallas as pl
from jax.experimental.pallas import tpu as pltpu

# Problem sizes (small, consistent with the module: 3 input channels).
N, H, W = 2, 16, 16
HW = H * W
C_IN, C_MID, C_OUT = 3, 3, 1
K = 3  # 3x3 kernels, stride 1, padding 1 ("same")

assert W & (W - 1) == 0, "W must be a power of two (col = idx & (W-1))"


def _conv3x3(planes, w_ref, b_ref, cout, masks, relu):
    """3x3 'same' conv over a list of per-channel (N, HW) in-register planes.

    Weights are flattened (cout, cin, 3, 3) row-major in SMEM; bias in SMEM.
    Taps are built by lane-rolling each plane by dh*W + dw and zeroing the
    border positions with precomputed masks.  Returns a list of `cout`
    (N, HW) float32 planes.
    """
    cin = len(planes)
    # Hoist every scalar weight read (SMEM) out of the vector loops.
    wv = [w_ref[i] for i in range(cout * cin * K * K)]
    accs = [jnp.full((N, HW), b_ref[co], dtype=jnp.float32)
            for co in range(cout)]
    for ci, plane in enumerate(planes):           # ci-outer: load/shift once
        for kh in range(K):
            dh = kh - 1
            for kw in range(K):
                dw = kw - 1
                s = dh * W + dw                   # flattened spatial shift
                shifted = plane if s == 0 else pltpu.roll(plane, (-s) % HW, 1)
                m = masks[(dh, dw)]
                tap = shifted if m is None else jnp.where(m, shifted, 0.0)
                for co in range(cout):            # co-inner: reuse the tap
                    widx = ((co * cin + ci) * K + kh) * K + kw
                    accs[co] = accs[co] + tap * wv[widx]
    if relu:
        accs = [jnp.maximum(a, 0.0) for a in accs]
    return accs


def l3agg_kernel(x_ref, w0_ref, b0_ref, w1_ref, b1_ref, w2_ref, b2_ref,
                 out_ref):
    # Border-validity masks for the 8 off-center taps (shared by all 3 convs).
    idx = lax.broadcasted_iota(jnp.int32, (N, HW), 1)
    col = jnp.bitwise_and(idx, W - 1)             # idx % W  (W power of two)
    row_ok = {-1: idx >= W,                       # row - 1 >= 0
              0: None,
              1: idx < (H - 1) * W}               # row + 1 <= H - 1
    col_ok = {-1: col != 0,                       # col - 1 >= 0
              0: None,
              1: col != W - 1}                    # col + 1 <= W - 1
    masks = {}
    for dh in (-1, 0, 1):
        for dw in (-1, 0, 1):
            m = None
            for c in (row_ok[dh], col_ok[dw]):
                if c is not None:
                    m = c if m is None else (m & c)
            masks[(dh, dw)] = m

    # Load the whole input once; everything downstream stays in registers.
    x = x_ref[...]                                # (N, C_IN, HW)
    p0 = [x[:, ci, :] for ci in range(C_IN)]      # per-channel (N, HW) planes

    p1 = _conv3x3(p0, w0_ref, b0_ref, C_MID, masks, relu=True)   # conv0+relu
    p2 = _conv3x3(p1, w1_ref, b1_ref, C_MID, masks, relu=True)   # conv1+relu
    p3 = _conv3x3(p2, w2_ref, b2_ref, C_OUT, masks, relu=False)  # conv2

    out_ref[...] = p3[0]                          # (N, HW): lane-dense store


@jax.jit
def l3agg_forward(x, w0, b0, w1, b1, w2, b2):
    """x: (N, 3, H, W) float32 -> (N, 1, H, W) float32."""
    assert x.shape == (N, C_IN, H, W)
    x2 = x.reshape(N, C_IN, HW)                   # contiguous => free reshape
    smem = pl.BlockSpec(memory_space=pltpu.MemorySpace.SMEM)
    vmem = pl.BlockSpec(memory_space=pltpu.MemorySpace.VMEM)
    # Note: a grid=(N,) batch split (dimension_semantics=("parallel",)) is a
    # v7x-only experiment; at this size the kernel is launch-bound, so it is
    # kept single-shot here.
    out = pl.pallas_call(
        l3agg_kernel,
        out_shape=jax.ShapeDtypeStruct((N, HW), jnp.float32),
        in_specs=[vmem, smem, smem, smem, smem, smem, smem],
        out_specs=vmem,
    )(x2, w0.reshape(-1), b0, w1.reshape(-1), b1, w2.reshape(-1), b2)
    return out.reshape(N, C_OUT, H, W)


def _reference(x, w0, b0, w1, b1, w2, b2):
    """Pure-JAX reference (NCHW / OIHW, padding=1)."""
    dn = ('NCHW', 'OIHW', 'NCHW')

    def conv(a, w, b):
        y = jax.lax.conv_general_dilated(a, w, (1, 1), 'SAME',
                                         dimension_numbers=dn)
        return y + b.reshape(1, -1, 1, 1)

    t = jnp.maximum(conv(x, w0, b0), 0.0)
    t = jnp.maximum(conv(t, w1, b1), 0.0)
    return conv(t, w2, b2)


if __name__ == "__main__":
    key = jax.random.PRNGKey(0)
    kx, k0, kb0, k1, kb1, k2, kb2 = jax.random.split(key, 7)

    x = jax.random.normal(kx, (N, C_IN, H, W), dtype=jnp.float32)

    # Deterministic parameter init (PyTorch Conv2d shapes: OIHW weights).
    scale = 0.1
    w0 = scale * jax.random.normal(k0, (C_MID, C_IN, K, K), dtype=jnp.float32)
    b0 = scale * jax.random.normal(kb0, (C_MID,), dtype=jnp.float32)
    w1 = scale * jax.random.normal(k1, (C_MID, C_MID, K, K), dtype=jnp.float32)
    b1 = scale * jax.random.normal(kb1, (C_MID,), dtype=jnp.float32)
    w2 = scale * jax.random.normal(k2, (C_OUT, C_MID, K, K), dtype=jnp.float32)
    b2 = scale * jax.random.normal(kb2, (C_OUT,), dtype=jnp.float32)

    out = jax.block_until_ready(l3agg_forward(x, w0, b0, w1, b1, w2, b2))
    ref = jax.block_until_ready(_reference(x, w0, b0, w1, b1, w2, b2))

    assert out.shape == (N, C_OUT, H, W), out.shape
    np.testing.assert_allclose(np.asarray(out), np.asarray(ref),
                               rtol=1e-4, atol=1e-4)
    print("KERNEL_OK")
</pallas_src>

<mosaic_0001>
module attributes {stable_mosaic.version = 11 : i64} {
  func.func @l3agg_kernel(%arg0: memref<2x3x256xf32, #tpu.memory_space<vmem>>, %arg1: memref<81xf32, #tpu.memory_space<smem>>, %arg2: memref<3xf32, #tpu.memory_space<smem>>, %arg3: memref<81xf32, #tpu.memory_space<smem>>, %arg4: memref<3xf32, #tpu.memory_space<smem>>, %arg5: memref<27xf32, #tpu.memory_space<smem>>, %arg6: memref<1xf32, #tpu.memory_space<smem>>, %arg7: memref<2x256xf32, #tpu.memory_space<vmem>>) attributes {dimension_semantics = [], scalar_prefetch = 0 : i64, scratch_operands = 0 : i64, tpu.core_type = #tpu.core_type<tc>} {
    %0 = tpu.iota {dimensions = array<i32: 1>} : vector<2x256xi32>
    %c15_i32 = arith.constant 15 : i32
    %1 = vector.broadcast %c15_i32 : i32 to vector<2x256xi32>
    %2 = arith.andi %0, %1 : vector<2x256xi32>
    %c16_i32 = arith.constant 16 : i32
    %3 = vector.broadcast %c16_i32 : i32 to vector<2x256xi32>
    %4 = arith.cmpi sge, %0, %3 : vector<2x256xi32>
    %c240_i32 = arith.constant 240 : i32
    %5 = vector.broadcast %c240_i32 : i32 to vector<2x256xi32>
    %6 = arith.cmpi slt, %0, %5 : vector<2x256xi32>
    %c0_i32 = arith.constant 0 : i32
    %7 = vector.broadcast %c0_i32 : i32 to vector<2x256xi32>
    %8 = arith.cmpi ne, %2, %7 : vector<2x256xi32>
    %c15_i32_0 = arith.constant 15 : i32
    %9 = vector.broadcast %c15_i32_0 : i32 to vector<2x256xi32>
    %10 = arith.cmpi ne, %2, %9 : vector<2x256xi32>
    %11 = arith.andi %4, %8 : vector<2x256xi1>
    %12 = arith.andi %4, %10 : vector<2x256xi1>
    %13 = arith.andi %6, %8 : vector<2x256xi1>
    %14 = arith.andi %6, %10 : vector<2x256xi1>
    %c0 = arith.constant 0 : index
    %c0_1 = arith.constant 0 : index
    %c0_2 = arith.constant 0 : index
    %15 = vector.load %arg0[%c0, %c0_1, %c0_2] : memref<2x3x256xf32, #tpu.memory_space<vmem>>, vector<2x3x256xf32>
    %16 = vector.extract_strided_slice %15 {offsets = [0, 0, 0], sizes = [2, 1, 256], strides = [1, 1, 1]} : vector<2x3x256xf32> to vector<2x1x256xf32>
    %17 = vector.shape_cast %16 : vector<2x1x256xf32> to vector<2x256xf32>
    %18 = vector.extract_strided_slice %15 {offsets = [0, 1, 0], sizes = [2, 1, 256], strides = [1, 1, 1]} : vector<2x3x256xf32> to vector<2x1x256xf32>
    %19 = vector.shape_cast %18 : vector<2x1x256xf32> to vector<2x256xf32>
    %20 = vector.extract_strided_slice %15 {offsets = [0, 2, 0], sizes = [2, 1, 256], strides = [1, 1, 1]} : vector<2x3x256xf32> to vector<2x1x256xf32>
    %21 = vector.shape_cast %20 : vector<2x1x256xf32> to vector<2x256xf32>
    %c0_3 = arith.constant 0 : index
    %22 = memref.load %arg1[%c0_3] : memref<81xf32, #tpu.memory_space<smem>>
    %c1 = arith.constant 1 : index
    %23 = memref.load %arg1[%c1] : memref<81xf32, #tpu.memory_space<smem>>
    %c2 = arith.constant 2 : index
    %24 = memref.load %arg1[%c2] : memref<81xf32, #tpu.memory_space<smem>>
    %c3 = arith.constant 3 : index
    %25 = memref.load %arg1[%c3] : memref<81xf32, #tpu.memory_space<smem>>
    %c4 = arith.constant 4 : index
    %26 = memref.load %arg1[%c4] : memref<81xf32, #tpu.memory_space<smem>>
    %c5 = arith.constant 5 : index
    %27 = memref.load %arg1[%c5] : memref<81xf32, #tpu.memory_space<smem>>
    %c6 = arith.constant 6 : index
    %28 = memref.load %arg1[%c6] : memref<81xf32, #tpu.memory_space<smem>>
    %c7 = arith.constant 7 : index
    %29 = memref.load %arg1[%c7] : memref<81xf32, #tpu.memory_space<smem>>
    %c8 = arith.constant 8 : index
    %30 = memref.load %arg1[%c8] : memref<81xf32, #tpu.memory_space<smem>>
    %c9 = arith.constant 9 : index
    %31 = memref.load %arg1[%c9] : memref<81xf32, #tpu.memory_space<smem>>
    %c10 = arith.constant 10 : index
    %32 = memref.load %arg1[%c10] : memref<81xf32, #tpu.memory_space<smem>>
    %c11 = arith.constant 11 : index
    %33 = memref.load %arg1[%c11] : memref<81xf32, #tpu.memory_space<smem>>
    %c12 = arith.constant 12 : index
    %34 = memref.load %arg1[%c12] : memref<81xf32, #tpu.memory_space<smem>>
    %c13 = arith.constant 13 : index
    %35 = memref.load %arg1[%c13] : memref<81xf32, #tpu.memory_space<smem>>
    %c14 = arith.constant 14 : index
    %36 = memref.load %arg1[%c14] : memref<81xf32, #tpu.memory_space<smem>>
    %c15 = arith.constant 15 : index
    %37 = memref.load %arg1[%c15] : memref<81xf32, #tpu.memory_space<smem>>
    %c16 = arith.constant 16 : index
    %38 = memref.load %arg1[%c16] : memref<81xf32, #tpu.memory_space<smem>>
    %c17 = arith.constant 17 : index
    %39 = memref.load %arg1[%c17] : memref<81xf32, #tpu.memory_space<smem>>
    %c18 = arith.constant 18 : index
    %40 = memref.load %arg1[%c18] : memref<81xf32, #tpu.memory_space<smem>>
    %c19 = arith.constant 19 : index
    %41 = memref.load %arg1[%c19] : memref<81xf32, #tpu.memory_space<smem>>
    %c20 = arith.constant 20 : index
    %42 = memref.load %arg1[%c20] : memref<81xf32, #tpu.memory_space<smem>>
    %c21 = arith.constant 21 : index
    %43 = memref.load %arg1[%c21] : memref<81xf32, #tpu.memory_space<smem>>
    %c22 = arith.constant 22 : index
    %44 = memref.load %arg1[%c22] : memref<81xf32, #tpu.memory_space<smem>>
    %c23 = arith.constant 23 : index
    %45 = memref.load %arg1[%c23] : memref<81xf32, #tpu.memory_space<smem>>
    %c24 = arith.constant 24 : index
    %46 = memref.load %arg1[%c24] : memref<81xf32, #tpu.memory_space<smem>>
    %c25 = arith.constant 25 : index
    %47 = memref.load %arg1[%c25] : memref<81xf32, #tpu.memory_space<smem>>
    %c26 = arith.constant 26 : index
    %48 = memref.load %arg1[%c26] : memref<81xf32, #tpu.memory_space<smem>>
    %c27 = arith.constant 27 : index
    %49 = memref.load %arg1[%c27] : memref<81xf32, #tpu.memory_space<smem>>
    %c28 = arith.constant 28 : index
    %50 = memref.load %arg1[%c28] : memref<81xf32, #tpu.memory_space<smem>>
    %c29 = arith.constant 29 : index
    %51 = memref.load %arg1[%c29] : memref<81xf32, #tpu.memory_space<smem>>
    %c30 = arith.constant 30 : index
    %52 = memref.load %arg1[%c30] : memref<81xf32, #tpu.memory_space<smem>>
    %c31 = arith.constant 31 : index
    %53 = memref.load %arg1[%c31] : memref<81xf32, #tpu.memory_space<smem>>
    %c32 = arith.constant 32 : index
    %54 = memref.load %arg1[%c32] : memref<81xf32, #tpu.memory_space<smem>>
    %c33 = arith.constant 33 : index
    %55 = memref.load %arg1[%c33] : memref<81xf32, #tpu.memory_space<smem>>
    %c34 = arith.constant 34 : index
    %56 = memref.load %arg1[%c34] : memref<81xf32, #tpu.memory_space<smem>>
    %c35 = arith.constant 35 : index
    %57 = memref.load %arg1[%c35] : memref<81xf32, #tpu.memory_space<smem>>
    %c36 = arith.constant 36 : index
    %58 = memref.load %arg1[%c36] : memref<81xf32, #tpu.memory_space<smem>>
    %c37 = arith.constant 37 : index
    %59 = memref.load %arg1[%c37] : memref<81xf32, #tpu.memory_space<smem>>
    %c38 = arith.constant 38 : index
    %60 = memref.load %arg1[%c38] : memref<81xf32, #tpu.memory_space<smem>>
    %c39 = arith.constant 39 : index
    %61 = memref.load %arg1[%c39] : memref<81xf32, #tpu.memory_space<smem>>
    %c40 = arith.constant 40 : index
    %62 = memref.load %arg1[%c40] : memref<81xf32, #tpu.memory_space<smem>>
    %c41 = arith.constant 41 : index
    %63 = memref.load %arg1[%c41] : memref<81xf32, #tpu.memory_space<smem>>
    %c42 = arith.constant 42 : index
    %64 = memref.load %arg1[%c42] : memref<81xf32, #tpu.memory_space<smem>>
    %c43 = arith.constant 43 : index
    %65 = memref.load %arg1[%c43] : memref<81xf32, #tpu.memory_space<smem>>
    %c44 = arith.constant 44 : index
    %66 = memref.load %arg1[%c44] : memref<81xf32, #tpu.memory_space<smem>>
    %c45 = arith.constant 45 : index
    %67 = memref.load %arg1[%c45] : memref<81xf32, #tpu.memory_space<smem>>
    %c46 = arith.constant 46 : index
    %68 = memref.load %arg1[%c46] : memref<81xf32, #tpu.memory_space<smem>>
    %c47 = arith.constant 47 : index
    %69 = memref.load %arg1[%c47] : memref<81xf32, #tpu.memory_space<smem>>
    %c48 = arith.constant 48 : index
    %70 = memref.load %arg1[%c48] : memref<81xf32, #tpu.memory_space<smem>>
    %c49 = arith.constant 49 : index
    %71 = memref.load %arg1[%c49] : memref<81xf32, #tpu.memory_space<smem>>
    %c50 = arith.constant 50 : index
    %72 = memref.load %arg1[%c50] : memref<81xf32, #tpu.memory_space<smem>>
    %c51 = arith.constant 51 : index
    %73 = memref.load %arg1[%c51] : memref<81xf32, #tpu.memory_space<smem>>
    %c52 = arith.constant 52 : index
    %74 = memref.load %arg1[%c52] : memref<81xf32, #tpu.memory_space<smem>>
    %c53 = arith.constant 53 : index
    %75 = memref.load %arg1[%c53] : memref<81xf32, #tpu.memory_space<smem>>
    %c54 = arith.constant 54 : index
    %76 = memref.load %arg1[%c54] : memref<81xf32, #tpu.memory_space<smem>>
    %c55 = arith.constant 55 : index
    %77 = memref.load %arg1[%c55] : memref<81xf32, #tpu.memory_space<smem>>
    %c56 = arith.constant 56 : index
    %78 = memref.load %arg1[%c56] : memref<81xf32, #tpu.memory_space<smem>>
    %c57 = arith.constant 57 : index
    %79 = memref.load %arg1[%c57] : memref<81xf32, #tpu.memory_space<smem>>
    %c58 = arith.constant 58 : index
    %80 = memref.load %arg1[%c58] : memref<81xf32, #tpu.memory_space<smem>>
    %c59 = arith.constant 59 : index
    %81 = memref.load %arg1[%c59] : memref<81xf32, #tpu.memory_space<smem>>
    %c60 = arith.constant 60 : index
    %82 = memref.load %arg1[%c60] : memref<81xf32, #tpu.memory_space<smem>>
    %c61 = arith.constant 61 : index
    %83 = memref.load %arg1[%c61] : memref<81xf32, #tpu.memory_space<smem>>
    %c62 = arith.constant 62 : index
    %84 = memref.load %arg1[%c62] : memref<81xf32, #tpu.memory_space<smem>>
    %c63 = arith.constant 63 : index
    %85 = memref.load %arg1[%c63] : memref<81xf32, #tpu.memory_space<smem>>
    %c64 = arith.constant 64 : index
    %86 = memref.load %arg1[%c64] : memref<81xf32, #tpu.memory_space<smem>>
    %c65 = arith.constant 65 : index
    %87 = memref.load %arg1[%c65] : memref<81xf32, #tpu.memory_space<smem>>
    %c66 = arith.constant 66 : index
    %88 = memref.load %arg1[%c66] : memref<81xf32, #tpu.memory_space<smem>>
    %c67 = arith.constant 67 : index
    %89 = memref.load %arg1[%c67] : memref<81xf32, #tpu.memory_space<smem>>
    %c68 = arith.constant 68 : index
    %90 = memref.load %arg1[%c68] : memref<81xf32, #tpu.memory_space<smem>>
    %c69 = arith.constant 69 : index
    %91 = memref.load %arg1[%c69] : memref<81xf32, #tpu.memory_space<smem>>
    %c70 = arith.constant 70 : index
    %92 = memref.load %arg1[%c70] : memref<81xf32, #tpu.memory_space<smem>>
    %c71 = arith.constant 71 : index
    %93 = memref.load %arg1[%c71] : memref<81xf32, #tpu.memory_space<smem>>
    %c72 = arith.constant 72 : index
    %94 = memref.load %arg1[%c72] : memref<81xf32, #tpu.memory_space<smem>>
    %c73 = arith.constant 73 : index
    %95 = memref.load %arg1[%c73] : memref<81xf32, #tpu.memory_space<smem>>
    %c74 = arith.constant 74 : index
    %96 = memref.load %arg1[%c74] : memref<81xf32, #tpu.memory_space<smem>>
    %c75 = arith.constant 75 : index
    %97 = memref.load %arg1[%c75] : memref<81xf32, #tpu.memory_space<smem>>
    %c76 = arith.constant 76 : index
    %98 = memref.load %arg1[%c76] : memref<81xf32, #tpu.memory_space<smem>>
    %c77 = arith.constant 77 : index
    %99 = memref.load %arg1[%c77] : memref<81xf32, #tpu.memory_space<smem>>
    %c78 = arith.constant 78 : index
    %100 = memref.load %arg1[%c78] : memref<81xf32, #tpu.memory_space<smem>>
    %c79 = arith.constant 79 : index
    %101 = memref.load %arg1[%c79] : memref<81xf32, #tpu.memory_space<smem>>
    %c80 = arith.constant 80 : index
    %102 = memref.load %arg1[%c80] : memref<81xf32, #tpu.memory_space<smem>>
    %c0_4 = arith.constant 0 : index
    %103 = memref.load %arg2[%c0_4] : memref<3xf32, #tpu.memory_space<smem>>
    %104 = vector.broadcast %103 : f32 to vector<2x256xf32>
    %c1_5 = arith.constant 1 : index
    %105 = memref.load %arg2[%c1_5] : memref<3xf32, #tpu.memory_space<smem>>
    %106 = vector.broadcast %105 : f32 to vector<2x256xf32>
    %c2_6 = arith.constant 2 : index
    %107 = memref.load %arg2[%c2_6] : memref<3xf32, #tpu.memory_space<smem>>
    %108 = vector.broadcast %107 : f32 to vector<2x256xf32>
    %c17_i32 = arith.constant 17 : i32
    %109 = tpu.dynamic_rotate %17 by %c17_i32 dim 1 : vector<2x256xf32>, i32 -> vector<2x256xf32>
    %cst = arith.constant 0.000000e+00 : f32
    %110 = vector.broadcast %cst : f32 to vector<2x256xf32>
    %111 = arith.select %11, %109, %110 : vector<2x256xi1>, vector<2x256xf32>
    %112 = vector.broadcast %22 : f32 to vector<2x256xf32>
    %113 = arith.mulf %111, %112 : vector<2x256xf32>
    %114 = arith.addf %104, %113 : vector<2x256xf32>
    %115 = vector.broadcast %49 : f32 to vector<2x256xf32>
    %116 = arith.mulf %111, %115 : vector<2x256xf32>
    %117 = arith.addf %106, %116 : vector<2x256xf32>
    %118 = vector.broadcast %76 : f32 to vector<2x256xf32>
    %119 = arith.mulf %111, %118 : vector<2x256xf32>
    %120 = arith.addf %108, %119 : vector<2x256xf32>
    %c16_i32_7 = arith.constant 16 : i32
    %121 = tpu.dynamic_rotate %17 by %c16_i32_7 dim 1 : vector<2x256xf32>, i32 -> vector<2x256xf32>
    %cst_8 = arith.constant 0.000000e+00 : f32
    %122 = vector.broadcast %cst_8 : f32 to vector<2x256xf32>
    %123 = arith.select %4, %121, %122 : vector<2x256xi1>, vector<2x256xf32>
    %124 = vector.broadcast %23 : f32 to vector<2x256xf32>
    %125 = arith.mulf %123, %124 : vector<2x256xf32>
    %126 = arith.addf %114, %125 : vector<2x256xf32>
    %127 = vector.broadcast %50 : f32 to vector<2x256xf32>
    %128 = arith.mulf %123, %127 : vector<2x256xf32>
    %129 = arith.addf %117, %128 : vector<2x256xf32>
    %130 = vector.broadcast %77 : f32 to vector<2x256xf32>
    %131 = arith.mulf %123, %130 : vector<2x256xf32>
    %132 = arith.addf %120, %131 : vector<2x256xf32>
    %c15_i32_9 = arith.constant 15 : i32
    %133 = tpu.dynamic_rotate %17 by %c15_i32_9 dim 1 : vector<2x256xf32>, i32 -> vector<2x256xf32>
    %cst_10 = arith.constant 0.000000e+00 : f32
    %134 = vector.broadcast %cst_10 : f32 to vector<2x256xf32>
    %135 = arith.select %12, %133, %134 : vector<2x256xi1>, vector<2x256xf32>
    %136 = vector.broadcast %24 : f32 to vector<2x256xf32>
    %137 = arith.mulf %135, %136 : vector<2x256xf32>
    %138 = arith.addf %126, %137 : vector<2x256xf32>
    %139 = vector.broadcast %51 : f32 to vector<2x256xf32>
    %140 = arith.mulf %135, %139 : vector<2x256xf32>
    %141 = arith.addf %129, %140 : vector<2x256xf32>
    %142 = vector.broadcast %78 : f32 to vector<2x256xf32>
    %143 = arith.mulf %135, %142 : vector<2x256xf32>
    %144 = arith.addf %132, %143 : vector<2x256xf32>
    %c1_i32 = arith.constant 1 : i32
    %145 = tpu.dynamic_rotate %17 by %c1_i32 dim 1 : vector<2x256xf32>, i32 -> vector<2x256xf32>
    %cst_11 = arith.constant 0.000000e+00 : f32
    %146 = vector.broadcast %cst_11 : f32 to vector<2x256xf32>
    %147 = arith.select %8, %145, %146 : vector<2x256xi1>, vector<2x256xf32>
    %148 = vector.broadcast %25 : f32 to vector<2x256xf32>
    %149 = arith.mulf %147, %148 : vector<2x256xf32>
    %150 = arith.addf %138, %149 : vector<2x256xf32>
    %151 = vector.broadcast %52 : f32 to vector<2x256xf32>
    %152 = arith.mulf %147, %151 : vector<2x256xf32>
    %153 = arith.addf %141, %152 : vector<2x256xf32>
    %154 = vector.broadcast %79 : f32 to vector<2x256xf32>
    %155 = arith.mulf %147, %154 : vector<2x256xf32>
    %156 = arith.addf %144, %155 : vector<2x256xf32>
    %157 = vector.broadcast %26 : f32 to vector<2x256xf32>
    %158 = arith.mulf %17, %157 : vector<2x256xf32>
    %159 = arith.addf %150, %158 : vector<2x256xf32>
    %160 = vector.broadcast %53 : f32 to vector<2x256xf32>
    %161 = arith.mulf %17, %160 : vector<2x256xf32>
    %162 = arith.addf %153, %161 : vector<2x256xf32>
    %163 = vector.broadcast %80 : f32 to vector<2x256xf32>
    %164 = arith.mulf %17, %163 : vector<2x256xf32>
    %165 = arith.addf %156, %164 : vector<2x256xf32>
    %c255_i32 = arith.constant 255 : i32
    %166 = tpu.dynamic_rotate %17 by %c255_i32 dim 1 : vector<2x256xf32>, i32 -> vector<2x256xf32>
    %cst_12 = arith.constant 0.000000e+00 : f32
    %167 = vector.broadcast %cst_12 : f32 to vector<2x256xf32>
    %168 = arith.select %10, %166, %167 : vector<2x256xi1>, vector<2x256xf32>
    %169 = vector.broadcast %27 : f32 to vector<2x256xf32>
    %170 = arith.mulf %168, %169 : vector<2x256xf32>
    %171 = arith.addf %159, %170 : vector<2x256xf32>
    %172 = vector.broadcast %54 : f32 to vector<2x256xf32>
    %173 = arith.mulf %168, %172 : vector<2x256xf32>
    %174 = arith.addf %162, %173 : vector<2x256xf32>
    %175 = vector.broadcast %81 : f32 to vector<2x256xf32>
    %176 = arith.mulf %168, %175 : vector<2x256xf32>
    %177 = arith.addf %165, %176 : vector<2x256xf32>
    %c241_i32 = arith.constant 241 : i32
    %178 = tpu.dynamic_rotate %17 by %c241_i32 dim 1 : vector<2x256xf32>, i32 -> vector<2x256xf32>
    %cst_13 = arith.constant 0.000000e+00 : f32
    %179 = vector.broadcast %cst_13 : f32 to vector<2x256xf32>
    %180 = arith.select %13, %178, %179 : vector<2x256xi1>, vector<2x256xf32>
    %181 = vector.broadcast %28 : f32 to vector<2x256xf32>
    %182 = arith.mulf %180, %181 : vector<2x256xf32>
    %183 = arith.addf %171, %182 : vector<2x256xf32>
    %184 = vector.broadcast %55 : f32 to vector<2x256xf32>
    %185 = arith.mulf %180, %184 : vector<2x256xf32>
    %186 = arith.addf %174, %185 : vector<2x256xf32>
    %187 = vector.broadcast %82 : f32 to vector<2x256xf32>
    %188 = arith.mulf %180, %187 : vector<2x256xf32>
    %189 = arith.addf %177, %188 : vector<2x256xf32>
    %c240_i32_14 = arith.constant 240 : i32
    %190 = tpu.dynamic_rotate %17 by %c240_i32_14 dim 1 : vector<2x256xf32>, i32 -> vector<2x256xf32>
    %cst_15 = arith.constant 0.000000e+00 : f32
    %191 = vector.broadcast %cst_15 : f32 to vector<2x256xf32>
    %192 = arith.select %6, %190, %191 : vector<2x256xi1>, vector<2x256xf32>
    %193 = vector.broadcast %29 : f32 to vector<2x256xf32>
    %194 = arith.mulf %192, %193 : vector<2x256xf32>
    %195 = arith.addf %183, %194 : vector<2x256xf32>
    %196 = vector.broadcast %56 : f32 to vector<2x256xf32>
    %197 = arith.mulf %192, %196 : vector<2x256xf32>
    %198 = arith.addf %186, %197 : vector<2x256xf32>
    %199 = vector.broadcast %83 : f32 to vector<2x256xf32>
    %200 = arith.mulf %192, %199 : vector<2x256xf32>
    %201 = arith.addf %189, %200 : vector<2x256xf32>
    %c239_i32 = arith.constant 239 : i32
    %202 = tpu.dynamic_rotate %17 by %c239_i32 dim 1 : vector<2x256xf32>, i32 -> vector<2x256xf32>
    %cst_16 = arith.constant 0.000000e+00 : f32
    %203 = vector.broadcast %cst_16 : f32 to vector<2x256xf32>
    %204 = arith.select %14, %202, %203 : vector<2x256xi1>, vector<2x256xf32>
    %205 = vector.broadcast %30 : f32 to vector<2x256xf32>
    %206 = arith.mulf %204, %205 : vector<2x256xf32>
    %207 = arith.addf %195, %206 : vector<2x256xf32>
    %208 = vector.broadcast %57 : f32 to vector<2x256xf32>
    %209 = arith.mulf %204, %208 : vector<2x256xf32>
    %210 = arith.addf %198, %209 : vector<2x256xf32>
    %211 = vector.broadcast %84 : f32 to vector<2x256xf32>
    %212 = arith.mulf %204, %211 : vector<2x256xf32>
    %213 = arith.addf %201, %212 : vector<2x256xf32>
    %c17_i32_17 = arith.constant 17 : i32
    %214 = tpu.dynamic_rotate %19 by %c17_i32_17 dim 1 : vector<2x256xf32>, i32 -> vector<2x256xf32>
    %cst_18 = arith.constant 0.000000e+00 : f32
    %215 = vector.broadcast %cst_18 : f32 to vector<2x256xf32>
    %216 = arith.select %11, %214, %215 : vector<2x256xi1>, vector<2x256xf32>
    %217 = vector.broadcast %31 : f32 to vector<2x256xf32>
    %218 = arith.mulf %216, %217 : vector<2x256xf32>
    %219 = arith.addf %207, %218 : vector<2x256xf32>
    %220 = vector.broadcast %58 : f32 to vector<2x256xf32>
    %221 = arith.mulf %216, %220 : vector<2x256xf32>
    %222 = arith.addf %210, %221 : vector<2x256xf32>
    %223 = vector.broadcast %85 : f32 to vector<2x256xf32>
    %224 = arith.mulf %216, %223 : vector<2x256xf32>
    %225 = arith.addf %213, %224 : vector<2x256xf32>
    %c16_i32_19 = arith.constant 16 : i32
    %226 = tpu.dynamic_rotate %19 by %c16_i32_19 dim 1 : vector<2x256xf32>, i32 -> vector<2x256xf32>
    %cst_20 = arith.constant 0.000000e+00 : f32
    %227 = vector.broadcast %cst_20 : f32 to vector<2x256xf32>
    %228 = arith.select %4, %226, %227 : vector<2x256xi1>, vector<2x256xf32>
    %229 = vector.broadcast %32 : f32 to vector<2x256xf32>
    %230 = arith.mulf %228, %229 : vector<2x256xf32>
    %231 = arith.addf %219, %230 : vector<2x256xf32>
    %232 = vector.broadcast %59 : f32 to vector<2x256xf32>
    %233 = arith.mulf %228, %232 : vector<2x256xf32>
    %234 = arith.addf %222, %233 : vector<2x256xf32>
    %235 = vector.broadcast %86 : f32 to vector<2x256xf32>
    %236 = arith.mulf %228, %235 : vector<2x256xf32>
    %237 = arith.addf %225, %236 : vector<2x256xf32>
    %c15_i32_21 = arith.constant 15 : i32
    %238 = tpu.dynamic_rotate %19 by %c15_i32_21 dim 1 : vector<2x256xf32>, i32 -> vector<2x256xf32>
    %cst_22 = arith.constant 0.000000e+00 : f32
    %239 = vector.broadcast %cst_22 : f32 to vector<2x256xf32>
    %240 = arith.select %12, %238, %239 : vector<2x256xi1>, vector<2x256xf32>
    %241 = vector.broadcast %33 : f32 to vector<2x256xf32>
    %242 = arith.mulf %240, %241 : vector<2x256xf32>
    %243 = arith.addf %231, %242 : vector<2x256xf32>
    %244 = vector.broadcast %60 : f32 to vector<2x256xf32>
    %245 = arith.mulf %240, %244 : vector<2x256xf32>
    %246 = arith.addf %234, %245 : vector<2x256xf32>
    %247 = vector.broadcast %87 : f32 to vector<2x256xf32>
    %248 = arith.mulf %240, %247 : vector<2x256xf32>
    %249 = arith.addf %237, %248 : vector<2x256xf32>
    %c1_i32_23 = arith.constant 1 : i32
    %250 = tpu.dynamic_rotate %19 by %c1_i32_23 dim 1 : vector<2x256xf32>, i32 -> vector<2x256xf32>
    %cst_24 = arith.constant 0.000000e+00 : f32
    %251 = vector.broadcast %cst_24 : f32 to vector<2x256xf32>
    %252 = arith.select %8, %250, %251 : vector<2x256xi1>, vector<2x256xf32>
    %253 = vector.broadcast %34 : f32 to vector<2x256xf32>
    %254 = arith.mulf %252, %253 : vector<2x256xf32>
    %255 = arith.addf %243, %254 : vector<2x256xf32>
    %256 = vector.broadcast %61 : f32 to vector<2x256xf32>
    %257 = arith.mulf %252, %256 : vector<2x256xf32>
    %258 = arith.addf %246, %257 : vector<2x256xf32>
    %259 = vector.broadcast %88 : f32 to vector<2x256xf32>
    %260 = arith.mulf %252, %259 : vector<2x256xf32>
    %261 = arith.addf %249, %260 : vector<2x256xf32>
    %262 = vector.broadcast %35 : f32 to vector<2x256xf32>
    %263 = arith.mulf %19, %262 : vector<2x256xf32>
    %264 = arith.addf %255, %263 : vector<2x256xf32>
    %265 = vector.broadcast %62 : f32 to vector<2x256xf32>
    %266 = arith.mulf %19, %265 : vector<2x256xf32>
    %267 = arith.addf %258, %266 : vector<2x256xf32>
    %268 = vector.broadcast %89 : f32 to vector<2x256xf32>
    %269 = arith.mulf %19, %268 : vector<2x256xf32>
    %270 = arith.addf %261, %269 : vector<2x256xf32>
    %c255_i32_25 = arith.constant 255 : i32
    %271 = tpu.dynamic_rotate %19 by %c255_i32_25 dim 1 : vector<2x256xf32>, i32 -> vector<2x256xf32>
    %cst_26 = arith.constant 0.000000e+00 : f32
    %272 = vector.broadcast %cst_26 : f32 to vector<2x256xf32>
    %273 = arith.select %10, %271, %272 : vector<2x256xi1>, vector<2x256xf32>
    %274 = vector.broadcast %36 : f32 to vector<2x256xf32>
    %275 = arith.mulf %273, %274 : vector<2x256xf32>
    %276 = arith.addf %264, %275 : vector<2x256xf32>
    %277 = vector.broadcast %63 : f32 to vector<2x256xf32>
    %278 = arith.mulf %273, %277 : vector<2x256xf32>
    %279 = arith.addf %267, %278 : vector<2x256xf32>
    %280 = vector.broadcast %90 : f32 to vector<2x256xf32>
    %281 = arith.mulf %273, %280 : vector<2x256xf32>
    %282 = arith.addf %270, %281 : vector<2x256xf32>
    %c241_i32_27 = arith.constant 241 : i32
    %283 = tpu.dynamic_rotate %19 by %c241_i32_27 dim 1 : vector<2x256xf32>, i32 -> vector<2x256xf32>
    %cst_28 = arith.constant 0.000000e+00 : f32
    %284 = vector.broadcast %cst_28 : f32 to vector<2x256xf32>
    %285 = arith.select %13, %283, %284 : vector<2x256xi1>, vector<2x256xf32>
    %286 = vector.broadcast %37 : f32 to vector<2x256xf32>
    %287 = arith.mulf %285, %286 : vector<2x256xf32>
    %288 = arith.addf %276, %287 : vector<2x256xf32>
    %289 = vector.broadcast %64 : f32 to vector<2x256xf32>
    %290 = arith.mulf %285, %289 : vector<2x256xf32>
    %291 = arith.addf %279, %290 : vector<2x256xf32>
    %292 = vector.broadcast %91 : f32 to vector<2x256xf32>
    %293 = arith.mulf %285, %292 : vector<2x256xf32>
    %294 = arith.addf %282, %293 : vector<2x256xf32>
    %c240_i32_29 = arith.constant 240 : i32
    %295 = tpu.dynamic_rotate %19 by %c240_i32_29 dim 1 : vector<2x256xf32>, i32 -> vector<2x256xf32>
    %cst_30 = arith.constant 0.000000e+00 : f32
    %296 = vector.broadcast %cst_30 : f32 to vector<2x256xf32>
    %297 = arith.select %6, %295, %296 : vector<2x256xi1>, vector<2x256xf32>
    %298 = vector.broadcast %38 : f32 to vector<2x256xf32>
    %299 = arith.mulf %297, %298 : vector<2x256xf32>
    %300 = arith.addf %288, %299 : vector<2x256xf32>
    %301 = vector.broadcast %65 : f32 to vector<2x256xf32>
    %302 = arith.mulf %297, %301 : vector<2x256xf32>
    %303 = arith.addf %291, %302 : vector<2x256xf32>
    %304 = vector.broadcast %92 : f32 to vector<2x256xf32>
    %305 = arith.mulf %297, %304 : vector<2x256xf32>
    %306 = arith.addf %294, %305 : vector<2x256xf32>
    %c239_i32_31 = arith.constant 239 : i32
    %307 = tpu.dynamic_rotate %19 by %c239_i32_31 dim 1 : vector<2x256xf32>, i32 -> vector<2x256xf32>
    %cst_32 = arith.constant 0.000000e+00 : f32
    %308 = vector.broadcast %cst_32 : f32 to vector<2x256xf32>
    %309 = arith.select %14, %307, %308 : vector<2x256xi1>, vector<2x256xf32>
    %310 = vector.broadcast %39 : f32 to vector<2x256xf32>
    %311 = arith.mulf %309, %310 : vector<2x256xf32>
    %312 = arith.addf %300, %311 : vector<2x256xf32>
    %313 = vector.broadcast %66 : f32 to vector<2x256xf32>
    %314 = arith.mulf %309, %313 : vector<2x256xf32>
    %315 = arith.addf %303, %314 : vector<2x256xf32>
    %316 = vector.broadcast %93 : f32 to vector<2x256xf32>
    %317 = arith.mulf %309, %316 : vector<2x256xf32>
    %318 = arith.addf %306, %317 : vector<2x256xf32>
    %c17_i32_33 = arith.constant 17 : i32
    %319 = tpu.dynamic_rotate %21 by %c17_i32_33 dim 1 : vector<2x256xf32>, i32 -> vector<2x256xf32>
    %cst_34 = arith.constant 0.000000e+00 : f32
    %320 = vector.broadcast %cst_34 : f32 to vector<2x256xf32>
    %321 = arith.select %11, %319, %320 : vector<2x256xi1>, vector<2x256xf32>
    %322 = vector.broadcast %40 : f32 to vector<2x256xf32>
    %323 = arith.mulf %321, %322 : vector<2x256xf32>
    %324 = arith.addf %312, %323 : vector<2x256xf32>
    %325 = vector.broadcast %67 : f32 to vector<2x256xf32>
    %326 = arith.mulf %321, %325 : vector<2x256xf32>
    %327 = arith.addf %315, %326 : vector<2x256xf32>
    %328 = vector.broadcast %94 : f32 to vector<2x256xf32>
    %329 = arith.mulf %321, %328 : vector<2x256xf32>
    %330 = arith.addf %318, %329 : vector<2x256xf32>
    %c16_i32_35 = arith.constant 16 : i32
    %331 = tpu.dynamic_rotate %21 by %c16_i32_35 dim 1 : vector<2x256xf32>, i32 -> vector<2x256xf32>
    %cst_36 = arith.constant 0.000000e+00 : f32
    %332 = vector.broadcast %cst_36 : f32 to vector<2x256xf32>
    %333 = arith.select %4, %331, %332 : vector<2x256xi1>, vector<2x256xf32>
    %334 = vector.broadcast %41 : f32 to vector<2x256xf32>
    %335 = arith.mulf %333, %334 : vector<2x256xf32>
    %336 = arith.addf %324, %335 : vector<2x256xf32>
    %337 = vector.broadcast %68 : f32 to vector<2x256xf32>
    %338 = arith.mulf %333, %337 : vector<2x256xf32>
    %339 = arith.addf %327, %338 : vector<2x256xf32>
    %340 = vector.broadcast %95 : f32 to vector<2x256xf32>
    %341 = arith.mulf %333, %340 : vector<2x256xf32>
    %342 = arith.addf %330, %341 : vector<2x256xf32>
    %c15_i32_37 = arith.constant 15 : i32
    %343 = tpu.dynamic_rotate %21 by %c15_i32_37 dim 1 : vector<2x256xf32>, i32 -> vector<2x256xf32>
    %cst_38 = arith.constant 0.000000e+00 : f32
    %344 = vector.broadcast %cst_38 : f32 to vector<2x256xf32>
    %345 = arith.select %12, %343, %344 : vector<2x256xi1>, vector<2x256xf32>
    %346 = vector.broadcast %42 : f32 to vector<2x256xf32>
    %347 = arith.mulf %345, %346 : vector<2x256xf32>
    %348 = arith.addf %336, %347 : vector<2x256xf32>
    %349 = vector.broadcast %69 : f32 to vector<2x256xf32>
    %350 = arith.mulf %345, %349 : vector<2x256xf32>
    %351 = arith.addf %339, %350 : vector<2x256xf32>
    %352 = vector.broadcast %96 : f32 to vector<2x256xf32>
    %353 = arith.mulf %345, %352 : vector<2x256xf32>
    %354 = arith.addf %342, %353 : vector<2x256xf32>
    %c1_i32_39 = arith.constant 1 : i32
    %355 = tpu.dynamic_rotate %21 by %c1_i32_39 dim 1 : vector<2x256xf32>, i32 -> vector<2x256xf32>
    %cst_40 = arith.constant 0.000000e+00 : f32
    %356 = vector.broadcast %cst_40 : f32 to vector<2x256xf32>
    %357 = arith.select %8, %355, %356 : vector<2x256xi1>, vector<2x256xf32>
    %358 = vector.broadcast %43 : f32 to vector<2x256xf32>
    %359 = arith.mulf %357, %358 : vector<2x256xf32>
    %360 = arith.addf %348, %359 : vector<2x256xf32>
    %361 = vector.broadcast %70 : f32 to vector<2x256xf32>
    %362 = arith.mulf %357, %361 : vector<2x256xf32>
    %363 = arith.addf %351, %362 : vector<2x256xf32>
    %364 = vector.broadcast %97 : f32 to vector<2x256xf32>
    %365 = arith.mulf %357, %364 : vector<2x256xf32>
    %366 = arith.addf %354, %365 : vector<2x256xf32>
    %367 = vector.broadcast %44 : f32 to vector<2x256xf32>
    %368 = arith.mulf %21, %367 : vector<2x256xf32>
    %369 = arith.addf %360, %368 : vector<2x256xf32>
    %370 = vector.broadcast %71 : f32 to vector<2x256xf32>
    %371 = arith.mulf %21, %370 : vector<2x256xf32>
    %372 = arith.addf %363, %371 : vector<2x256xf32>
    %373 = vector.broadcast %98 : f32 to vector<2x256xf32>
    %374 = arith.mulf %21, %373 : vector<2x256xf32>
    %375 = arith.addf %366, %374 : vector<2x256xf32>
    %c255_i32_41 = arith.constant 255 : i32
    %376 = tpu.dynamic_rotate %21 by %c255_i32_41 dim 1 : vector<2x256xf32>, i32 -> vector<2x256xf32>
    %cst_42 = arith.constant 0.000000e+00 : f32
    %377 = vector.broadcast %cst_42 : f32 to vector<2x256xf32>
    %378 = arith.select %10, %376, %377 : vector<2x256xi1>, vector<2x256xf32>
    %379 = vector.broadcast %45 : f32 to vector<2x256xf32>
    %380 = arith.mulf %378, %379 : vector<2x256xf32>
    %381 = arith.addf %369, %380 : vector<2x256xf32>
    %382 = vector.broadcast %72 : f32 to vector<2x256xf32>
    %383 = arith.mulf %378, %382 : vector<2x256xf32>
    %384 = arith.addf %372, %383 : vector<2x256xf32>
    %385 = vector.broadcast %99 : f32 to vector<2x256xf32>
    %386 = arith.mulf %378, %385 : vector<2x256xf32>
    %387 = arith.addf %375, %386 : vector<2x256xf32>
    %c241_i32_43 = arith.constant 241 : i32
    %388 = tpu.dynamic_rotate %21 by %c241_i32_43 dim 1 : vector<2x256xf32>, i32 -> vector<2x256xf32>
    %cst_44 = arith.constant 0.000000e+00 : f32
    %389 = vector.broadcast %cst_44 : f32 to vector<2x256xf32>
    %390 = arith.select %13, %388, %389 : vector<2x256xi1>, vector<2x256xf32>
    %391 = vector.broadcast %46 : f32 to vector<2x256xf32>
    %392 = arith.mulf %390, %391 : vector<2x256xf32>
    %393 = arith.addf %381, %392 : vector<2x256xf32>
    %394 = vector.broadcast %73 : f32 to vector<2x256xf32>
    %395 = arith.mulf %390, %394 : vector<2x256xf32>
    %396 = arith.addf %384, %395 : vector<2x256xf32>
    %397 = vector.broadcast %100 : f32 to vector<2x256xf32>
    %398 = arith.mulf %390, %397 : vector<2x256xf32>
    %399 = arith.addf %387, %398 : vector<2x256xf32>
    %c240_i32_45 = arith.constant 240 : i32
    %400 = tpu.dynamic_rotate %21 by %c240_i32_45 dim 1 : vector<2x256xf32>, i32 -> vector<2x256xf32>
    %cst_46 = arith.constant 0.000000e+00 : f32
    %401 = vector.broadcast %cst_46 : f32 to vector<2x256xf32>
    %402 = arith.select %6, %400, %401 : vector<2x256xi1>, vector<2x256xf32>
    %403 = vector.broadcast %47 : f32 to vector<2x256xf32>
    %404 = arith.mulf %402, %403 : vector<2x256xf32>
    %405 = arith.addf %393, %404 : vector<2x256xf32>
    %406 = vector.broadcast %74 : f32 to vector<2x256xf32>
    %407 = arith.mulf %402, %406 : vector<2x256xf32>
    %408 = arith.addf %396, %407 : vector<2x256xf32>
    %409 = vector.broadcast %101 : f32 to vector<2x256xf32>
    %410 = arith.mulf %402, %409 : vector<2x256xf32>
    %411 = arith.addf %399, %410 : vector<2x256xf32>
    %c239_i32_47 = arith.constant 239 : i32
    %412 = tpu.dynamic_rotate %21 by %c239_i32_47 dim 1 : vector<2x256xf32>, i32 -> vector<2x256xf32>
    %cst_48 = arith.constant 0.000000e+00 : f32
    %413 = vector.broadcast %cst_48 : f32 to vector<2x256xf32>
    %414 = arith.select %14, %412, %413 : vector<2x256xi1>, vector<2x256xf32>
    %415 = vector.broadcast %48 : f32 to vector<2x256xf32>
    %416 = arith.mulf %414, %415 : vector<2x256xf32>
    %417 = arith.addf %405, %416 : vector<2x256xf32>
    %418 = vector.broadcast %75 : f32 to vector<2x256xf32>
    %419 = arith.mulf %414, %418 : vector<2x256xf32>
    %420 = arith.addf %408, %419 : vector<2x256xf32>
    %421 = vector.broadcast %102 : f32 to vector<2x256xf32>
    %422 = arith.mulf %414, %421 : vector<2x256xf32>
    %423 = arith.addf %411, %422 : vector<2x256xf32>
    %cst_49 = arith.constant 0.000000e+00 : f32
    %424 = vector.broadcast %cst_49 : f32 to vector<2x256xf32>
    %425 = arith.maximumf %417, %424 : vector<2x256xf32>
    %cst_50 = arith.constant 0.000000e+00 : f32
    %426 = vector.broadcast %cst_50 : f32 to vector<2x256xf32>
    %427 = arith.maximumf %420, %426 : vector<2x256xf32>
    %cst_51 = arith.constant 0.000000e+00 : f32
    %428 = vector.broadcast %cst_51 : f32 to vector<2x256xf32>
    %429 = arith.maximumf %423, %428 : vector<2x256xf32>
    %c0_52 = arith.constant 0 : index
    %430 = memref.load %arg3[%c0_52] : memref<81xf32, #tpu.memory_space<smem>>
    %c1_53 = arith.constant 1 : index
    %431 = memref.load %arg3[%c1_53] : memref<81xf32, #tpu.memory_space<smem>>
    %c2_54 = arith.constant 2 : index
    %432 = memref.load %arg3[%c2_54] : memref<81xf32, #tpu.memory_space<smem>>
    %c3_55 = arith.constant 3 : index
    %433 = memref.load %arg3[%c3_55] : memref<81xf32, #tpu.memory_space<smem>>
    %c4_56 = arith.constant 4 : index
    %434 = memref.load %arg3[%c4_56] : memref<81xf32, #tpu.memory_space<smem>>
    %c5_57 = arith.constant 5 : index
    %435 = memref.load %arg3[%c5_57] : memref<81xf32, #tpu.memory_space<smem>>
    %c6_58 = arith.constant 6 : index
    %436 = memref.load %arg3[%c6_58] : memref<81xf32, #tpu.memory_space<smem>>
    %c7_59 = arith.constant 7 : index
    %437 = memref.load %arg3[%c7_59] : memref<81xf32, #tpu.memory_space<smem>>
    %c8_60 = arith.constant 8 : index
    %438 = memref.load %arg3[%c8_60] : memref<81xf32, #tpu.memory_space<smem>>
    %c9_61 = arith.constant 9 : index
    %439 = memref.load %arg3[%c9_61] : memref<81xf32, #tpu.memory_space<smem>>
    %c10_62 = arith.constant 10 : index
    %440 = memref.load %arg3[%c10_62] : memref<81xf32, #tpu.memory_space<smem>>
    %c11_63 = arith.constant 11 : index
    %441 = memref.load %arg3[%c11_63] : memref<81xf32, #tpu.memory_space<smem>>
    %c12_64 = arith.constant 12 : index
    %442 = memref.load %arg3[%c12_64] : memref<81xf32, #tpu.memory_space<smem>>
    %c13_65 = arith.constant 13 : index
    %443 = memref.load %arg3[%c13_65] : memref<81xf32, #tpu.memory_space<smem>>
    %c14_66 = arith.constant 14 : index
    %444 = memref.load %arg3[%c14_66] : memref<81xf32, #tpu.memory_space<smem>>
    %c15_67 = arith.constant 15 : index
    %445 = memref.load %arg3[%c15_67] : memref<81xf32, #tpu.memory_space<smem>>
    %c16_68 = arith.constant 16 : index
    %446 = memref.load %arg3[%c16_68] : memref<81xf32, #tpu.memory_space<smem>>
    %c17_69 = arith.constant 17 : index
    %447 = memref.load %arg3[%c17_69] : memref<81xf32, #tpu.memory_space<smem>>
    %c18_70 = arith.constant 18 : index
    %448 = memref.load %arg3[%c18_70] : memref<81xf32, #tpu.memory_space<smem>>
    %c19_71 = arith.constant 19 : index
    %449 = memref.load %arg3[%c19_71] : memref<81xf32, #tpu.memory_space<smem>>
    %c20_72 = arith.constant 20 : index
    %450 = memref.load %arg3[%c20_72] : memref<81xf32, #tpu.memory_space<smem>>
    %c21_73 = arith.constant 21 : index
    %451 = memref.load %arg3[%c21_73] : memref<81xf32, #tpu.memory_space<smem>>
    %c22_74 = arith.constant 22 : index
    %452 = memref.load %arg3[%c22_74] : memref<81xf32, #tpu.memory_space<smem>>
    %c23_75 = arith.constant 23 : index
    %453 = memref.load %arg3[%c23_75] : memref<81xf32, #tpu.memory_space<smem>>
    %c24_76 = arith.constant 24 : index
    %454 = memref.load %arg3[%c24_76] : memref<81xf32, #tpu.memory_space<smem>>
    %c25_77 = arith.constant 25 : index
    %455 = memref.load %arg3[%c25_77] : memref<81xf32, #tpu.memory_space<smem>>
    %c26_78 = arith.constant 26 : index
    %456 = memref.load %arg3[%c26_78] : memref<81xf32, #tpu.memory_space<smem>>
    %c27_79 = arith.constant 27 : index
    %457 = memref.load %arg3[%c27_79] : memref<81xf32, #tpu.memory_space<smem>>
    %c28_80 = arith.constant 28 : index
    %458 = memref.load %arg3[%c28_80] : memref<81xf32, #tpu.memory_space<smem>>
    %c29_81 = arith.constant 29 : index
    %459 = memref.load %arg3[%c29_81] : memref<81xf32, #tpu.memory_space<smem>>
    %c30_82 = arith.constant 30 : index
    %460 = memref.load %arg3[%c30_82] : memref<81xf32, #tpu.memory_space<smem>>
    %c31_83 = arith.constant 31 : index
    %461 = memref.load %arg3[%c31_83] : memref<81xf32, #tpu.memory_space<smem>>
    %c32_84 = arith.constant 32 : index
    %462 = memref.load %arg3[%c32_84] : memref<81xf32, #tpu.memory_space<smem>>
    %c33_85 = arith.constant 33 : index
    %463 = memref.load %arg3[%c33_85] : memref<81xf32, #tpu.memory_space<smem>>
    %c34_86 = arith.constant 34 : index
    %464 = memref.load %arg3[%c34_86] : memref<81xf32, #tpu.memory_space<smem>>
    %c35_87 = arith.constant 35 : index
    %465 = memref.load %arg3[%c35_87] : memref<81xf32, #tpu.memory_space<smem>>
    %c36_88 = arith.constant 36 : index
    %466 = memref.load %arg3[%c36_88] : memref<81xf32, #tpu.memory_space<smem>>
    %c37_89 = arith.constant 37 : index
    %467 = memref.load %arg3[%c37_89] : memref<81xf32, #tpu.memory_space<smem>>
    %c38_90 = arith.constant 38 : index
    %468 = memref.load %arg3[%c38_90] : memref<81xf32, #tpu.memory_space<smem>>
    %c39_91 = arith.constant 39 : index
    %469 = memref.load %arg3[%c39_91] : memref<81xf32, #tpu.memory_space<smem>>
    %c40_92 = arith.constant 40 : index
    %470 = memref.load %arg3[%c40_92] : memref<81xf32, #tpu.memory_space<smem>>
    %c41_93 = arith.constant 41 : index
    %471 = memref.load %arg3[%c41_93] : memref<81xf32, #tpu.memory_space<smem>>
    %c42_94 = arith.constant 42 : index
    %472 = memref.load %arg3[%c42_94] : memref<81xf32, #tpu.memory_space<smem>>
    %c43_95 = arith.constant 43 : index
    %473 = memref.load %arg3[%c43_95] : memref<81xf32, #tpu.memory_space<smem>>
    %c44_96 = arith.constant 44 : index
    %474 = memref.load %arg3[%c44_96] : memref<81xf32, #tpu.memory_space<smem>>
    %c45_97 = arith.constant 45 : index
    %475 = memref.load %arg3[%c45_97] : memref<81xf32, #tpu.memory_space<smem>>
    %c46_98 = arith.constant 46 : index
    %476 = memref.load %arg3[%c46_98] : memref<81xf32, #tpu.memory_space<smem>>
    %c47_99 = arith.constant 47 : index
    %477 = memref.load %arg3[%c47_99] : memref<81xf32, #tpu.memory_space<smem>>
    %c48_100 = arith.constant 48 : index
    %478 = memref.load %arg3[%c48_100] : memref<81xf32, #tpu.memory_space<smem>>
    %c49_101 = arith.constant 49 : index
    %479 = memref.load %arg3[%c49_101] : memref<81xf32, #tpu.memory_space<smem>>
    %c50_102 = arith.constant 50 : index
    %480 = memref.load %arg3[%c50_102] : memref<81xf32, #tpu.memory_space<smem>>
    %c51_103 = arith.constant 51 : index
    %481 = memref.load %arg3[%c51_103] : memref<81xf32, #tpu.memory_space<smem>>
    %c52_104 = arith.constant 52 : index
    %482 = memref.load %arg3[%c52_104] : memref<81xf32, #tpu.memory_space<smem>>
    %c53_105 = arith.constant 53 : index
    %483 = memref.load %arg3[%c53_105] : memref<81xf32, #tpu.memory_space<smem>>
    %c54_106 = arith.constant 54 : index
    %484 = memref.load %arg3[%c54_106] : memref<81xf32, #tpu.memory_space<smem>>
    %c55_107 = arith.constant 55 : index
    %485 = memref.load %arg3[%c55_107] : memref<81xf32, #tpu.memory_space<smem>>
    %c56_108 = arith.constant 56 : index
    %486 = memref.load %arg3[%c56_108] : memref<81xf32, #tpu.memory_space<smem>>
    %c57_109 = arith.constant 57 : index
    %487 = memref.load %arg3[%c57_109] : memref<81xf32, #tpu.memory_space<smem>>
    %c58_110 = arith.constant 58 : index
    %488 = memref.load %arg3[%c58_110] : memref<81xf32, #tpu.memory_space<smem>>
    %c59_111 = arith.constant 59 : index
    %489 = memref.load %arg3[%c59_111] : memref<81xf32, #tpu.memory_space<smem>>
    %c60_112 = arith.constant 60 : index
    %490 = memref.load %arg3[%c60_112] : memref<81xf32, #tpu.memory_space<smem>>
    %c61_113 = arith.constant 61 : index
    %491 = memref.load %arg3[%c61_113] : memref<81xf32, #tpu.memory_space<smem>>
    %c62_114 = arith.constant 62 : index
    %492 = memref.load %arg3[%c62_114] : memref<81xf32, #tpu.memory_space<smem>>
    %c63_115 = arith.constant 63 : index
    %493 = memref.load %arg3[%c63_115] : memref<81xf32, #tpu.memory_space<smem>>
    %c64_116 = arith.constant 64 : index
    %494 = memref.load %arg3[%c64_116] : memref<81xf32, #tpu.memory_space<smem>>
    %c65_117 = arith.constant 65 : index
    %495 = memref.load %arg3[%c65_117] : memref<81xf32, #tpu.memory_space<smem>>
    %c66_118 = arith.constant 66 : index
    %496 = memref.load %arg3[%c66_118] : memref<81xf32, #tpu.memory_space<smem>>
    %c67_119 = arith.constant 67 : index
    %497 = memref.load %arg3[%c67_119] : memref<81xf32, #tpu.memory_space<smem>>
    %c68_120 = arith.constant 68 : index
    %498 = memref.load %arg3[%c68_120] : memref<81xf32, #tpu.memory_space<smem>>
    %c69_121 = arith.constant 69 : index
    %499 = memref.load %arg3[%c69_121] : memref<81xf32, #tpu.memory_space<smem>>
    %c70_122 = arith.constant 70 : index
    %500 = memref.load %arg3[%c70_122] : memref<81xf32, #tpu.memory_space<smem>>
    %c71_123 = arith.constant 71 : index
    %501 = memref.load %arg3[%c71_123] : memref<81xf32, #tpu.memory_space<smem>>
    %c72_124 = arith.constant 72 : index
    %502 = memref.load %arg3[%c72_124] : memref<81xf32, #tpu.memory_space<smem>>
    %c73_125 = arith.constant 73 : index
    %503 = memref.load %arg3[%c73_125] : memref<81xf32, #tpu.memory_space<smem>>
    %c74_126 = arith.constant 74 : index
    %504 = memref.load %arg3[%c74_126] : memref<81xf32, #tpu.memory_space<smem>>
    %c75_127 = arith.constant 75 : index
    %505 = memref.load %arg3[%c75_127] : memref<81xf32, #tpu.memory_space<smem>>
    %c76_128 = arith.constant 76 : index
    %506 = memref.load %arg3[%c76_128] : memref<81xf32, #tpu.memory_space<smem>>
    %c77_129 = arith.constant 77 : index
    %507 = memref.load %arg3[%c77_129] : memref<81xf32, #tpu.memory_space<smem>>
    %c78_130 = arith.constant 78 : index
    %508 = memref.load %arg3[%c78_130] : memref<81xf32, #tpu.memory_space<smem>>
    %c79_131 = arith.constant 79 : index
    %509 = memref.load %arg3[%c79_131] : memref<81xf32, #tpu.memory_space<smem>>
    %c80_132 = arith.constant 80 : index
    %510 = memref.load %arg3[%c80_132] : memref<81xf32, #tpu.memory_space<smem>>
    %c0_133 = arith.constant 0 : index
    %511 = memref.load %arg4[%c0_133] : memref<3xf32, #tpu.memory_space<smem>>
    %512 = vector.broadcast %511 : f32 to vector<2x256xf32>
    %c1_134 = arith.constant 1 : index
    %513 = memref.load %arg4[%c1_134] : memref<3xf32, #tpu.memory_space<smem>>
    %514 = vector.broadcast %513 : f32 to vector<2x256xf32>
    %c2_135 = arith.constant 2 : index
    %515 = memref.load %arg4[%c2_135] : memref<3xf32, #tpu.memory_space<smem>>
    %516 = vector.broadcast %515 : f32 to vector<2x256xf32>
    %c17_i32_136 = arith.constant 17 : i32
    %517 = tpu.dynamic_rotate %425 by %c17_i32_136 dim 1 : vector<2x256xf32>, i32 -> vector<2x256xf32>
    %cst_137 = arith.constant 0.000000e+00 : f32
    %518 = vector.broadcast %cst_137 : f32 to vector<2x256xf32>
    %519 = arith.select %11, %517, %518 : vector<2x256xi1>, vector<2x256xf32>
    %520 = vector.broadcast %430 : f32 to vector<2x256xf32>
    %521 = arith.mulf %519, %520 : vector<2x256xf32>
    %522 = arith.addf %512, %521 : vector<2x256xf32>
    %523 = vector.broadcast %457 : f32 to vector<2x256xf32>
    %524 = arith.mulf %519, %523 : vector<2x256xf32>
    %525 = arith.addf %514, %524 : vector<2x256xf32>
    %526 = vector.broadcast %484 : f32 to vector<2x256xf32>
    %527 = arith.mulf %519, %526 : vector<2x256xf32>
    %528 = arith.addf %516, %527 : vector<2x256xf32>
    %c16_i32_138 = arith.constant 16 : i32
    %529 = tpu.dynamic_rotate %425 by %c16_i32_138 dim 1 : vector<2x256xf32>, i32 -> vector<2x256xf32>
    %cst_139 = arith.constant 0.000000e+00 : f32
    %530 = vector.broadcast %cst_139 : f32 to vector<2x256xf32>
    %531 = arith.select %4, %529, %530 : vector<2x256xi1>, vector<2x256xf32>
    %532 = vector.broadcast %431 : f32 to vector<2x256xf32>
    %533 = arith.mulf %531, %532 : vector<2x256xf32>
    %534 = arith.addf %522, %533 : vector<2x256xf32>
    %535 = vector.broadcast %458 : f32 to vector<2x256xf32>
    %536 = arith.mulf %531, %535 : vector<2x256xf32>
    %537 = arith.addf %525, %536 : vector<2x256xf32>
    %538 = vector.broadcast %485 : f32 to vector<2x256xf32>
    %539 = arith.mulf %531, %538 : vector<2x256xf32>
    %540 = arith.addf %528, %539 : vector<2x256xf32>
    %c15_i32_140 = arith.constant 15 : i32
    %541 = tpu.dynamic_rotate %425 by %c15_i32_140 dim 1 : vector<2x256xf32>, i32 -> vector<2x256xf32>
    %cst_141 = arith.constant 0.000000e+00 : f32
    %542 = vector.broadcast %cst_141 : f32 to vector<2x256xf32>
    %543 = arith.select %12, %541, %542 : vector<2x256xi1>, vector<2x256xf32>
    %544 = vector.broadcast %432 : f32 to vector<2x256xf32>
    %545 = arith.mulf %543, %544 : vector<2x256xf32>
    %546 = arith.addf %534, %545 : vector<2x256xf32>
    %547 = vector.broadcast %459 : f32 to vector<2x256xf32>
    %548 = arith.mulf %543, %547 : vector<2x256xf32>
    %549 = arith.addf %537, %548 : vector<2x256xf32>
    %550 = vector.broadcast %486 : f32 to vector<2x256xf32>
    %551 = arith.mulf %543, %550 : vector<2x256xf32>
    %552 = arith.addf %540, %551 : vector<2x256xf32>
    %c1_i32_142 = arith.constant 1 : i32
    %553 = tpu.dynamic_rotate %425 by %c1_i32_142 dim 1 : vector<2x256xf32>, i32 -> vector<2x256xf32>
    %cst_143 = arith.constant 0.000000e+00 : f32
    %554 = vector.broadcast %cst_143 : f32 to vector<2x256xf32>
    %555 = arith.select %8, %553, %554 : vector<2x256xi1>, vector<2x256xf32>
    %556 = vector.broadcast %433 : f32 to vector<2x256xf32>
    %557 = arith.mulf %555, %556 : vector<2x256xf32>
    %558 = arith.addf %546, %557 : vector<2x256xf32>
    %559 = vector.broadcast %460 : f32 to vector<2x256xf32>
    %560 = arith.mulf %555, %559 : vector<2x256xf32>
    %561 = arith.addf %549, %560 : vector<2x256xf32>
    %562 = vector.broadcast %487 : f32 to vector<2x256xf32>
    %563 = arith.mulf %555, %562 : vector<2x256xf32>
    %564 = arith.addf %552, %563 : vector<2x256xf32>
    %565 = vector.broadcast %434 : f32 to vector<2x256xf32>
    %566 = arith.mulf %425, %565 : vector<2x256xf32>
    %567 = arith.addf %558, %566 : vector<2x256xf32>
    %568 = vector.broadcast %461 : f32 to vector<2x256xf32>
    %569 = arith.mulf %425, %568 : vector<2x256xf32>
    %570 = arith.addf %561, %569 : vector<2x256xf32>
    %571 = vector.broadcast %488 : f32 to vector<2x256xf32>
    %572 = arith.mulf %425, %571 : vector<2x256xf32>
    %573 = arith.addf %564, %572 : vector<2x256xf32>
    %c255_i32_144 = arith.constant 255 : i32
    %574 = tpu.dynamic_rotate %425 by %c255_i32_144 dim 1 : vector<2x256xf32>, i32 -> vector<2x256xf32>
    %cst_145 = arith.constant 0.000000e+00 : f32
    %575 = vector.broadcast %cst_145 : f32 to vector<2x256xf32>
    %576 = arith.select %10, %574, %575 : vector<2x256xi1>, vector<2x256xf32>
    %577 = vector.broadcast %435 : f32 to vector<2x256xf32>
    %578 = arith.mulf %576, %577 : vector<2x256xf32>
    %579 = arith.addf %567, %578 : vector<2x256xf32>
    %580 = vector.broadcast %462 : f32 to vector<2x256xf32>
    %581 = arith.mulf %576, %580 : vector<2x256xf32>
    %582 = arith.addf %570, %581 : vector<2x256xf32>
    %583 = vector.broadcast %489 : f32 to vector<2x256xf32>
    %584 = arith.mulf %576, %583 : vector<2x256xf32>
    %585 = arith.addf %573, %584 : vector<2x256xf32>
    %c241_i32_146 = arith.constant 241 : i32
    %586 = tpu.dynamic_rotate %425 by %c241_i32_146 dim 1 : vector<2x256xf32>, i32 -> vector<2x256xf32>
    %cst_147 = arith.constant 0.000000e+00 : f32
    %587 = vector.broadcast %cst_147 : f32 to vector<2x256xf32>
    %588 = arith.select %13, %586, %587 : vector<2x256xi1>, vector<2x256xf32>
    %589 = vector.broadcast %436 : f32 to vector<2x256xf32>
    %590 = arith.mulf %588, %589 : vector<2x256xf32>
    %591 = arith.addf %579, %590 : vector<2x256xf32>
    %592 = vector.broadcast %463 : f32 to vector<2x256xf32>
    %593 = arith.mulf %588, %592 : vector<2x256xf32>
    %594 = arith.addf %582, %593 : vector<2x256xf32>
    %595 = vector.broadcast %490 : f32 to vector<2x256xf32>
    %596 = arith.mulf %588, %595 : vector<2x256xf32>
    %597 = arith.addf %585, %596 : vector<2x256xf32>
    %c240_i32_148 = arith.constant 240 : i32
    %598 = tpu.dynamic_rotate %425 by %c240_i32_148 dim 1 : vector<2x256xf32>, i32 -> vector<2x256xf32>
    %cst_149 = arith.constant 0.000000e+00 : f32
    %599 = vector.broadcast %cst_149 : f32 to vector<2x256xf32>
    %600 = arith.select %6, %598, %599 : vector<2x256xi1>, vector<2x256xf32>
    %601 = vector.broadcast %437 : f32 to vector<2x256xf32>
    %602 = arith.mulf %600, %601 : vector<2x256xf32>
    %603 = arith.addf %591, %602 : vector<2x256xf32>
    %604 = vector.broadcast %464 : f32 to vector<2x256xf32>
    %605 = arith.mulf %600, %604 : vector<2x256xf32>
    %606 = arith.addf %594, %605 : vector<2x256xf32>
    %607 = vector.broadcast %491 : f32 to vector<2x256xf32>
    %608 = arith.mulf %600, %607 : vector<2x256xf32>
    %609 = arith.addf %597, %608 : vector<2x256xf32>
    %c239_i32_150 = arith.constant 239 : i32
    %610 = tpu.dynamic_rotate %425 by %c239_i32_150 dim 1 : vector<2x256xf32>, i32 -> vector<2x256xf32>
    %cst_151 = arith.constant 0.000000e+00 : f32
    %611 = vector.broadcast %cst_151 : f32 to vector<2x256xf32>
    %612 = arith.select %14, %610, %611 : vector<2x256xi1>, vector<2x256xf32>
    %613 = vector.broadcast %438 : f32 to vector<2x256xf32>
    %614 = arith.mulf %612, %613 : vector<2x256xf32>
    %615 = arith.addf %603, %614 : vector<2x256xf32>
    %616 = vector.broadcast %465 : f32 to vector<2x256xf32>
    %617 = arith.mulf %612, %616 : vector<2x256xf32>
    %618 = arith.addf %606, %617 : vector<2x256xf32>
    %619 = vector.broadcast %492 : f32 to vector<2x256xf32>
    %620 = arith.mulf %612, %619 : vector<2x256xf32>
    %621 = arith.addf %609, %620 : vector<2x256xf32>
    %c17_i32_152 = arith.constant 17 : i32
    %622 = tpu.dynamic_rotate %427 by %c17_i32_152 dim 1 : vector<2x256xf32>, i32 -> vector<2x256xf32>
    %cst_153 = arith.constant 0.000000e+00 : f32
    %623 = vector.broadcast %cst_153 : f32 to vector<2x256xf32>
    %624 = arith.select %11, %622, %623 : vector<2x256xi1>, vector<2x256xf32>
    %625 = vector.broadcast %439 : f32 to vector<2x256xf32>
    %626 = arith.mulf %624, %625 : vector<2x256xf32>
    %627 = arith.addf %615, %626 : vector<2x256xf32>
    %628 = vector.broadcast %466 : f32 to vector<2x256xf32>
    %629 = arith.mulf %624, %628 : vector<2x256xf32>
    %630 = arith.addf %618, %629 : vector<2x256xf32>
    %631 = vector.broadcast %493 : f32 to vector<2x256xf32>
    %632 = arith.mulf %624, %631 : vector<2x256xf32>
    %633 = arith.addf %621, %632 : vector<2x256xf32>
    %c16_i32_154 = arith.constant 16 : i32
    %634 = tpu.dynamic_rotate %427 by %c16_i32_154 dim 1 : vector<2x256xf32>, i32 -> vector<2x256xf32>
    %cst_155 = arith.constant 0.000000e+00 : f32
    %635 = vector.broadcast %cst_155 : f32 to vector<2x256xf32>
    %636 = arith.select %4, %634, %635 : vector<2x256xi1>, vector<2x256xf32>
    %637 = vector.broadcast %440 : f32 to vector<2x256xf32>
    %638 = arith.mulf %636, %637 : vector<2x256xf32>
    %639 = arith.addf %627, %638 : vector<2x256xf32>
    %640 = vector.broadcast %467 : f32 to vector<2x256xf32>
    %641 = arith.mulf %636, %640 : vector<2x256xf32>
    %642 = arith.addf %630, %641 : vector<2x256xf32>
    %643 = vector.broadcast %494 : f32 to vector<2x256xf32>
    %644 = arith.mulf %636, %643 : vector<2x256xf32>
    %645 = arith.addf %633, %644 : vector<2x256xf32>
    %c15_i32_156 = arith.constant 15 : i32
    %646 = tpu.dynamic_rotate %427 by %c15_i32_156 dim 1 : vector<2x256xf32>, i32 -> vector<2x256xf32>
    %cst_157 = arith.constant 0.000000e+00 : f32
    %647 = vector.broadcast %cst_157 : f32 to vector<2x256xf32>
    %648 = arith.select %12, %646, %647 : vector<2x256xi1>, vector<2x256xf32>
    %649 = vector.broadcast %441 : f32 to vector<2x256xf32>
    %650 = arith.mulf %648, %649 : vector<2x256xf32>
    %651 = arith.addf %639, %650 : vector<2x256xf32>
    %652 = vector.broadcast %468 : f32 to vector<2x256xf32>
    %653 = arith.mulf %648, %652 : vector<2x256xf32>
    %654 = arith.addf %642, %653 : vector<2x256xf32>
    %655 = vector.broadcast %495 : f32 to vector<2x256xf32>
    %656 = arith.mulf %648, %655 : vector<2x256xf32>
    %657 = arith.addf %645, %656 : vector<2x256xf32>
    %c1_i32_158 = arith.constant 1 : i32
    %658 = tpu.dynamic_rotate %427 by %c1_i32_158 dim 1 : vector<2x256xf32>, i32 -> vector<2x256xf32>
    %cst_159 = arith.constant 0.000000e+00 : f32
    %659 = vector.broadcast %cst_159 : f32 to vector<2x256xf32>
    %660 = arith.select %8, %658, %659 : vector<2x256xi1>, vector<2x256xf32>
    %661 = vector.broadcast %442 : f32 to vector<2x256xf32>
    %662 = arith.mulf %660, %661 : vector<2x256xf32>
    %663 = arith.addf %651, %662 : vector<2x256xf32>
    %664 = vector.broadcast %469 : f32 to vector<2x256xf32>
    %665 = arith.mulf %660, %664 : vector<2x256xf32>
    %666 = arith.addf %654, %665 : vector<2x256xf32>
    %667 = vector.broadcast %496 : f32 to vector<2x256xf32>
    %668 = arith.mulf %660, %667 : vector<2x256xf32>
    %669 = arith.addf %657, %668 : vector<2x256xf32>
    %670 = vector.broadcast %443 : f32 to vector<2x256xf32>
    %671 = arith.mulf %427, %670 : vector<2x256xf32>
    %672 = arith.addf %663, %671 : vector<2x256xf32>
    %673 = vector.broadcast %470 : f32 to vector<2x256xf32>
    %674 = arith.mulf %427, %673 : vector<2x256xf32>
    %675 = arith.addf %666, %674 : vector<2x256xf32>
    %676 = vector.broadcast %497 : f32 to vector<2x256xf32>
    %677 = arith.mulf %427, %676 : vector<2x256xf32>
    %678 = arith.addf %669, %677 : vector<2x256xf32>
    %c255_i32_160 = arith.constant 255 : i32
    %679 = tpu.dynamic_rotate %427 by %c255_i32_160 dim 1 : vector<2x256xf32>, i32 -> vector<2x256xf32>
    %cst_161 = arith.constant 0.000000e+00 : f32
    %680 = vector.broadcast %cst_161 : f32 to vector<2x256xf32>
    %681 = arith.select %10, %679, %680 : vector<2x256xi1>, vector<2x256xf32>
    %682 = vector.broadcast %444 : f32 to vector<2x256xf32>
    %683 = arith.mulf %681, %682 : vector<2x256xf32>
    %684 = arith.addf %672, %683 : vector<2x256xf32>
    %685 = vector.broadcast %471 : f32 to vector<2x256xf32>
    %686 = arith.mulf %681, %685 : vector<2x256xf32>
    %687 = arith.addf %675, %686 : vector<2x256xf32>
    %688 = vector.broadcast %498 : f32 to vector<2x256xf32>
    %689 = arith.mulf %681, %688 : vector<2x256xf32>
    %690 = arith.addf %678, %689 : vector<2x256xf32>
    %c241_i32_162 = arith.constant 241 : i32
    %691 = tpu.dynamic_rotate %427 by %c241_i32_162 dim 1 : vector<2x256xf32>, i32 -> vector<2x256xf32>
    %cst_163 = arith.constant 0.000000e+00 : f32
    %692 = vector.broadcast %cst_163 : f32 to vector<2x256xf32>
    %693 = arith.select %13, %691, %692 : vector<2x256xi1>, vector<2x256xf32>
    %694 = vector.broadcast %445 : f32 to vector<2x256xf32>
    %695 = arith.mulf %693, %694 : vector<2x256xf32>
    %696 = arith.addf %684, %695 : vector<2x256xf32>
    %697 = vector.broadcast %472 : f32 to vector<2x256xf32>
    %698 = arith.mulf %693, %697 : vector<2x256xf32>
    %699 = arith.addf %687, %698 : vector<2x256xf32>
    %700 = vector.broadcast %499 : f32 to vector<2x256xf32>
    %701 = arith.mulf %693, %700 : vector<2x256xf32>
    %702 = arith.addf %690, %701 : vector<2x256xf32>
    %c240_i32_164 = arith.constant 240 : i32
    %703 = tpu.dynamic_rotate %427 by %c240_i32_164 dim 1 : vector<2x256xf32>, i32 -> vector<2x256xf32>
    %cst_165 = arith.constant 0.000000e+00 : f32
    %704 = vector.broadcast %cst_165 : f32 to vector<2x256xf32>
    %705 = arith.select %6, %703, %704 : vector<2x256xi1>, vector<2x256xf32>
    %706 = vector.broadcast %446 : f32 to vector<2x256xf32>
    %707 = arith.mulf %705, %706 : vector<2x256xf32>
    %708 = arith.addf %696, %707 : vector<2x256xf32>
    %709 = vector.broadcast %473 : f32 to vector<2x256xf32>
    %710 = arith.mulf %705, %709 : vector<2x256xf32>
    %711 = arith.addf %699, %710 : vector<2x256xf32>
    %712 = vector.broadcast %500 : f32 to vector<2x256xf32>
    %713 = arith.mulf %705, %712 : vector<2x256xf32>
    %714 = arith.addf %702, %713 : vector<2x256xf32>
    %c239_i32_166 = arith.constant 239 : i32
    %715 = tpu.dynamic_rotate %427 by %c239_i32_166 dim 1 : vector<2x256xf32>, i32 -> vector<2x256xf32>
    %cst_167 = arith.constant 0.000000e+00 : f32
    %716 = vector.broadcast %cst_167 : f32 to vector<2x256xf32>
    %717 = arith.select %14, %715, %716 : vector<2x256xi1>, vector<2x256xf32>
    %718 = vector.broadcast %447 : f32 to vector<2x256xf32>
    %719 = arith.mulf %717, %718 : vector<2x256xf32>
    %720 = arith.addf %708, %719 : vector<2x256xf32>
    %721 = vector.broadcast %474 : f32 to vector<2x256xf32>
    %722 = arith.mulf %717, %721 : vector<2x256xf32>
    %723 = arith.addf %711, %722 : vector<2x256xf32>
    %724 = vector.broadcast %501 : f32 to vector<2x256xf32>
    %725 = arith.mulf %717, %724 : vector<2x256xf32>
    %726 = arith.addf %714, %725 : vector<2x256xf32>
    %c17_i32_168 = arith.constant 17 : i32
    %727 = tpu.dynamic_rotate %429 by %c17_i32_168 dim 1 : vector<2x256xf32>, i32 -> vector<2x256xf32>
    %cst_169 = arith.constant 0.000000e+00 : f32
    %728 = vector.broadcast %cst_169 : f32 to vector<2x256xf32>
    %729 = arith.select %11, %727, %728 : vector<2x256xi1>, vector<2x256xf32>
    %730 = vector.broadcast %448 : f32 to vector<2x256xf32>
    %731 = arith.mulf %729, %730 : vector<2x256xf32>
    %732 = arith.addf %720, %731 : vector<2x256xf32>
    %733 = vector.broadcast %475 : f32 to vector<2x256xf32>
    %734 = arith.mulf %729, %733 : vector<2x256xf32>
    %735 = arith.addf %723, %734 : vector<2x256xf32>
    %736 = vector.broadcast %502 : f32 to vector<2x256xf32>
    %737 = arith.mulf %729, %736 : vector<2x256xf32>
    %738 = arith.addf %726, %737 : vector<2x256xf32>
    %c16_i32_170 = arith.constant 16 : i32
    %739 = tpu.dynamic_rotate %429 by %c16_i32_170 dim 1 : vector<2x256xf32>, i32 -> vector<2x256xf32>
    %cst_171 = arith.constant 0.000000e+00 : f32
    %740 = vector.broadcast %cst_171 : f32 to vector<2x256xf32>
    %741 = arith.select %4, %739, %740 : vector<2x256xi1>, vector<2x256xf32>
    %742 = vector.broadcast %449 : f32 to vector<2x256xf32>
    %743 = arith.mulf %741, %742 : vector<2x256xf32>
    %744 = arith.addf %732, %743 : vector<2x256xf32>
    %745 = vector.broadcast %476 : f32 to vector<2x256xf32>
    %746 = arith.mulf %741, %745 : vector<2x256xf32>
    %747 = arith.addf %735, %746 : vector<2x256xf32>
    %748 = vector.broadcast %503 : f32 to vector<2x256xf32>
    %749 = arith.mulf %741, %748 : vector<2x256xf32>
    %750 = arith.addf %738, %749 : vector<2x256xf32>
    %c15_i32_172 = arith.constant 15 : i32
    %751 = tpu.dynamic_rotate %429 by %c15_i32_172 dim 1 : vector<2x256xf32>, i32 -> vector<2x256xf32>
    %cst_173 = arith.constant 0.000000e+00 : f32
    %752 = vector.broadcast %cst_173 : f32 to vector<2x256xf32>
    %753 = arith.select %12, %751, %752 : vector<2x256xi1>, vector<2x256xf32>
    %754 = vector.broadcast %450 : f32 to vector<2x256xf32>
    %755 = arith.mulf %753, %754 : vector<2x256xf32>
    %756 = arith.addf %744, %755 : vector<2x256xf32>
    %757 = vector.broadcast %477 : f32 to vector<2x256xf32>
    %758 = arith.mulf %753, %757 : vector<2x256xf32>
    %759 = arith.addf %747, %758 : vector<2x256xf32>
    %760 = vector.broadcast %504 : f32 to vector<2x256xf32>
    %761 = arith.mulf %753, %760 : vector<2x256xf32>
    %762 = arith.addf %750, %761 : vector<2x256xf32>
    %c1_i32_174 = arith.constant 1 : i32
    %763 = tpu.dynamic_rotate %429 by %c1_i32_174 dim 1 : vector<2x256xf32>, i32 -> vector<2x256xf32>
    %cst_175 = arith.constant 0.000000e+00 : f32
    %764 = vector.broadcast %cst_175 : f32 to vector<2x256xf32>
    %765 = arith.select %8, %763, %764 : vector<2x256xi1>, vector<2x256xf32>
    %766 = vector.broadcast %451 : f32 to vector<2x256xf32>
    %767 = arith.mulf %765, %766 : vector<2x256xf32>
    %768 = arith.addf %756, %767 : vector<2x256xf32>
    %769 = vector.broadcast %478 : f32 to vector<2x256xf32>
    %770 = arith.mulf %765, %769 : vector<2x256xf32>
    %771 = arith.addf %759, %770 : vector<2x256xf32>
    %772 = vector.broadcast %505 : f32 to vector<2x256xf32>
    %773 = arith.mulf %765, %772 : vector<2x256xf32>
    %774 = arith.addf %762, %773 : vector<2x256xf32>
    %775 = vector.broadcast %452 : f32 to vector<2x256xf32>
    %776 = arith.mulf %429, %775 : vector<2x256xf32>
    %777 = arith.addf %768, %776 : vector<2x256xf32>
    %778 = vector.broadcast %479 : f32 to vector<2x256xf32>
    %779 = arith.mulf %429, %778 : vector<2x256xf32>
    %780 = arith.addf %771, %779 : vector<2x256xf32>
    %781 = vector.broadcast %506 : f32 to vector<2x256xf32>
    %782 = arith.mulf %429, %781 : vector<2x256xf32>
    %783 = arith.addf %774, %782 : vector<2x256xf32>
    %c255_i32_176 = arith.constant 255 : i32
    %784 = tpu.dynamic_rotate %429 by %c255_i32_176 dim 1 : vector<2x256xf32>, i32 -> vector<2x256xf32>
    %cst_177 = arith.constant 0.000000e+00 : f32
    %785 = vector.broadcast %cst_177 : f32 to vector<2x256xf32>
    %786 = arith.select %10, %784, %785 : vector<2x256xi1>, vector<2x256xf32>
    %787 = vector.broadcast %453 : f32 to vector<2x256xf32>
    %788 = arith.mulf %786, %787 : vector<2x256xf32>
    %789 = arith.addf %777, %788 : vector<2x256xf32>
    %790 = vector.broadcast %480 : f32 to vector<2x256xf32>
    %791 = arith.mulf %786, %790 : vector<2x256xf32>
    %792 = arith.addf %780, %791 : vector<2x256xf32>
    %793 = vector.broadcast %507 : f32 to vector<2x256xf32>
    %794 = arith.mulf %786, %793 : vector<2x256xf32>
    %795 = arith.addf %783, %794 : vector<2x256xf32>
    %c241_i32_178 = arith.constant 241 : i32
    %796 = tpu.dynamic_rotate %429 by %c241_i32_178 dim 1 : vector<2x256xf32>, i32 -> vector<2x256xf32>
    %cst_179 = arith.constant 0.000000e+00 : f32
    %797 = vector.broadcast %cst_179 : f32 to vector<2x256xf32>
    %798 = arith.select %13, %796, %797 : vector<2x256xi1>, vector<2x256xf32>
    %799 = vector.broadcast %454 : f32 to vector<2x256xf32>
    %800 = arith.mulf %798, %799 : vector<2x256xf32>
    %801 = arith.addf %789, %800 : vector<2x256xf32>
    %802 = vector.broadcast %481 : f32 to vector<2x256xf32>
    %803 = arith.mulf %798, %802 : vector<2x256xf32>
    %804 = arith.addf %792, %803 : vector<2x256xf32>
    %805 = vector.broadcast %508 : f32 to vector<2x256xf32>
    %806 = arith.mulf %798, %805 : vector<2x256xf32>
    %807 = arith.addf %795, %806 : vector<2x256xf32>
    %c240_i32_180 = arith.constant 240 : i32
    %808 = tpu.dynamic_rotate %429 by %c240_i32_180 dim 1 : vector<2x256xf32>, i32 -> vector<2x256xf32>
    %cst_181 = arith.constant 0.000000e+00 : f32
    %809 = vector.broadcast %cst_181 : f32 to vector<2x256xf32>
    %810 = arith.select %6, %808, %809 : vector<2x256xi1>, vector<2x256xf32>
    %811 = vector.broadcast %455 : f32 to vector<2x256xf32>
    %812 = arith.mulf %810, %811 : vector<2x256xf32>
    %813 = arith.addf %801, %812 : vector<2x256xf32>
    %814 = vector.broadcast %482 : f32 to vector<2x256xf32>
    %815 = arith.mulf %810, %814 : vector<2x256xf32>
    %816 = arith.addf %804, %815 : vector<2x256xf32>
    %817 = vector.broadcast %509 : f32 to vector<2x256xf32>
    %818 = arith.mulf %810, %817 : vector<2x256xf32>
    %819 = arith.addf %807, %818 : vector<2x256xf32>
    %c239_i32_182 = arith.constant 239 : i32
    %820 = tpu.dynamic_rotate %429 by %c239_i32_182 dim 1 : vector<2x256xf32>, i32 -> vector<2x256xf32>
    %cst_183 = arith.constant 0.000000e+00 : f32
    %821 = vector.broadcast %cst_183 : f32 to vector<2x256xf32>
    %822 = arith.select %14, %820, %821 : vector<2x256xi1>, vector<2x256xf32>
    %823 = vector.broadcast %456 : f32 to vector<2x256xf32>
    %824 = arith.mulf %822, %823 : vector<2x256xf32>
    %825 = arith.addf %813, %824 : vector<2x256xf32>
    %826 = vector.broadcast %483 : f32 to vector<2x256xf32>
    %827 = arith.mulf %822, %826 : vector<2x256xf32>
    %828 = arith.addf %816, %827 : vector<2x256xf32>
    %829 = vector.broadcast %510 : f32 to vector<2x256xf32>
    %830 = arith.mulf %822, %829 : vector<2x256xf32>
    %831 = arith.addf %819, %830 : vector<2x256xf32>
    %cst_184 = arith.constant 0.000000e+00 : f32
    %832 = vector.broadcast %cst_184 : f32 to vector<2x256xf32>
    %833 = arith.maximumf %825, %832 : vector<2x256xf32>
    %cst_185 = arith.constant 0.000000e+00 : f32
    %834 = vector.broadcast %cst_185 : f32 to vector<2x256xf32>
    %835 = arith.maximumf %828, %834 : vector<2x256xf32>
    %cst_186 = arith.constant 0.000000e+00 : f32
    %836 = vector.broadcast %cst_186 : f32 to vector<2x256xf32>
    %837 = arith.maximumf %831, %836 : vector<2x256xf32>
    %c0_187 = arith.constant 0 : index
    %838 = memref.load %arg5[%c0_187] : memref<27xf32, #tpu.memory_space<smem>>
    %c1_188 = arith.constant 1 : index
    %839 = memref.load %arg5[%c1_188] : memref<27xf32, #tpu.memory_space<smem>>
    %c2_189 = arith.constant 2 : index
    %840 = memref.load %arg5[%c2_189] : memref<27xf32, #tpu.memory_space<smem>>
    %c3_190 = arith.constant 3 : index
    %841 = memref.load %arg5[%c3_190] : memref<27xf32, #tpu.memory_space<smem>>
    %c4_191 = arith.constant 4 : index
    %842 = memref.load %arg5[%c4_191] : memref<27xf32, #tpu.memory_space<smem>>
    %c5_192 = arith.constant 5 : index
    %843 = memref.load %arg5[%c5_192] : memref<27xf32, #tpu.memory_space<smem>>
    %c6_193 = arith.constant 6 : index
    %844 = memref.load %arg5[%c6_193] : memref<27xf32, #tpu.memory_space<smem>>
    %c7_194 = arith.constant 7 : index
    %845 = memref.load %arg5[%c7_194] : memref<27xf32, #tpu.memory_space<smem>>
    %c8_195 = arith.constant 8 : index
    %846 = memref.load %arg5[%c8_195] : memref<27xf32, #tpu.memory_space<smem>>
    %c9_196 = arith.constant 9 : index
    %847 = memref.load %arg5[%c9_196] : memref<27xf32, #tpu.memory_space<smem>>
    %c10_197 = arith.constant 10 : index
    %848 = memref.load %arg5[%c10_197] : memref<27xf32, #tpu.memory_space<smem>>
    %c11_198 = arith.constant 11 : index
    %849 = memref.load %arg5[%c11_198] : memref<27xf32, #tpu.memory_space<smem>>
    %c12_199 = arith.constant 12 : index
    %850 = memref.load %arg5[%c12_199] : memref<27xf32, #tpu.memory_space<smem>>
    %c13_200 = arith.constant 13 : index
    %851 = memref.load %arg5[%c13_200] : memref<27xf32, #tpu.memory_space<smem>>
    %c14_201 = arith.constant 14 : index
    %852 = memref.load %arg5[%c14_201] : memref<27xf32, #tpu.memory_space<smem>>
    %c15_202 = arith.constant 15 : index
    %853 = memref.load %arg5[%c15_202] : memref<27xf32, #tpu.memory_space<smem>>
    %c16_203 = arith.constant 16 : index
    %854 = memref.load %arg5[%c16_203] : memref<27xf32, #tpu.memory_space<smem>>
    %c17_204 = arith.constant 17 : index
    %855 = memref.load %arg5[%c17_204] : memref<27xf32, #tpu.memory_space<smem>>
    %c18_205 = arith.constant 18 : index
    %856 = memref.load %arg5[%c18_205] : memref<27xf32, #tpu.memory_space<smem>>
    %c19_206 = arith.constant 19 : index
    %857 = memref.load %arg5[%c19_206] : memref<27xf32, #tpu.memory_space<smem>>
    %c20_207 = arith.constant 20 : index
    %858 = memref.load %arg5[%c20_207] : memref<27xf32, #tpu.memory_space<smem>>
    %c21_208 = arith.constant 21 : index
    %859 = memref.load %arg5[%c21_208] : memref<27xf32, #tpu.memory_space<smem>>
    %c22_209 = arith.constant 22 : index
    %860 = memref.load %arg5[%c22_209] : memref<27xf32, #tpu.memory_space<smem>>
    %c23_210 = arith.constant 23 : index
    %861 = memref.load %arg5[%c23_210] : memref<27xf32, #tpu.memory_space<smem>>
    %c24_211 = arith.constant 24 : index
    %862 = memref.load %arg5[%c24_211] : memref<27xf32, #tpu.memory_space<smem>>
    %c25_212 = arith.constant 25 : index
    %863 = memref.load %arg5[%c25_212] : memref<27xf32, #tpu.memory_space<smem>>
    %c26_213 = arith.constant 26 : index
    %864 = memref.load %arg5[%c26_213] : memref<27xf32, #tpu.memory_space<smem>>
    %c0_214 = arith.constant 0 : index
    %865 = memref.load %arg6[%c0_214] : memref<1xf32, #tpu.memory_space<smem>>
    %866 = vector.broadcast %865 : f32 to vector<2x256xf32>
    %c17_i32_215 = arith.constant 17 : i32
    %867 = tpu.dynamic_rotate %833 by %c17_i32_215 dim 1 : vector<2x256xf32>, i32 -> vector<2x256xf32>
    %cst_216 = arith.constant 0.000000e+00 : f32
    %868 = vector.broadcast %cst_216 : f32 to vector<2x256xf32>
    %869 = arith.select %11, %867, %868 : vector<2x256xi1>, vector<2x256xf32>
    %870 = vector.broadcast %838 : f32 to vector<2x256xf32>
    %871 = arith.mulf %869, %870 : vector<2x256xf32>
    %872 = arith.addf %866, %871 : vector<2x256xf32>
    %c16_i32_217 = arith.constant 16 : i32
    %873 = tpu.dynamic_rotate %833 by %c16_i32_217 dim 1 : vector<2x256xf32>, i32 -> vector<2x256xf32>
    %cst_218 = arith.constant 0.000000e+00 : f32
    %874 = vector.broadcast %cst_218 : f32 to vector<2x256xf32>
    %875 = arith.select %4, %873, %874 : vector<2x256xi1>, vector<2x256xf32>
    %876 = vector.broadcast %839 : f32 to vector<2x256xf32>
    %877 = arith.mulf %875, %876 : vector<2x256xf32>
    %878 = arith.addf %872, %877 : vector<2x256xf32>
    %c15_i32_219 = arith.constant 15 : i32
    %879 = tpu.dynamic_rotate %833 by %c15_i32_219 dim 1 : vector<2x256xf32>, i32 -> vector<2x256xf32>
    %cst_220 = arith.constant 0.000000e+00 : f32
    %880 = vector.broadcast %cst_220 : f32 to vector<2x256xf32>
    %881 = arith.select %12, %879, %880 : vector<2x256xi1>, vector<2x256xf32>
    %882 = vector.broadcast %840 : f32 to vector<2x256xf32>
    %883 = arith.mulf %881, %882 : vector<2x256xf32>
    %884 = arith.addf %878, %883 : vector<2x256xf32>
    %c1_i32_221 = arith.constant 1 : i32
    %885 = tpu.dynamic_rotate %833 by %c1_i32_221 dim 1 : vector<2x256xf32>, i32 -> vector<2x256xf32>
    %cst_222 = arith.constant 0.000000e+00 : f32
    %886 = vector.broadcast %cst_222 : f32 to vector<2x256xf32>
    %887 = arith.select %8, %885, %886 : vector<2x256xi1>, vector<2x256xf32>
    %888 = vector.broadcast %841 : f32 to vector<2x256xf32>
    %889 = arith.mulf %887, %888 : vector<2x256xf32>
    %890 = arith.addf %884, %889 : vector<2x256xf32>
    %891 = vector.broadcast %842 : f32 to vector<2x256xf32>
    %892 = arith.mulf %833, %891 : vector<2x256xf32>
    %893 = arith.addf %890, %892 : vector<2x256xf32>
    %c255_i32_223 = arith.constant 255 : i32
    %894 = tpu.dynamic_rotate %833 by %c255_i32_223 dim 1 : vector<2x256xf32>, i32 -> vector<2x256xf32>
    %cst_224 = arith.constant 0.000000e+00 : f32
    %895 = vector.broadcast %cst_224 : f32 to vector<2x256xf32>
    %896 = arith.select %10, %894, %895 : vector<2x256xi1>, vector<2x256xf32>
    %897 = vector.broadcast %843 : f32 to vector<2x256xf32>
    %898 = arith.mulf %896, %897 : vector<2x256xf32>
    %899 = arith.addf %893, %898 : vector<2x256xf32>
    %c241_i32_225 = arith.constant 241 : i32
    %900 = tpu.dynamic_rotate %833 by %c241_i32_225 dim 1 : vector<2x256xf32>, i32 -> vector<2x256xf32>
    %cst_226 = arith.constant 0.000000e+00 : f32
    %901 = vector.broadcast %cst_226 : f32 to vector<2x256xf32>
    %902 = arith.select %13, %900, %901 : vector<2x256xi1>, vector<2x256xf32>
    %903 = vector.broadcast %844 : f32 to vector<2x256xf32>
    %904 = arith.mulf %902, %903 : vector<2x256xf32>
    %905 = arith.addf %899, %904 : vector<2x256xf32>
    %c240_i32_227 = arith.constant 240 : i32
    %906 = tpu.dynamic_rotate %833 by %c240_i32_227 dim 1 : vector<2x256xf32>, i32 -> vector<2x256xf32>
    %cst_228 = arith.constant 0.000000e+00 : f32
    %907 = vector.broadcast %cst_228 : f32 to vector<2x256xf32>
    %908 = arith.select %6, %906, %907 : vector<2x256xi1>, vector<2x256xf32>
    %909 = vector.broadcast %845 : f32 to vector<2x256xf32>
    %910 = arith.mulf %908, %909 : vector<2x256xf32>
    %911 = arith.addf %905, %910 : vector<2x256xf32>
    %c239_i32_229 = arith.constant 239 : i32
    %912 = tpu.dynamic_rotate %833 by %c239_i32_229 dim 1 : vector<2x256xf32>, i32 -> vector<2x256xf32>
    %cst_230 = arith.constant 0.000000e+00 : f32
    %913 = vector.broadcast %cst_230 : f32 to vector<2x256xf32>
    %914 = arith.select %14, %912, %913 : vector<2x256xi1>, vector<2x256xf32>
    %915 = vector.broadcast %846 : f32 to vector<2x256xf32>
    %916 = arith.mulf %914, %915 : vector<2x256xf32>
    %917 = arith.addf %911, %916 : vector<2x256xf32>
    %c17_i32_231 = arith.constant 17 : i32
    %918 = tpu.dynamic_rotate %835 by %c17_i32_231 dim 1 : vector<2x256xf32>, i32 -> vector<2x256xf32>
    %cst_232 = arith.constant 0.000000e+00 : f32
    %919 = vector.broadcast %cst_232 : f32 to vector<2x256xf32>
    %920 = arith.select %11, %918, %919 : vector<2x256xi1>, vector<2x256xf32>
    %921 = vector.broadcast %847 : f32 to vector<2x256xf32>
    %922 = arith.mulf %920, %921 : vector<2x256xf32>
    %923 = arith.addf %917, %922 : vector<2x256xf32>
    %c16_i32_233 = arith.constant 16 : i32
    %924 = tpu.dynamic_rotate %835 by %c16_i32_233 dim 1 : vector<2x256xf32>, i32 -> vector<2x256xf32>
    %cst_234 = arith.constant 0.000000e+00 : f32
    %925 = vector.broadcast %cst_234 : f32 to vector<2x256xf32>
    %926 = arith.select %4, %924, %925 : vector<2x256xi1>, vector<2x256xf32>
    %927 = vector.broadcast %848 : f32 to vector<2x256xf32>
    %928 = arith.mulf %926, %927 : vector<2x256xf32>
    %929 = arith.addf %923, %928 : vector<2x256xf32>
    %c15_i32_235 = arith.constant 15 : i32
    %930 = tpu.dynamic_rotate %835 by %c15_i32_235 dim 1 : vector<2x256xf32>, i32 -> vector<2x256xf32>
    %cst_236 = arith.constant 0.000000e+00 : f32
    %931 = vector.broadcast %cst_236 : f32 to vector<2x256xf32>
    %932 = arith.select %12, %930, %931 : vector<2x256xi1>, vector<2x256xf32>
    %933 = vector.broadcast %849 : f32 to vector<2x256xf32>
    %934 = arith.mulf %932, %933 : vector<2x256xf32>
    %935 = arith.addf %929, %934 : vector<2x256xf32>
    %c1_i32_237 = arith.constant 1 : i32
    %936 = tpu.dynamic_rotate %835 by %c1_i32_237 dim 1 : vector<2x256xf32>, i32 -> vector<2x256xf32>
    %cst_238 = arith.constant 0.000000e+00 : f32
    %937 = vector.broadcast %cst_238 : f32 to vector<2x256xf32>
    %938 = arith.select %8, %936, %937 : vector<2x256xi1>, vector<2x256xf32>
    %939 = vector.broadcast %850 : f32 to vector<2x256xf32>
    %940 = arith.mulf %938, %939 : vector<2x256xf32>
    %941 = arith.addf %935, %940 : vector<2x256xf32>
    %942 = vector.broadcast %851 : f32 to vector<2x256xf32>
    %943 = arith.mulf %835, %942 : vector<2x256xf32>
    %944 = arith.addf %941, %943 : vector<2x256xf32>
    %c255_i32_239 = arith.constant 255 : i32
    %945 = tpu.dynamic_rotate %835 by %c255_i32_239 dim 1 : vector<2x256xf32>, i32 -> vector<2x256xf32>
    %cst_240 = arith.constant 0.000000e+00 : f32
    %946 = vector.broadcast %cst_240 : f32 to vector<2x256xf32>
    %947 = arith.select %10, %945, %946 : vector<2x256xi1>, vector<2x256xf32>
    %948 = vector.broadcast %852 : f32 to vector<2x256xf32>
    %949 = arith.mulf %947, %948 : vector<2x256xf32>
    %950 = arith.addf %944, %949 : vector<2x256xf32>
    %c241_i32_241 = arith.constant 241 : i32
    %951 = tpu.dynamic_rotate %835 by %c241_i32_241 dim 1 : vector<2x256xf32>, i32 -> vector<2x256xf32>
    %cst_242 = arith.constant 0.000000e+00 : f32
    %952 = vector.broadcast %cst_242 : f32 to vector<2x256xf32>
    %953 = arith.select %13, %951, %952 : vector<2x256xi1>, vector<2x256xf32>
    %954 = vector.broadcast %853 : f32 to vector<2x256xf32>
    %955 = arith.mulf %953, %954 : vector<2x256xf32>
    %956 = arith.addf %950, %955 : vector<2x256xf32>
    %c240_i32_243 = arith.constant 240 : i32
    %957 = tpu.dynamic_rotate %835 by %c240_i32_243 dim 1 : vector<2x256xf32>, i32 -> vector<2x256xf32>
    %cst_244 = arith.constant 0.000000e+00 : f32
    %958 = vector.broadcast %cst_244 : f32 to vector<2x256xf32>
    %959 = arith.select %6, %957, %958 : vector<2x256xi1>, vector<2x256xf32>
    %960 = vector.broadcast %854 : f32 to vector<2x256xf32>
    %961 = arith.mulf %959, %960 : vector<2x256xf32>
    %962 = arith.addf %956, %961 : vector<2x256xf32>
    %c239_i32_245 = arith.constant 239 : i32
    %963 = tpu.dynamic_rotate %835 by %c239_i32_245 dim 1 : vector<2x256xf32>, i32 -> vector<2x256xf32>
    %cst_246 = arith.constant 0.000000e+00 : f32
    %964 = vector.broadcast %cst_246 : f32 to vector<2x256xf32>
    %965 = arith.select %14, %963, %964 : vector<2x256xi1>, vector<2x256xf32>
    %966 = vector.broadcast %855 : f32 to vector<2x256xf32>
    %967 = arith.mulf %965, %966 : vector<2x256xf32>
    %968 = arith.addf %962, %967 : vector<2x256xf32>
    %c17_i32_247 = arith.constant 17 : i32
    %969 = tpu.dynamic_rotate %837 by %c17_i32_247 dim 1 : vector<2x256xf32>, i32 -> vector<2x256xf32>
    %cst_248 = arith.constant 0.000000e+00 : f32
    %970 = vector.broadcast %cst_248 : f32 to vector<2x256xf32>
    %971 = arith.select %11, %969, %970 : vector<2x256xi1>, vector<2x256xf32>
    %972 = vector.broadcast %856 : f32 to vector<2x256xf32>
    %973 = arith.mulf %971, %972 : vector<2x256xf32>
    %974 = arith.addf %968, %973 : vector<2x256xf32>
    %c16_i32_249 = arith.constant 16 : i32
    %975 = tpu.dynamic_rotate %837 by %c16_i32_249 dim 1 : vector<2x256xf32>, i32 -> vector<2x256xf32>
    %cst_250 = arith.constant 0.000000e+00 : f32
    %976 = vector.broadcast %cst_250 : f32 to vector<2x256xf32>
    %977 = arith.select %4, %975, %976 : vector<2x256xi1>, vector<2x256xf32>
    %978 = vector.broadcast %857 : f32 to vector<2x256xf32>
    %979 = arith.mulf %977, %978 : vector<2x256xf32>
    %980 = arith.addf %974, %979 : vector<2x256xf32>
    %c15_i32_251 = arith.constant 15 : i32
    %981 = tpu.dynamic_rotate %837 by %c15_i32_251 dim 1 : vector<2x256xf32>, i32 -> vector<2x256xf32>
    %cst_252 = arith.constant 0.000000e+00 : f32
    %982 = vector.broadcast %cst_252 : f32 to vector<2x256xf32>
    %983 = arith.select %12, %981, %982 : vector<2x256xi1>, vector<2x256xf32>
    %984 = vector.broadcast %858 : f32 to vector<2x256xf32>
    %985 = arith.mulf %983, %984 : vector<2x256xf32>
    %986 = arith.addf %980, %985 : vector<2x256xf32>
    %c1_i32_253 = arith.constant 1 : i32
    %987 = tpu.dynamic_rotate %837 by %c1_i32_253 dim 1 : vector<2x256xf32>, i32 -> vector<2x256xf32>
    %cst_254 = arith.constant 0.000000e+00 : f32
    %988 = vector.broadcast %cst_254 : f32 to vector<2x256xf32>
    %989 = arith.select %8, %987, %988 : vector<2x256xi1>, vector<2x256xf32>
    %990 = vector.broadcast %859 : f32 to vector<2x256xf32>
    %991 = arith.mulf %989, %990 : vector<2x256xf32>
    %992 = arith.addf %986, %991 : vector<2x256xf32>
    %993 = vector.broadcast %860 : f32 to vector<2x256xf32>
    %994 = arith.mulf %837, %993 : vector<2x256xf32>
    %995 = arith.addf %992, %994 : vector<2x256xf32>
    %c255_i32_255 = arith.constant 255 : i32
    %996 = tpu.dynamic_rotate %837 by %c255_i32_255 dim 1 : vector<2x256xf32>, i32 -> vector<2x256xf32>
    %cst_256 = arith.constant 0.000000e+00 : f32
    %997 = vector.broadcast %cst_256 : f32 to vector<2x256xf32>
    %998 = arith.select %10, %996, %997 : vector<2x256xi1>, vector<2x256xf32>
    %999 = vector.broadcast %861 : f32 to vector<2x256xf32>
    %1000 = arith.mulf %998, %999 : vector<2x256xf32>
    %1001 = arith.addf %995, %1000 : vector<2x256xf32>
    %c241_i32_257 = arith.constant 241 : i32
    %1002 = tpu.dynamic_rotate %837 by %c241_i32_257 dim 1 : vector<2x256xf32>, i32 -> vector<2x256xf32>
    %cst_258 = arith.constant 0.000000e+00 : f32
    %1003 = vector.broadcast %cst_258 : f32 to vector<2x256xf32>
    %1004 = arith.select %13, %1002, %1003 : vector<2x256xi1>, vector<2x256xf32>
    %1005 = vector.broadcast %862 : f32 to vector<2x256xf32>
    %1006 = arith.mulf %1004, %1005 : vector<2x256xf32>
    %1007 = arith.addf %1001, %1006 : vector<2x256xf32>
    %c240_i32_259 = arith.constant 240 : i32
    %1008 = tpu.dynamic_rotate %837 by %c240_i32_259 dim 1 : vector<2x256xf32>, i32 -> vector<2x256xf32>
    %cst_260 = arith.constant 0.000000e+00 : f32
    %1009 = vector.broadcast %cst_260 : f32 to vector<2x256xf32>
    %1010 = arith.select %6, %1008, %1009 : vector<2x256xi1>, vector<2x256xf32>
    %1011 = vector.broadcast %863 : f32 to vector<2x256xf32>
    %1012 = arith.mulf %1010, %1011 : vector<2x256xf32>
    %1013 = arith.addf %1007, %1012 : vector<2x256xf32>
    %c239_i32_261 = arith.constant 239 : i32
    %1014 = tpu.dynamic_rotate %837 by %c239_i32_261 dim 1 : vector<2x256xf32>, i32 -> vector<2x256xf32>
    %cst_262 = arith.constant 0.000000e+00 : f32
    %1015 = vector.broadcast %cst_262 : f32 to vector<2x256xf32>
    %1016 = arith.select %14, %1014, %1015 : vector<2x256xi1>, vector<2x256xf32>
    %1017 = vector.broadcast %864 : f32 to vector<2x256xf32>
    %1018 = arith.mulf %1016, %1017 : vector<2x256xf32>
    %1019 = arith.addf %1013, %1018 : vector<2x256xf32>
    %c0_263 = arith.constant 0 : index
    %c0_264 = arith.constant 0 : index
    %1020 = vector.load %arg7[%c0_263, %c0_264] : memref<2x256xf32, #tpu.memory_space<vmem>>, vector<2x256xf32>
    tpu.vector_store %arg7[%c0_263, %c0_264], %1019 {strides = array<i32>} : memref<2x256xf32, #tpu.memory_space<vmem>>, vector<2x256xf32>,
    return
  }
}

</mosaic_0001>

<llo_original>
// kernel: l3agg_forward.1
$region0: #{l3agg_forward.1}
  #allocation0 [shape = 'u32[]', space=smem, size = 0x4, offset = 0x4, fixed_abs, tag = 'smem constant byte address 0x4 - core index']
  #allocation1 [shape = 'u32[144,128]{1,0:T(1,128)}', space=vmem, size = 0x12000, scoped, tag = 'internal scratch']
  #allocation2 [shape = 'f32[1]{0:T(128)S(6)}', space=smem, size = 0x200, scoped, tag = 'scoped memory for l3agg_forward.1']
  %s0 = inlined_call_operand.vmem [shape: f32[2,3,256], index: 0, kind: input, shape index: {}]
  %s1 = inlined_call_operand.vmem [shape: f32[81], index: 1, kind: input, shape index: {}]
  %s2 = inlined_call_operand.vmem [shape: f32[3], index: 2, kind: input, shape index: {}]
  %s3 = inlined_call_operand.vmem [shape: f32[81], index: 3, kind: input, shape index: {}]
  %s4 = inlined_call_operand.vmem [shape: f32[3], index: 4, kind: input, shape index: {}]
  %s5 = inlined_call_operand.vmem [shape: f32[27], index: 5, kind: input, shape index: {}]
  %s6 = inlined_call_operand.<no memory space> [shape: f32[1], index: 6, kind: input, shape index: {}]
  %s7 = inlined_call_operand.vmem [shape: f32[2,256], index: 7, kind: output, shape index: {}]
  %s8 = sld [smem:[#allocation0]]
  $region58: #{l3agg_forward.1} parent=0
    _
  %s10 = ssub.s32 1, %s8
  %s11 = scalar_select 0, %s10, %s8
  %12 = sst [smem:[#allocation2]] %s6
  $region1: #{l3agg_forward.1} parent=0
    #allocation3 [shape = 'u8[512]{0}', space=smem, size = 0x200, scoped, tag = 'input window, operand 1, single buffered']
    #allocation4 [shape = 's32[1]{0}', space=sflag, size = 0x4, scoped, tag = 'scoped memory for l3agg_forward.1']
    #allocation5 [shape = 'u8[512]{0}', space=smem, size = 0x200, scoped, tag = 'input window, operand 2, single buffered']
    #allocation6 [shape = 's32[1]{0}', space=sflag, size = 0x4, scoped, tag = 'scoped memory for l3agg_forward.1']
    #allocation7 [shape = 'u8[512]{0}', space=smem, size = 0x200, scoped, tag = 'input window, operand 3, single buffered']
    #allocation8 [shape = 'u8[512]{0}', space=smem, size = 0x200, scoped, tag = 'input window, operand 4, single buffered']
    #allocation9 [shape = 's32[1]{0}', space=sflag, size = 0x4, scoped, tag = 'scoped memory for l3agg_forward.1']
    #allocation10 [shape = 'u8[512]{0}', space=smem, size = 0x200, scoped, tag = 'input window, operand 5, single buffered']
    %13 = vsyncpa [#allocation4], 0
    %14 = vsyncpa [#allocation6], 0
    %15 = vsyncpa [#allocation9], 0
    // Predicated region
    $region2: #{l3agg_forward.1} parent=1 // pred_check
      _
    $region3: #{l3agg_forward.1} parent=1 // pred_check_branch
      %17 = sbr.rel (0) target = $region5
    $region4: #{l3agg_forward.1} parent=1 // pred_region
      _
    $region5: #{l3agg_forward.1} parent=1 // pred_fallthru
      _
    // Predicated region
    $region6: #{l3agg_forward.1} parent=1 // pred_check
      _
    $region7: #{l3agg_forward.1} parent=1 // pred_check_branch
      %19 = sbr.rel (0) target = $region9
    $region8: #{l3agg_forward.1} parent=1 // pred_region
      %s21 = ssub.s32 16, 16
      %22 = vsyncadd [#allocation4], %s21
      %s24 = sshll.u32 %s1, 4
      %s25 = int_to_ptr.vmem [resolvable:$true] %s24
      %27 = dma.vmem_to_smem %s25, 16, [#allocation3], [#allocation4]
    $region9: #{l3agg_forward.1} parent=1 // pred_fallthru
      _
    // Predicated region
    $region10: #{l3agg_forward.1} parent=1 // pred_check
      _
    $region11: #{l3agg_forward.1} parent=1 // pred_check_branch
      %29 = sbr.rel (0) target = $region13
    $region12: #{l3agg_forward.1} parent=1 // pred_region
      %s31 = ssub.s32 16, 16
      %32 = vsyncadd [#allocation6], %s31
      %s34 = sshll.u32 %s2, 4
      %s35 = int_to_ptr.vmem [resolvable:$true] %s34
      %37 = dma.vmem_to_smem %s35, 16, [#allocation5], [#allocation6]
    $region13: #{l3agg_forward.1} parent=1 // pred_fallthru
      _
    // Predicated region
    $region14: #{l3agg_forward.1} parent=1 // pred_check
      _
    $region15: #{l3agg_forward.1} parent=1 // pred_check_branch
      %39 = sbr.rel (0) target = $region17
    $region16: #{l3agg_forward.1} parent=1 // pred_region
      %s41 = ssub.s32 16, 16
      %42 = vsyncadd [#allocation6], %s41
      %s44 = sshll.u32 %s3, 4
      %s45 = int_to_ptr.vmem [resolvable:$true] %s44
      %47 = dma.vmem_to_smem %s45, 16, [#allocation7], [#allocation6]
    $region17: #{l3agg_forward.1} parent=1 // pred_fallthru
      _
    // Predicated region
    $region18: #{l3agg_forward.1} parent=1 // pred_check
      _
    $region19: #{l3agg_forward.1} parent=1 // pred_check_branch
      %49 = sbr.rel (0) target = $region21
    $region20: #{l3agg_forward.1} parent=1 // pred_region
      %s51 = ssub.s32 16, 16
      %52 = vsyncadd [#allocation9], %s51
      %s54 = sshll.u32 %s4, 4
      %s55 = int_to_ptr.vmem [resolvable:$true] %s54
      %57 = dma.vmem_to_smem %s55, 16, [#allocation8], [#allocation9]
    $region21: #{l3agg_forward.1} parent=1 // pred_fallthru
      _
    // Predicated region
    $region22: #{l3agg_forward.1} parent=1 // pred_check
      _
    $region23: #{l3agg_forward.1} parent=1 // pred_check_branch
      %59 = sbr.rel (0) target = $region25
    $region24: #{l3agg_forward.1} parent=1 // pred_region
      %s61 = ssub.s32 16, 16
      %62 = vsyncadd [#allocation9], %s61
      %s64 = sshll.u32 %s5, 4
      %s65 = int_to_ptr.vmem [resolvable:$true] %s64
      %67 = dma.vmem_to_smem %s65, 16, [#allocation10], [#allocation9]
    $region25: #{l3agg_forward.1} parent=1 // pred_fallthru
      _
    // Predicated region
    $region26: #{l3agg_forward.1} parent=1 // pred_check
      _
    $region27: #{l3agg_forward.1} parent=1 // pred_check_branch
      %69 = sbr.rel (0) target = $region29
    $region28: #{l3agg_forward.1} parent=1 // pred_region
      _
    $region29: #{l3agg_forward.1} parent=1 // pred_fallthru
      _
    // Predicated region
    $region30: #{l3agg_forward.1} parent=1 // pred_check
      _
    $region31: #{l3agg_forward.1} parent=1 // pred_check_branch
      %71 = sbr.rel (0) target = $region33
    $region32: #{l3agg_forward.1} parent=1 // pred_region
      %72 = dma.done [#allocation4], 16
    $region33: #{l3agg_forward.1} parent=1 // pred_fallthru
      _
    // Predicated region
    $region34: #{l3agg_forward.1} parent=1 // pred_check
      _
    $region35: #{l3agg_forward.1} parent=1 // pred_check_branch
      %74 = sbr.rel (0) target = $region37
    $region36: #{l3agg_forward.1} parent=1 // pred_region
      %75 = dma.done [#allocation6], 16
    $region37: #{l3agg_forward.1} parent=1 // pred_fallthru
      _
    // Predicated region
    $region38: #{l3agg_forward.1} parent=1 // pred_check
      _
    $region39: #{l3agg_forward.1} parent=1 // pred_check_branch
      %77 = sbr.rel (0) target = $region41
    $region40: #{l3agg_forward.1} parent=1 // pred_region
      %78 = dma.done [#allocation6], 16
    $region41: #{l3agg_forward.1} parent=1 // pred_fallthru
      _
    // Predicated region
    $region42: #{l3agg_forward.1} parent=1 // pred_check
      _
    $region43: #{l3agg_forward.1} parent=1 // pred_check_branch
      %80 = sbr.rel (0) target = $region45
    $region44: #{l3agg_forward.1} parent=1 // pred_region
      %81 = dma.done [#allocation9], 16
    $region45: #{l3agg_forward.1} parent=1 // pred_fallthru
      _
    // Predicated region
    $region46: #{l3agg_forward.1} parent=1 // pred_check
      _
    $region47: #{l3agg_forward.1} parent=1 // pred_check_branch
      %83 = sbr.rel (0) target = $region49
    $region48: #{l3agg_forward.1} parent=1 // pred_region
      %84 = dma.done [#allocation9], 16
    $region49: #{l3agg_forward.1} parent=1 // pred_fallthru
      _
    %85 = sfence
    %v86 = vlaneseq
    %v87 = vand.u32 %v86, 127
    %v88 = vadd.s32 %v87, 128
    %v89 = vand.u32 %v87, 15
    %v90 = vand.u32 %v88, 15
    %vm91 = vcmp.ge.s32.totalorder %v87, 16
    %vm92 = vcmp.ge.s32.totalorder %v88, 16
    %vm93 = vcmp.lt.s32.totalorder %v87, 240
    %vm94 = vcmp.lt.s32.totalorder %v88, 240
    %vm95 = vcmp.ne.s32.totalorder %v89, 0
    %vm96 = vcmp.ne.s32.totalorder %v90, 0
    %vm97 = vcmp.ne.s32.totalorder %v89, 15
    %vm98 = vcmp.ne.s32.totalorder %v90, 15
    %vm99 = vmand %vm91, %vm95
    %vm100 = vmand %vm92, %vm96
    %vm101 = vmand %vm91, %vm97
    %vm102 = vmand %vm92, %vm98
    %vm103 = vmand %vm93, %vm95
    %vm104 = vmand %vm94, %vm96
    %vm105 = vmand %vm93, %vm97
    %vm106 = vmand %vm94, %vm98
    %v107 = vld [vmem:[%s0] sm:$0x77]
    %v108 = vld [vmem:[%s0 + $0x8] sm:$0x77]
    %s109 = sld [smem:[#allocation3]]
    %s110 = sld [smem:[#allocation3 + $0x1]]
    %s111 = sld [smem:[#allocation3 + $0x2]]
    %s112 = sld [smem:[#allocation3 + $0x3]]
    %s113 = sld [smem:[#allocation3 + $0x4]]
    %s114 = sld [smem:[#allocation3 + $0x5]]
    %s115 = sld [smem:[#allocation3 + $0x6]]
    %s116 = sld [smem:[#allocation3 + $0x7]]
    %s117 = sld [smem:[#allocation3 + $0x8]]
    %s118 = sld [smem:[#allocation3 + $0x9]]
    %s119 = sld [smem:[#allocation3 + $0xa]]
    %s120 = sld [smem:[#allocation3 + $0xb]]
    %s121 = sld [smem:[#allocation3 + $0xc]]
    %s122 = sld [smem:[#allocation3 + $0xd]]
    %s123 = sld [smem:[#allocation3 + $0xe]]
    %s124 = sld [smem:[#allocation3 + $0xf]]
    %s125 = sld [smem:[#allocation3 + $0x10]]
    %s126 = sld [smem:[#allocation3 + $0x11]]
    %s127 = sld [smem:[#allocation3 + $0x12]]
    %s128 = sld [smem:[#allocation3 + $0x13]]
    %s129 = sld [smem:[#allocation3 + $0x14]]
    %s130 = sld [smem:[#allocation3 + $0x15]]
    %s131 = sld [smem:[#allocation3 + $0x16]]
    %s132 = sld [smem:[#allocation3 + $0x17]]
    %s133 = sld [smem:[#allocation3 + $0x18]]
    %s134 = sld [smem:[#allocation3 + $0x19]]
    %s135 = sld [smem:[#allocation3 + $0x1a]]
    %s136 = sld [smem:[#allocation3 + $0x1b]]
    %s137 = sld [smem:[#allocation3 + $0x1c]]
    %s138 = sld [smem:[#allocation3 + $0x1d]]
    %s139 = sld [smem:[#allocation3 + $0x1e]]
    %s140 = sld [smem:[#allocation3 + $0x1f]]
    %s141 = sld [smem:[#allocation3 + $0x20]]
    %s142 = sld [smem:[#allocation3 + $0x21]]
    %s143 = sld [smem:[#allocation3 + $0x22]]
    %s144 = sld [smem:[#allocation3 + $0x23]]
    %s145 = sld [smem:[#allocation3 + $0x24]]
    %s146 = sld [smem:[#allocation3 + $0x25]]
    %s147 = sld [smem:[#allocation3 + $0x26]]
    %s148 = sld [smem:[#allocation3 + $0x27]]
    %s149 = sld [smem:[#allocation3 + $0x28]]
    %s150 = sld [smem:[#allocation3 + $0x29]]
    %s151 = sld [smem:[#allocation3 + $0x2a]]
    %s152 = sld [smem:[#allocation3 + $0x2b]]
    %s153 = sld [smem:[#allocation3 + $0x2c]]
    %s154 = sld [smem:[#allocation3 + $0x2d]]
    %s155 = sld [smem:[#allocation3 + $0x2e]]
    %s156 = sld [smem:[#allocation3 + $0x2f]]
    %s157 = sld [smem:[#allocation3 + $0x30]]
    %s158 = sld [smem:[#allocation3 + $0x31]]
    %s159 = sld [smem:[#allocation3 + $0x32]]
    %s160 = sld [smem:[#allocation3 + $0x33]]
    %s161 = sld [smem:[#allocation3 + $0x34]]
    %s162 = sld [smem:[#allocation3 + $0x35]]
    %s163 = sld [smem:[#allocation3 + $0x36]]
    %s164 = sld [smem:[#allocation3 + $0x37]]
    %s165 = sld [smem:[#allocation3 + $0x38]]
    %s166 = sld [smem:[#allocation3 + $0x39]]
    %s167 = sld [smem:[#allocation3 + $0x3a]]
    %s168 = sld [smem:[#allocation3 + $0x3b]]
    %s169 = sld [smem:[#allocation3 + $0x3c]]
    %s170 = sld [smem:[#allocation3 + $0x3d]]
    %s171 = sld [smem:[#allocation3 + $0x3e]]
    %s172 = sld [smem:[#allocation3 + $0x3f]]
    %s173 = sld [smem:[#allocation3 + $0x40]]
    %s174 = sld [smem:[#allocation3 + $0x41]]
    %s175 = sld [smem:[#allocation3 + $0x42]]
    %s176 = sld [smem:[#allocation3 + $0x43]]
    %s177 = sld [smem:[#allocation3 + $0x44]]
    %s178 = sld [smem:[#allocation3 + $0x45]]
    %s179 = sld [smem:[#allocation3 + $0x46]]
    %s180 = sld [smem:[#allocation3 + $0x47]]
    %s181 = sld [smem:[#allocation3 + $0x48]]
    %s182 = sld [smem:[#allocation3 + $0x49]]
    %s183 = sld [smem:[#allocation3 + $0x4a]]
    %s184 = sld [smem:[#allocation3 + $0x4b]]
    %s185 = sld [smem:[#allocation3 + $0x4c]]
    %s186 = sld [smem:[#allocation3 + $0x4d]]
    %s187 = sld [smem:[#allocation3 + $0x4e]]
    %s188 = sld [smem:[#allocation3 + $0x4f]]
    %s189 = sld [smem:[#allocation3 + $0x50]]
    %s190 = sld [smem:[#allocation5]]
    %v191 = vstv %s190
    %s192 = sld [smem:[#allocation5 + $0x1]]
    %v193 = vstv %s192
    %s194 = sld [smem:[#allocation5 + $0x2]]
    %v195 = vstv %s194
    %v198 = vlaneseq
    %v199 = vshrl.u32 %v198, 7
    %v200 = vsub.s32 0, %v199
    %v201 = vrot.slane %v107, %v200
    %v202 = vlaneseq
    %v203 = vshrl.u32 %v202, 7
    %v204 = vsub.s32 4, %v203
    %v205 = vrot.slane %v107, %v204
    %v206 = vlaneseq
    %v207 = vshrl.u32 %v206, 7
    %v208 = vsub.s32 0, %v207
    %v209 = vrot.slane %v108, %v208
    %v210 = vlaneseq
    %v211 = vshrl.u32 %v210, 7
    %v212 = vsub.s32 4, %v211
    %v213 = vrot.slane %v108, %v212
    %vm214 = vcmask 1041409
    %v215 = vsel %vm214, %v209, %v201
    %v216 = vsel %vm214, %v213, %v205
    %219 = vrot.lane.b32.xlu0 %v215, 17
    %v220 = vpop.permute.xlu0 %219
    %221 = vrot.lane.b32.xlu0 %v216, 17
    %v222 = vpop.permute.xlu0 %221
    %vm223 = vcmp.lt.s32.totalorder %v87, 17
    %v224 = vsel %vm223, %v220, %v222
    %v225 = vsel %vm223, %v222, %v220
    %v226 = vsel %vm99, %v225, 0.0
    %v227 = vsel %vm100, %v224, 0.0
    %v228 = vstv %s109
    %v229 = vmul.f32 %v226, %v228
    %v230 = vmul.f32 %v227, %v228
    %v231 = vadd.f32 %v191, %v229
    %v232 = vadd.f32 %v191, %v230
    %v233 = vstv %s136
    %v234 = vmul.f32 %v226, %v233
    %v235 = vmul.f32 %v227, %v233
    %v236 = vadd.f32 %v193, %v234
    %v237 = vadd.f32 %v193, %v235
    %v238 = vstv %s163
    %v239 = vmul.f32 %v226, %v238
    %v240 = vmul.f32 %v227, %v238
    %v241 = vadd.f32 %v195, %v239
    %v242 = vadd.f32 %v195, %v240
    %243 = vrot.lane.b32.xlu0 %v215, 16
    %v244 = vpop.permute.xlu0 %243
    %245 = vrot.lane.b32.xlu0 %v216, 16
    %v246 = vpop.permute.xlu0 %245
    %vm247 = vcmp.lt.s32.totalorder %v87, 16
    %v248 = vsel %vm247, %v244, %v246
    %v249 = vsel %vm247, %v246, %v244
    %v250 = vsel %vm91, %v249, 0.0
    %v251 = vsel %vm92, %v248, 0.0
    %v252 = vstv %s110
    %v253 = vmul.f32 %v250, %v252
    %v254 = vmul.f32 %v251, %v252
    %v255 = vadd.f32 %v231, %v253
    %v256 = vadd.f32 %v232, %v254
    %v257 = vstv %s137
    %v258 = vmul.f32 %v250, %v257
    %v259 = vmul.f32 %v251, %v257
    %v260 = vadd.f32 %v236, %v258
    %v261 = vadd.f32 %v237, %v259
    %v262 = vstv %s164
    %v263 = vmul.f32 %v250, %v262
    %v264 = vmul.f32 %v251, %v262
    %v265 = vadd.f32 %v241, %v263
    %v266 = vadd.f32 %v242, %v264
    %267 = vrot.lane.b32.xlu0 %v215, 15
    %v268 = vpop.permute.xlu0 %267
    %269 = vrot.lane.b32.xlu0 %v216, 15
    %v270 = vpop.permute.xlu0 %269
    %vm271 = vcmp.lt.s32.totalorder %v87, 15
    %v272 = vsel %vm271, %v268, %v270
    %v273 = vsel %vm271, %v270, %v268
    %v274 = vsel %vm101, %v273, 0.0
    %v275 = vsel %vm102, %v272, 0.0
    %v276 = vstv %s111
    %v277 = vmul.f32 %v274, %v276
    %v278 = vmul.f32 %v275, %v276
    %v279 = vadd.f32 %v255, %v277
    %v280 = vadd.f32 %v256, %v278
    %v281 = vstv %s138
    %v282 = vmul.f32 %v274, %v281
    %v283 = vmul.f32 %v275, %v281
    %v284 = vadd.f32 %v260, %v282
    %v285 = vadd.f32 %v261, %v283
    %v286 = vstv %s165
    %v287 = vmul.f32 %v274, %v286
    %v288 = vmul.f32 %v275, %v286
    %v289 = vadd.f32 %v265, %v287
    %v290 = vadd.f32 %v266, %v288
    %291 = vrot.lane.b32.xlu0 %v215, 1
    %v292 = vpop.permute.xlu0 %291
    %293 = vrot.lane.b32.xlu0 %v216, 1
    %v294 = vpop.permute.xlu0 %293
    %vm295 = vcmp.lt.s32.totalorder %v87, 1
    %v296 = vsel %vm295, %v292, %v294
    %v297 = vsel %vm295, %v294, %v292
    %v298 = vsel %vm95, %v297, 0.0
    %v299 = vsel %vm96, %v296, 0.0
    %v300 = vstv %s112
    %v301 = vmul.f32 %v298, %v300
    %v302 = vmul.f32 %v299, %v300
    %v303 = vadd.f32 %v279, %v301
    %v304 = vadd.f32 %v280, %v302
    %v305 = vstv %s139
    %v306 = vmul.f32 %v298, %v305
    %v307 = vmul.f32 %v299, %v305
    %v308 = vadd.f32 %v284, %v306
    %v309 = vadd.f32 %v285, %v307
    %v310 = vstv %s166
    %v311 = vmul.f32 %v298, %v310
    %v312 = vmul.f32 %v299, %v310
    %v313 = vadd.f32 %v289, %v311
    %v314 = vadd.f32 %v290, %v312
    %v315 = vstv %s113
    %v316 = vmul.f32 %v107, %v315
    %v317 = vmul.f32 %v108, %v315
    %v320 = vlaneseq
    %v321 = vshrl.u32 %v320, 7
    %v322 = vsub.s32 0, %v321
    %v323 = vrot.slane %v316, %v322
    %v324 = vlaneseq
    %v325 = vshrl.u32 %v324, 7
    %v326 = vsub.s32 4, %v325
    %v327 = vrot.slane %v316, %v326
    %v328 = vlaneseq
    %v329 = vshrl.u32 %v328, 7
    %v330 = vsub.s32 0, %v329
    %v331 = vrot.slane %v317, %v330
    %v332 = vlaneseq
    %v333 = vshrl.u32 %v332, 7
    %v334 = vsub.s32 4, %v333
    %v335 = vrot.slane %v317, %v334
    %v336 = vsel %vm214, %v331, %v323
    %v337 = vsel %vm214, %v335, %v327
    %v340 = vadd.f32 %v303, %v336
    %v341 = vadd.f32 %v304, %v337
    %v342 = vstv %s140
    %v343 = vmul.f32 %v107, %v342
    %v344 = vmul.f32 %v108, %v342
    %v347 = vlaneseq
    %v348 = vshrl.u32 %v347, 7
    %v349 = vsub.s32 0, %v348
    %v350 = vrot.slane %v343, %v349
    %v351 = vlaneseq
    %v352 = vshrl.u32 %v351, 7
    %v353 = vsub.s32 4, %v352
    %v354 = vrot.slane %v343, %v353
    %v355 = vlaneseq
    %v356 = vshrl.u32 %v355, 7
    %v357 = vsub.s32 0, %v356
    %v358 = vrot.slane %v344, %v357
    %v359 = vlaneseq
    %v360 = vshrl.u32 %v359, 7
    %v361 = vsub.s32 4, %v360
    %v362 = vrot.slane %v344, %v361
    %v363 = vsel %vm214, %v358, %v350
    %v364 = vsel %vm214, %v362, %v354
    %v367 = vadd.f32 %v308, %v363
    %v368 = vadd.f32 %v309, %v364
    %v369 = vstv %s167
    %v370 = vmul.f32 %v107, %v369
    %v371 = vmul.f32 %v108, %v369
    %v374 = vlaneseq
    %v375 = vshrl.u32 %v374, 7
    %v376 = vsub.s32 0, %v375
    %v377 = vrot.slane %v370, %v376
    %v378 = vlaneseq
    %v379 = vshrl.u32 %v378, 7
    %v380 = vsub.s32 4, %v379
    %v381 = vrot.slane %v370, %v380
    %v382 = vlaneseq
    %v383 = vshrl.u32 %v382, 7
    %v384 = vsub.s32 0, %v383
    %v385 = vrot.slane %v371, %v384
    %v386 = vlaneseq
    %v387 = vshrl.u32 %v386, 7
    %v388 = vsub.s32 4, %v387
    %v389 = vrot.slane %v371, %v388
    %v390 = vsel %vm214, %v385, %v377
    %v391 = vsel %vm214, %v389, %v381
    %v394 = vadd.f32 %v313, %v390
    %v395 = vadd.f32 %v314, %v391
    %396 = vrot.lane.b32.xlu0 %v215, 127
    %v397 = vpop.permute.xlu0 %396
    %398 = vrot.lane.b32.xlu0 %v216, 127
    %v399 = vpop.permute.xlu0 %398
    %vm400 = vcmp.lt.s32.totalorder %v87, 127
    %v401 = vsel %vm400, %v397, %v399
    %v402 = vsel %vm400, %v399, %v397
    %v403 = vsel %vm97, %v401, 0.0
    %v404 = vsel %vm98, %v402, 0.0
    %v405 = vstv %s114
    %v406 = vmul.f32 %v403, %v405
    %v407 = vmul.f32 %v404, %v405
    %v408 = vadd.f32 %v340, %v406
    %v409 = vadd.f32 %v341, %v407
    %v410 = vstv %s141
    %v411 = vmul.f32 %v403, %v410
    %v412 = vmul.f32 %v404, %v410
    %v413 = vadd.f32 %v367, %v411
    %v414 = vadd.f32 %v368, %v412
    %v415 = vstv %s168
    %v416 = vmul.f32 %v403, %v415
    %v417 = vmul.f32 %v404, %v415
    %v418 = vadd.f32 %v394, %v416
    %v419 = vadd.f32 %v395, %v417
    %420 = vrot.lane.b32.xlu0 %v215, 113
    %v421 = vpop.permute.xlu0 %420
    %422 = vrot.lane.b32.xlu0 %v216, 113
    %v423 = vpop.permute.xlu0 %422
    %vm424 = vcmp.lt.s32.totalorder %v87, 113
    %v425 = vsel %vm424, %v421, %v423
    %v426 = vsel %vm424, %v423, %v421
    %v427 = vsel %vm103, %v425, 0.0
    %v428 = vsel %vm104, %v426, 0.0
    %v429 = vstv %s115
    %v430 = vmul.f32 %v427, %v429
    %v431 = vmul.f32 %v428, %v429
    %v432 = vadd.f32 %v408, %v430
    %v433 = vadd.f32 %v409, %v431
    %v434 = vstv %s142
    %v435 = vmul.f32 %v427, %v434
    %v436 = vmul.f32 %v428, %v434
    %v437 = vadd.f32 %v413, %v435
    %v438 = vadd.f32 %v414, %v436
    %v439 = vstv %s169
    %v440 = vmul.f32 %v427, %v439
    %v441 = vmul.f32 %v428, %v439
    %v442 = vadd.f32 %v418, %v440
    %v443 = vadd.f32 %v419, %v441
    %444 = vrot.lane.b32.xlu0 %v215, 112
    %v445 = vpop.permute.xlu0 %444
    %446 = vrot.lane.b32.xlu0 %v216, 112
    %v447 = vpop.permute.xlu0 %446
    %vm448 = vcmp.lt.s32.totalorder %v87, 112
    %v449 = vsel %vm448, %v445, %v447
    %v450 = vsel %vm448, %v447, %v445
    %v451 = vsel %vm93, %v449, 0.0
    %v452 = vsel %vm94, %v450, 0.0
    %v453 = vstv %s116
    %v454 = vmul.f32 %v451, %v453
    %v455 = vmul.f32 %v452, %v453
    %v456 = vadd.f32 %v432, %v454
    %v457 = vadd.f32 %v433, %v455
    %v458 = vstv %s143
    %v459 = vmul.f32 %v451, %v458
    %v460 = vmul.f32 %v452, %v458
    %v461 = vadd.f32 %v437, %v459
    %v462 = vadd.f32 %v438, %v460
    %v463 = vstv %s170
    %v464 = vmul.f32 %v451, %v463
    %v465 = vmul.f32 %v452, %v463
    %v466 = vadd.f32 %v442, %v464
    %v467 = vadd.f32 %v443, %v465
    %468 = vrot.lane.b32.xlu0 %v215, 111
    %v469 = vpop.permute.xlu0 %468
    %470 = vrot.lane.b32.xlu0 %v216, 111
    %v471 = vpop.permute.xlu0 %470
    %vm472 = vcmp.lt.s32.totalorder %v87, 111
    %v473 = vsel %vm472, %v469, %v471
    %v474 = vsel %vm472, %v471, %v469
    %v475 = vsel %vm105, %v473, 0.0
    %v476 = vsel %vm106, %v474, 0.0
    %v477 = vstv %s117
    %v478 = vmul.f32 %v475, %v477
    %v479 = vmul.f32 %v476, %v477
    %v480 = vadd.f32 %v456, %v478
    %v481 = vadd.f32 %v457, %v479
    %v482 = vstv %s144
    %v483 = vmul.f32 %v475, %v482
    %v484 = vmul.f32 %v476, %v482
    %v485 = vadd.f32 %v461, %v483
    %v486 = vadd.f32 %v462, %v484
    %v487 = vstv %s171
    %v488 = vmul.f32 %v475, %v487
    %v489 = vmul.f32 %v476, %v487
    %v490 = vadd.f32 %v466, %v488
    %v491 = vadd.f32 %v467, %v489
    %v492 = vlaneseq
    %v493 = vshrl.u32 %v492, 7
    %v494 = vsub.s32 1, %v493
    %v495 = vrot.slane %v107, %v494
    %v496 = vlaneseq
    %v497 = vshrl.u32 %v496, 7
    %v498 = vsub.s32 5, %v497
    %v499 = vrot.slane %v107, %v498
    %v500 = vlaneseq
    %v501 = vshrl.u32 %v500, 7
    %v502 = vsub.s32 1, %v501
    %v503 = vrot.slane %v108, %v502
    %v504 = vlaneseq
    %v505 = vshrl.u32 %v504, 7
    %v506 = vsub.s32 5, %v505
    %v507 = vrot.slane %v108, %v506
    %v508 = vsel %vm214, %v503, %v495
    %v509 = vsel %vm214, %v507, %v499
    %512 = vrot.lane.b32.xlu0 %v508, 17
    %v513 = vpop.permute.xlu0 %512
    %514 = vrot.lane.b32.xlu0 %v509, 17
    %v515 = vpop.permute.xlu0 %514
    %v516 = vsel %vm223, %v513, %v515
    %v517 = vsel %vm223, %v515, %v513
    %v518 = vsel %vm99, %v517, 0.0
    %v519 = vsel %vm100, %v516, 0.0
    %v520 = vstv %s118
    %v521 = vmul.f32 %v518, %v520
    %v522 = vmul.f32 %v519, %v520
    %v523 = vadd.f32 %v480, %v521
    %v524 = vadd.f32 %v481, %v522
    %v525 = vstv %s145
    %v526 = vmul.f32 %v518, %v525
    %v527 = vmul.f32 %v519, %v525
    %v528 = vadd.f32 %v485, %v526
    %v529 = vadd.f32 %v486, %v527
    %v530 = vstv %s172
    %v531 = vmul.f32 %v518, %v530
    %v532 = vmul.f32 %v519, %v530
    %v533 = vadd.f32 %v490, %v531
    %v534 = vadd.f32 %v491, %v532
    %535 = vrot.lane.b32.xlu0 %v508, 16
    %v536 = vpop.permute.xlu0 %535
    %537 = vrot.lane.b32.xlu0 %v509, 16
    %v538 = vpop.permute.xlu0 %537
    %v539 = vsel %vm247, %v536, %v538
    %v540 = vsel %vm247, %v538, %v536
    %v541 = vsel %vm91, %v540, 0.0
    %v542 = vsel %vm92, %v539, 0.0
    %v543 = vstv %s119
    %v544 = vmul.f32 %v541, %v543
    %v545 = vmul.f32 %v542, %v543
    %v546 = vadd.f32 %v523, %v544
    %v547 = vadd.f32 %v524, %v545
    %v548 = vstv %s146
    %v549 = vmul.f32 %v541, %v548
    %v550 = vmul.f32 %v542, %v548
    %v551 = vadd.f32 %v528, %v549
    %v552 = vadd.f32 %v529, %v550
    %v553 = vstv %s173
    %v554 = vmul.f32 %v541, %v553
    %v555 = vmul.f32 %v542, %v553
    %v556 = vadd.f32 %v533, %v554
    %v557 = vadd.f32 %v534, %v555
    %558 = vrot.lane.b32.xlu0 %v508, 15
    %v559 = vpop.permute.xlu0 %558
    %560 = vrot.lane.b32.xlu0 %v509, 15
    %v561 = vpop.permute.xlu0 %560
    %v562 = vsel %vm271, %v559, %v561
    %v563 = vsel %vm271, %v561, %v559
    %v564 = vsel %vm101, %v563, 0.0
    %v565 = vsel %vm102, %v562, 0.0
    %v566 = vstv %s120
    %v567 = vmul.f32 %v564, %v566
    %v568 = vmul.f32 %v565, %v566
    %v569 = vadd.f32 %v546, %v567
    %v570 = vadd.f32 %v547, %v568
    %v571 = vstv %s147
    %v572 = vmul.f32 %v564, %v571
    %v573 = vmul.f32 %v565, %v571
    %v574 = vadd.f32 %v551, %v572
    %v575 = vadd.f32 %v552, %v573
    %v576 = vstv %s174
    %v577 = vmul.f32 %v564, %v576
    %v578 = vmul.f32 %v565, %v576
    %v579 = vadd.f32 %v556, %v577
    %v580 = vadd.f32 %v557, %v578
    %581 = vrot.lane.b32.xlu0 %v508, 1
    %v582 = vpop.permute.xlu0 %581
    %583 = vrot.lane.b32.xlu0 %v509, 1
    %v584 = vpop.permute.xlu0 %583
    %v585 = vsel %vm295, %v582, %v584
    %v586 = vsel %vm295, %v584, %v582
    %v587 = vsel %vm95, %v586, 0.0
    %v588 = vsel %vm96, %v585, 0.0
    %v589 = vstv %s121
    %v590 = vmul.f32 %v587, %v589
    %v591 = vmul.f32 %v588, %v589
    %v592 = vadd.f32 %v569, %v590
    %v593 = vadd.f32 %v570, %v591
    %v594 = vstv %s148
    %v595 = vmul.f32 %v587, %v594
    %v596 = vmul.f32 %v588, %v594
    %v597 = vadd.f32 %v574, %v595
    %v598 = vadd.f32 %v575, %v596
    %v599 = vstv %s175
    %v600 = vmul.f32 %v587, %v599
    %v601 = vmul.f32 %v588, %v599
    %v602 = vadd.f32 %v579, %v600
    %v603 = vadd.f32 %v580, %v601
    %v604 = vstv %s122
    %v605 = vmul.f32 %v107, %v604
    %v606 = vmul.f32 %v108, %v604
    %v609 = vlaneseq
    %v610 = vshrl.u32 %v609, 7
    %v611 = vsub.s32 1, %v610
    %v612 = vrot.slane %v605, %v611
    %v613 = vlaneseq
    %v614 = vshrl.u32 %v613, 7
    %v615 = vsub.s32 5, %v614
    %v616 = vrot.slane %v605, %v615
    %v617 = vlaneseq
    %v618 = vshrl.u32 %v617, 7
    %v619 = vsub.s32 1, %v618
    %v620 = vrot.slane %v606, %v619
    %v621 = vlaneseq
    %v622 = vshrl.u32 %v621, 7
    %v623 = vsub.s32 5, %v622
    %v624 = vrot.slane %v606, %v623
    %v625 = vsel %vm214, %v620, %v612
    %v626 = vsel %vm214, %v624, %v616
    %v629 = vadd.f32 %v592, %v625
    %v630 = vadd.f32 %v593, %v626
    %v631 = vstv %s149
    %v632 = vmul.f32 %v107, %v631
    %v633 = vmul.f32 %v108, %v631
    %v636 = vlaneseq
    %v637 = vshrl.u32 %v636, 7
    %v638 = vsub.s32 1, %v637
    %v639 = vrot.slane %v632, %v638
    %v640 = vlaneseq
    %v641 = vshrl.u32 %v640, 7
    %v642 = vsub.s32 5, %v641
    %v643 = vrot.slane %v632, %v642
    %v644 = vlaneseq
    %v645 = vshrl.u32 %v644, 7
    %v646 = vsub.s32 1, %v645
    %v647 = vrot.slane %v633, %v646
    %v648 = vlaneseq
    %v649 = vshrl.u32 %v648, 7
    %v650 = vsub.s32 5, %v649
    %v651 = vrot.slane %v633, %v650
    %v652 = vsel %vm214, %v647, %v639
    %v653 = vsel %vm214, %v651, %v643
    %v656 = vadd.f32 %v597, %v652
    %v657 = vadd.f32 %v598, %v653
    %v658 = vstv %s176
    %v659 = vmul.f32 %v107, %v658
    %v660 = vmul.f32 %v108, %v658
    %v663 = vlaneseq
    %v664 = vshrl.u32 %v663, 7
    %v665 = vsub.s32 1, %v664
    %v666 = vrot.slane %v659, %v665
    %v667 = vlaneseq
    %v668 = vshrl.u32 %v667, 7
    %v669 = vsub.s32 5, %v668
    %v670 = vrot.slane %v659, %v669
    %v671 = vlaneseq
    %v672 = vshrl.u32 %v671, 7
    %v673 = vsub.s32 1, %v672
    %v674 = vrot.slane %v660, %v673
    %v675 = vlaneseq
    %v676 = vshrl.u32 %v675, 7
    %v677 = vsub.s32 5, %v676
    %v678 = vrot.slane %v660, %v677
    %v679 = vsel %vm214, %v674, %v666
    %v680 = vsel %vm214, %v678, %v670
    %v683 = vadd.f32 %v602, %v679
    %v684 = vadd.f32 %v603, %v680
    %685 = vrot.lane.b32.xlu0 %v508, 127
    %v686 = vpop.permute.xlu0 %685
    %687 = vrot.lane.b32.xlu0 %v509, 127
    %v688 = vpop.permute.xlu0 %687
    %v689 = vsel %vm400, %v686, %v688
    %v690 = vsel %vm400, %v688, %v686
    %v691 = vsel %vm97, %v689, 0.0
    %v692 = vsel %vm98, %v690, 0.0
    %v693 = vstv %s123
    %v694 = vmul.f32 %v691, %v693
    %v695 = vmul.f32 %v692, %v693
    %v696 = vadd.f32 %v629, %v694
    %v697 = vadd.f32 %v630, %v695
    %v698 = vstv %s150
    %v699 = vmul.f32 %v691, %v698
    %v700 = vmul.f32 %v692, %v698
    %v701 = vadd.f32 %v656, %v699
    %v702 = vadd.f32 %v657, %v700
    %v703 = vstv %s177
    %v704 = vmul.f32 %v691, %v703
    %v705 = vmul.f32 %v692, %v703
    %v706 = vadd.f32 %v683, %v704
    %v707 = vadd.f32 %v684, %v705
    %708 = vrot.lane.b32.xlu0 %v508, 113
    %v709 = vpop.permute.xlu0 %708
    %710 = vrot.lane.b32.xlu0 %v509, 113
    %v711 = vpop.permute.xlu0 %710
    %v712 = vsel %vm424, %v709, %v711
    %v713 = vsel %vm424, %v711, %v709
    %v714 = vsel %vm103, %v712, 0.0
    %v715 = vsel %vm104, %v713, 0.0
    %v716 = vstv %s124
    %v717 = vmul.f32 %v714, %v716
    %v718 = vmul.f32 %v715, %v716
    %v719 = vadd.f32 %v696, %v717
    %v720 = vadd.f32 %v697, %v718
    %v721 = vstv %s151
    %v722 = vmul.f32 %v714, %v721
    %v723 = vmul.f32 %v715, %v721
    %v724 = vadd.f32 %v701, %v722
    %v725 = vadd.f32 %v702, %v723
    %v726 = vstv %s178
    %v727 = vmul.f32 %v714, %v726
    %v728 = vmul.f32 %v715, %v726
    %v729 = vadd.f32 %v706, %v727
    %v730 = vadd.f32 %v707, %v728
    %731 = vrot.lane.b32.xlu0 %v508, 112
    %v732 = vpop.permute.xlu0 %731
    %733 = vrot.lane.b32.xlu0 %v509, 112
    %v734 = vpop.permute.xlu0 %733
    %v735 = vsel %vm448, %v732, %v734
    %v736 = vsel %vm448, %v734, %v732
    %v737 = vsel %vm93, %v735, 0.0
    %v738 = vsel %vm94, %v736, 0.0
    %v739 = vstv %s125
    %v740 = vmul.f32 %v737, %v739
    %v741 = vmul.f32 %v738, %v739
    %v742 = vadd.f32 %v719, %v740
    %v743 = vadd.f32 %v720, %v741
    %v744 = vstv %s152
    %v745 = vmul.f32 %v737, %v744
    %v746 = vmul.f32 %v738, %v744
    %v747 = vadd.f32 %v724, %v745
    %v748 = vadd.f32 %v725, %v746
    %v749 = vstv %s179
    %v750 = vmul.f32 %v737, %v749
    %v751 = vmul.f32 %v738, %v749
    %v752 = vadd.f32 %v729, %v750
    %v753 = vadd.f32 %v730, %v751
    %754 = vrot.lane.b32.xlu0 %v508, 111
    %v755 = vpop.permute.xlu0 %754
    %756 = vrot.lane.b32.xlu0 %v509, 111
    %v757 = vpop.permute.xlu0 %756
    %v758 = vsel %vm472, %v755, %v757
    %v759 = vsel %vm472, %v757, %v755
    %v760 = vsel %vm105, %v758, 0.0
    %v761 = vsel %vm106, %v759, 0.0
    %v762 = vstv %s126
    %v763 = vmul.f32 %v760, %v762
    %v764 = vmul.f32 %v761, %v762
    %v765 = vadd.f32 %v742, %v763
    %v766 = vadd.f32 %v743, %v764
    %v767 = vstv %s153
    %v768 = vmul.f32 %v760, %v767
    %v769 = vmul.f32 %v761, %v767
    %v770 = vadd.f32 %v747, %v768
    %v771 = vadd.f32 %v748, %v769
    %v772 = vstv %s180
    %v773 = vmul.f32 %v760, %v772
    %v774 = vmul.f32 %v761, %v772
    %v775 = vadd.f32 %v752, %v773
    %v776 = vadd.f32 %v753, %v774
    %v777 = vlaneseq
    %v778 = vshrl.u32 %v777, 7
    %v779 = vsub.s32 2, %v778
    %v780 = vrot.slane %v107, %v779
    %v781 = vlaneseq
    %v782 = vshrl.u32 %v781, 7
    %v783 = vsub.s32 6, %v782
    %v784 = vrot.slane %v107, %v783
    %v785 = vlaneseq
    %v786 = vshrl.u32 %v785, 7
    %v787 = vsub.s32 2, %v786
    %v788 = vrot.slane %v108, %v787
    %v789 = vlaneseq
    %v790 = vshrl.u32 %v789, 7
    %v791 = vsub.s32 6, %v790
    %v792 = vrot.slane %v108, %v791
    %v793 = vsel %vm214, %v788, %v780
    %v794 = vsel %vm214, %v792, %v784
    %797 = vrot.lane.b32.xlu0 %v793, 17
    %v798 = vpop.permute.xlu0 %797
    %799 = vrot.lane.b32.xlu0 %v794, 17
    %v800 = vpop.permute.xlu0 %799
    %v801 = vsel %vm223, %v798, %v800
    %v802 = vsel %vm223, %v800, %v798
    %v803 = vsel %vm99, %v802, 0.0
    %v804 = vsel %vm100, %v801, 0.0
    %v805 = vstv %s127
    %v806 = vmul.f32 %v803, %v805
    %v807 = vmul.f32 %v804, %v805
    %v808 = vadd.f32 %v765, %v806
    %v809 = vadd.f32 %v766, %v807
    %v810 = vstv %s154
    %v811 = vmul.f32 %v803, %v810
    %v812 = vmul.f32 %v804, %v810
    %v813 = vadd.f32 %v770, %v811
    %v814 = vadd.f32 %v771, %v812
    %v815 = vstv %s181
    %v816 = vmul.f32 %v803, %v815
    %v817 = vmul.f32 %v804, %v815
    %v818 = vadd.f32 %v775, %v816
    %v819 = vadd.f32 %v776, %v817
    %820 = vrot.lane.b32.xlu0 %v793, 16
    %v821 = vpop.permute.xlu0 %820
    %822 = vrot.lane.b32.xlu0 %v794, 16
    %v823 = vpop.permute.xlu0 %822
    %v824 = vsel %vm247, %v821, %v823
    %v825 = vsel %vm247, %v823, %v821
    %v826 = vsel %vm91, %v825, 0.0
    %v827 = vsel %vm92, %v824, 0.0
    %v828 = vstv %s128
    %v829 = vmul.f32 %v826, %v828
    %v830 = vmul.f32 %v827, %v828
    %v831 = vadd.f32 %v808, %v829
    %v832 = vadd.f32 %v809, %v830
    %v833 = vstv %s155
    %v834 = vmul.f32 %v826, %v833
    %v835 = vmul.f32 %v827, %v833
    %v836 = vadd.f32 %v813, %v834
    %v837 = vadd.f32 %v814, %v835
    %v838 = vstv %s182
    %v839 = vmul.f32 %v826, %v838
    %v840 = vmul.f32 %v827, %v838
    %v841 = vadd.f32 %v818, %v839
    %v842 = vadd.f32 %v819, %v840
    %843 = vrot.lane.b32.xlu0 %v793, 15
    %v844 = vpop.permute.xlu0 %843
    %845 = vrot.lane.b32.xlu0 %v794, 15
    %v846 = vpop.permute.xlu0 %845
    %v847 = vsel %vm271, %v844, %v846
    %v848 = vsel %vm271, %v846, %v844
    %v849 = vsel %vm101, %v848, 0.0
    %v850 = vsel %vm102, %v847, 0.0
    %v851 = vstv %s129
    %v852 = vmul.f32 %v849, %v851
    %v853 = vmul.f32 %v850, %v851
    %v854 = vadd.f32 %v831, %v852
    %v855 = vadd.f32 %v832, %v853
    %v856 = vstv %s156
    %v857 = vmul.f32 %v849, %v856
    %v858 = vmul.f32 %v850, %v856
    %v859 = vadd.f32 %v836, %v857
    %v860 = vadd.f32 %v837, %v858
    %v861 = vstv %s183
    %v862 = vmul.f32 %v849, %v861
    %v863 = vmul.f32 %v850, %v861
    %v864 = vadd.f32 %v841, %v862
    %v865 = vadd.f32 %v842, %v863
    %866 = vrot.lane.b32.xlu0 %v793, 1
    %v867 = vpop.permute.xlu0 %866
    %868 = vrot.lane.b32.xlu0 %v794, 1
    %v869 = vpop.permute.xlu0 %868
    %v870 = vsel %vm295, %v867, %v869
    %v871 = vsel %vm295, %v869, %v867
    %v872 = vsel %vm95, %v871, 0.0
    %v873 = vsel %vm96, %v870, 0.0
    %v874 = vstv %s130
    %v875 = vmul.f32 %v872, %v874
    %v876 = vmul.f32 %v873, %v874
    %v877 = vadd.f32 %v854, %v875
    %v878 = vadd.f32 %v855, %v876
    %v879 = vstv %s157
    %v880 = vmul.f32 %v872, %v879
    %v881 = vmul.f32 %v873, %v879
    %v882 = vadd.f32 %v859, %v880
    %v883 = vadd.f32 %v860, %v881
    %v884 = vstv %s184
    %v885 = vmul.f32 %v872, %v884
    %v886 = vmul.f32 %v873, %v884
    %v887 = vadd.f32 %v864, %v885
    %v888 = vadd.f32 %v865, %v886
    %v889 = vstv %s131
    %v890 = vmul.f32 %v107, %v889
    %v891 = vmul.f32 %v108, %v889
    %v894 = vlaneseq
    %v895 = vshrl.u32 %v894, 7
    %v896 = vsub.s32 2, %v895
    %v897 = vrot.slane %v890, %v896
    %v898 = vlaneseq
    %v899 = vshrl.u32 %v898, 7
    %v900 = vsub.s32 6, %v899
    %v901 = vrot.slane %v890, %v900
    %v902 = vlaneseq
    %v903 = vshrl.u32 %v902, 7
    %v904 = vsub.s32 2, %v903
    %v905 = vrot.slane %v891, %v904
    %v906 = vlaneseq
    %v907 = vshrl.u32 %v906, 7
    %v908 = vsub.s32 6, %v907
    %v909 = vrot.slane %v891, %v908
    %v910 = vsel %vm214, %v905, %v897
    %v911 = vsel %vm214, %v909, %v901
    %v914 = vadd.f32 %v877, %v910
    %v915 = vadd.f32 %v878, %v911
    %v916 = vstv %s158
    %v917 = vmul.f32 %v107, %v916
    %v918 = vmul.f32 %v108, %v916
    %v921 = vlaneseq
    %v922 = vshrl.u32 %v921, 7
    %v923 = vsub.s32 2, %v922
    %v924 = vrot.slane %v917, %v923
    %v925 = vlaneseq
    %v926 = vshrl.u32 %v925, 7
    %v927 = vsub.s32 6, %v926
    %v928 = vrot.slane %v917, %v927
    %v929 = vlaneseq
    %v930 = vshrl.u32 %v929, 7
    %v931 = vsub.s32 2, %v930
    %v932 = vrot.slane %v918, %v931
    %v933 = vlaneseq
    %v934 = vshrl.u32 %v933, 7
    %v935 = vsub.s32 6, %v934
    %v936 = vrot.slane %v918, %v935
    %v937 = vsel %vm214, %v932, %v924
    %v938 = vsel %vm214, %v936, %v928
    %v941 = vadd.f32 %v882, %v937
    %v942 = vadd.f32 %v883, %v938
    %v943 = vstv %s185
    %v944 = vmul.f32 %v107, %v943
    %v945 = vmul.f32 %v108, %v943
    %v948 = vlaneseq
    %v949 = vshrl.u32 %v948, 7
    %v950 = vsub.s32 2, %v949
    %v951 = vrot.slane %v944, %v950
    %v952 = vlaneseq
    %v953 = vshrl.u32 %v952, 7
    %v954 = vsub.s32 6, %v953
    %v955 = vrot.slane %v944, %v954
    %v956 = vlaneseq
    %v957 = vshrl.u32 %v956, 7
    %v958 = vsub.s32 2, %v957
    %v959 = vrot.slane %v945, %v958
    %v960 = vlaneseq
    %v961 = vshrl.u32 %v960, 7
    %v962 = vsub.s32 6, %v961
    %v963 = vrot.slane %v945, %v962
    %v964 = vsel %vm214, %v959, %v951
    %v965 = vsel %vm214, %v963, %v955
    %v968 = vadd.f32 %v887, %v964
    %v969 = vadd.f32 %v888, %v965
    %970 = vrot.lane.b32.xlu0 %v793, 127
    %v971 = vpop.permute.xlu0 %970
    %972 = vrot.lane.b32.xlu0 %v794, 127
    %v973 = vpop.permute.xlu0 %972
    %v974 = vsel %vm400, %v971, %v973
    %v975 = vsel %vm400, %v973, %v971
    %v976 = vsel %vm97, %v974, 0.0
    %v977 = vsel %vm98, %v975, 0.0
    %v978 = vstv %s132
    %v979 = vmul.f32 %v976, %v978
    %v980 = vmul.f32 %v977, %v978
    %v981 = vadd.f32 %v914, %v979
    %v982 = vadd.f32 %v915, %v980
    %v983 = vstv %s159
    %v984 = vmul.f32 %v976, %v983
    %v985 = vmul.f32 %v977, %v983
    %v986 = vadd.f32 %v941, %v984
    %v987 = vadd.f32 %v942, %v985
    %v988 = vstv %s186
    %v989 = vmul.f32 %v976, %v988
    %v990 = vmul.f32 %v977, %v988
    %v991 = vadd.f32 %v968, %v989
    %v992 = vadd.f32 %v969, %v990
    %993 = vrot.lane.b32.xlu0 %v793, 113
    %v994 = vpop.permute.xlu0 %993
    %995 = vrot.lane.b32.xlu0 %v794, 113
    %v996 = vpop.permute.xlu0 %995
    %v997 = vsel %vm424, %v994, %v996
    %v998 = vsel %vm424, %v996, %v994
    %v999 = vsel %vm103, %v997, 0.0
    %v1000 = vsel %vm104, %v998, 0.0
    %v1001 = vstv %s133
    %v1002 = vmul.f32 %v999, %v1001
    %v1003 = vmul.f32 %v1000, %v1001
    %v1004 = vadd.f32 %v981, %v1002
    %v1005 = vadd.f32 %v982, %v1003
    %v1006 = vstv %s160
    %v1007 = vmul.f32 %v999, %v1006
    %v1008 = vmul.f32 %v1000, %v1006
    %v1009 = vadd.f32 %v986, %v1007
    %v1010 = vadd.f32 %v987, %v1008
    %v1011 = vstv %s187
    %v1012 = vmul.f32 %v999, %v1011
    %v1013 = vmul.f32 %v1000, %v1011
    %v1014 = vadd.f32 %v991, %v1012
    %v1015 = vadd.f32 %v992, %v1013
    %1016 = vrot.lane.b32.xlu0 %v793, 112
    %v1017 = vpop.permute.xlu0 %1016
    %1018 = vrot.lane.b32.xlu0 %v794, 112
    %v1019 = vpop.permute.xlu0 %1018
    %v1020 = vsel %vm448, %v1017, %v1019
    %v1021 = vsel %vm448, %v1019, %v1017
    %v1022 = vsel %vm93, %v1020, 0.0
    %v1023 = vsel %vm94, %v1021, 0.0
    %v1024 = vstv %s134
    %v1025 = vmul.f32 %v1022, %v1024
    %v1026 = vmul.f32 %v1023, %v1024
    %v1027 = vadd.f32 %v1004, %v1025
    %v1028 = vadd.f32 %v1005, %v1026
    %v1029 = vstv %s161
    %v1030 = vmul.f32 %v1022, %v1029
    %v1031 = vmul.f32 %v1023, %v1029
    %v1032 = vadd.f32 %v1009, %v1030
    %v1033 = vadd.f32 %v1010, %v1031
    %v1034 = vstv %s188
    %v1035 = vmul.f32 %v1022, %v1034
    %v1036 = vmul.f32 %v1023, %v1034
    %v1037 = vadd.f32 %v1014, %v1035
    %v1038 = vadd.f32 %v1015, %v1036
    %1039 = vrot.lane.b32.xlu0 %v793, 111
    %v1040 = vpop.permute.xlu0 %1039
    %1041 = vrot.lane.b32.xlu0 %v794, 111
    %v1042 = vpop.permute.xlu0 %1041
    %v1043 = vsel %vm472, %v1040, %v1042
    %v1044 = vsel %vm472, %v1042, %v1040
    %v1045 = vsel %vm105, %v1043, 0.0
    %v1046 = vsel %vm106, %v1044, 0.0
    %v1047 = vstv %s135
    %v1048 = vmul.f32 %v1045, %v1047
    %v1049 = vmul.f32 %v1046, %v1047
    %v1050 = vadd.f32 %v1027, %v1048
    %v1051 = vadd.f32 %v1028, %v1049
    %v1052 = vstv %s162
    %v1053 = vmul.f32 %v1045, %v1052
    %v1054 = vmul.f32 %v1046, %v1052
    %v1055 = vadd.f32 %v1032, %v1053
    %v1056 = vadd.f32 %v1033, %v1054
    %v1057 = vstv %s189
    %v1058 = vmul.f32 %v1045, %v1057
    %v1059 = vmul.f32 %v1046, %v1057
    %v1060 = vadd.f32 %v1037, %v1058
    %v1061 = vadd.f32 %v1038, %v1059
    %v1062 = vmax.f32 %v1050, 0.0
    %v1063 = vmax.f32 %v1051, 0.0
    %v1064 = vmax.f32 %v1055, 0.0
    %v1065 = vmax.f32 %v1056, 0.0
    %v1066 = vmax.f32 %v1060, 0.0
    %v1067 = vmax.f32 %v1061, 0.0
    %s1068 = sld [smem:[#allocation7]]
    %s1069 = sld [smem:[#allocation7 + $0x1]]
    %s1070 = sld [smem:[#allocation7 + $0x2]]
    %s1071 = sld [smem:[#allocation7 + $0x3]]
    %s1072 = sld [smem:[#allocation7 + $0x4]]
    %s1073 = sld [smem:[#allocation7 + $0x5]]
    %s1074 = sld [smem:[#allocation7 + $0x6]]
    %s1075 = sld [smem:[#allocation7 + $0x7]]
    %s1076 = sld [smem:[#allocation7 + $0x8]]
    %s1077 = sld [smem:[#allocation7 + $0x9]]
    %s1078 = sld [smem:[#allocation7 + $0xa]]
    %s1079 = sld [smem:[#allocation7 + $0xb]]
    %s1080 = sld [smem:[#allocation7 + $0xc]]
    %s1081 = sld [smem:[#allocation7 + $0xd]]
    %s1082 = sld [smem:[#allocation7 + $0xe]]
    %s1083 = sld [smem:[#allocation7 + $0xf]]
    %s1084 = sld [smem:[#allocation7 + $0x10]]
    %s1085 = sld [smem:[#allocation7 + $0x11]]
    %s1086 = sld [smem:[#allocation7 + $0x12]]
    %s1087 = sld [smem:[#allocation7 + $0x13]]
    %s1088 = sld [smem:[#allocation7 + $0x14]]
    %s1089 = sld [smem:[#allocation7 + $0x15]]
    %s1090 = sld [smem:[#allocation7 + $0x16]]
    %s1091 = sld [smem:[#allocation7 + $0x17]]
    %s1092 = sld [smem:[#allocation7 + $0x18]]
    %s1093 = sld [smem:[#allocation7 + $0x19]]
    %s1094 = sld [smem:[#allocation7 + $0x1a]]
    %s1095 = sld [smem:[#allocation7 + $0x1b]]
    %s1096 = sld [smem:[#allocation7 + $0x1c]]
    %s1097 = sld [smem:[#allocation7 + $0x1d]]
    %s1098 = sld [smem:[#allocation7 + $0x1e]]
    %s1099 = sld [smem:[#allocation7 + $0x1f]]
    %s1100 = sld [smem:[#allocation7 + $0x20]]
    %s1101 = sld [smem:[#allocation7 + $0x21]]
    %s1102 = sld [smem:[#allocation7 + $0x22]]
    %s1103 = sld [smem:[#allocation7 + $0x23]]
    %s1104 = sld [smem:[#allocation7 + $0x24]]
    %s1105 = sld [smem:[#allocation7 + $0x25]]
    %s1106 = sld [smem:[#allocation7 + $0x26]]
    %s1107 = sld [smem:[#allocation7 + $0x27]]
    %s1108 = sld [smem:[#allocation7 + $0x28]]
    %s1109 = sld [smem:[#allocation7 + $0x29]]
    %s1110 = sld [smem:[#allocation7 + $0x2a]]
    %s1111 = sld [smem:[#allocation7 + $0x2b]]
    %s1112 = sld [smem:[#allocation7 + $0x2c]]
    %s1113 = sld [smem:[#allocation7 + $0x2d]]
    %s1114 = sld [smem:[#allocation7 + $0x2e]]
    %s1115 = sld [smem:[#allocation7 + $0x2f]]
    %s1116 = sld [smem:[#allocation7 + $0x30]]
    %s1117 = sld [smem:[#allocation7 + $0x31]]
    %s1118 = sld [smem:[#allocation7 + $0x32]]
    %s1119 = sld [smem:[#allocation7 + $0x33]]
    %s1120 = sld [smem:[#allocation7 + $0x34]]
    %s1121 = sld [smem:[#allocation7 + $0x35]]
    %s1122 = sld [smem:[#allocation7 + $0x36]]
    %s1123 = sld [smem:[#allocation7 + $0x37]]
    %s1124 = sld [smem:[#allocation7 + $0x38]]
    %s1125 = sld [smem:[#allocation7 + $0x39]]
    %s1126 = sld [smem:[#allocation7 + $0x3a]]
    %s1127 = sld [smem:[#allocation7 + $0x3b]]
    %s1128 = sld [smem:[#allocation7 + $0x3c]]
    %s1129 = sld [smem:[#allocation7 + $0x3d]]
    %s1130 = sld [smem:[#allocation7 + $0x3e]]
    %s1131 = sld [smem:[#allocation7 + $0x3f]]
    %s1132 = sld [smem:[#allocation7 + $0x40]]
    %s1133 = sld [smem:[#allocation7 + $0x41]]
    %s1134 = sld [smem:[#allocation7 + $0x42]]
    %s1135 = sld [smem:[#allocation7 + $0x43]]
    %s1136 = sld [smem:[#allocation7 + $0x44]]
    %s1137 = sld [smem:[#allocation7 + $0x45]]
    %s1138 = sld [smem:[#allocation7 + $0x46]]
    %s1139 = sld [smem:[#allocation7 + $0x47]]
    %s1140 = sld [smem:[#allocation7 + $0x48]]
    %s1141 = sld [smem:[#allocation7 + $0x49]]
    %s1142 = sld [smem:[#allocation7 + $0x4a]]
    %s1143 = sld [smem:[#allocation7 + $0x4b]]
    %s1144 = sld [smem:[#allocation7 + $0x4c]]
    %s1145 = sld [smem:[#allocation7 + $0x4d]]
    %s1146 = sld [smem:[#allocation7 + $0x4e]]
    %s1147 = sld [smem:[#allocation7 + $0x4f]]
    %s1148 = sld [smem:[#allocation7 + $0x50]]
    %s1149 = sld [smem:[#allocation8]]
    %v1150 = vstv %s1149
    %s1151 = sld [smem:[#allocation8 + $0x1]]
    %v1152 = vstv %s1151
    %s1153 = sld [smem:[#allocation8 + $0x2]]
    %v1154 = vstv %s1153
    %1155 = vrot.lane.b32.xlu0 %v1062, 17
    %v1156 = vpop.permute.xlu0 %1155
    %1157 = vrot.lane.b32.xlu0 %v1063, 17
    %v1158 = vpop.permute.xlu0 %1157
    %v1159 = vsel %vm223, %v1156, %v1158
    %v1160 = vsel %vm223, %v1158, %v1156
    %v1161 = vsel %vm99, %v1160, 0.0
    %v1162 = vsel %vm100, %v1159, 0.0
    %v1163 = vstv %s1068
    %v1164 = vmul.f32 %v1161, %v1163
    %v1165 = vmul.f32 %v1162, %v1163
    %v1166 = vadd.f32 %v1150, %v1164
    %v1167 = vadd.f32 %v1150, %v1165
    %v1168 = vstv %s1095
    %v1169 = vmul.f32 %v1161, %v1168
    %v1170 = vmul.f32 %v1162, %v1168
    %v1171 = vadd.f32 %v1152, %v1169
    %v1172 = vadd.f32 %v1152, %v1170
    %v1173 = vstv %s1122
    %v1174 = vmul.f32 %v1161, %v1173
    %v1175 = vmul.f32 %v1162, %v1173
    %v1176 = vadd.f32 %v1154, %v1174
    %v1177 = vadd.f32 %v1154, %v1175
    %1178 = vrot.lane.b32.xlu0 %v1062, 16
    %v1179 = vpop.permute.xlu0 %1178
    %1180 = vrot.lane.b32.xlu0 %v1063, 16
    %v1181 = vpop.permute.xlu0 %1180
    %v1182 = vsel %vm247, %v1179, %v1181
    %v1183 = vsel %vm247, %v1181, %v1179
    %v1184 = vsel %vm91, %v1183, 0.0
    %v1185 = vsel %vm92, %v1182, 0.0
    %v1186 = vstv %s1069
    %v1187 = vmul.f32 %v1184, %v1186
    %v1188 = vmul.f32 %v1185, %v1186
    %v1189 = vadd.f32 %v1166, %v1187
    %v1190 = vadd.f32 %v1167, %v1188
    %v1191 = vstv %s1096
    %v1192 = vmul.f32 %v1184, %v1191
    %v1193 = vmul.f32 %v1185, %v1191
    %v1194 = vadd.f32 %v1171, %v1192
    %v1195 = vadd.f32 %v1172, %v1193
    %v1196 = vstv %s1123
    %v1197 = vmul.f32 %v1184, %v1196
    %v1198 = vmul.f32 %v1185, %v1196
    %v1199 = vadd.f32 %v1176, %v1197
    %v1200 = vadd.f32 %v1177, %v1198
    %1201 = vrot.lane.b32.xlu0 %v1062, 15
    %v1202 = vpop.permute.xlu0 %1201
    %1203 = vrot.lane.b32.xlu0 %v1063, 15
    %v1204 = vpop.permute.xlu0 %1203
    %v1205 = vsel %vm271, %v1202, %v1204
    %v1206 = vsel %vm271, %v1204, %v1202
    %v1207 = vsel %vm101, %v1206, 0.0
    %v1208 = vsel %vm102, %v1205, 0.0
    %v1209 = vstv %s1070
    %v1210 = vmul.f32 %v1207, %v1209
    %v1211 = vmul.f32 %v1208, %v1209
    %v1212 = vadd.f32 %v1189, %v1210
    %v1213 = vadd.f32 %v1190, %v1211
    %v1214 = vstv %s1097
    %v1215 = vmul.f32 %v1207, %v1214
    %v1216 = vmul.f32 %v1208, %v1214
    %v1217 = vadd.f32 %v1194, %v1215
    %v1218 = vadd.f32 %v1195, %v1216
    %v1219 = vstv %s1124
    %v1220 = vmul.f32 %v1207, %v1219
    %v1221 = vmul.f32 %v1208, %v1219
    %v1222 = vadd.f32 %v1199, %v1220
    %v1223 = vadd.f32 %v1200, %v1221
    %1224 = vrot.lane.b32.xlu0 %v1062, 1
    %v1225 = vpop.permute.xlu0 %1224
    %1226 = vrot.lane.b32.xlu0 %v1063, 1
    %v1227 = vpop.permute.xlu0 %1226
    %v1228 = vsel %vm295, %v1225, %v1227
    %v1229 = vsel %vm295, %v1227, %v1225
    %v1230 = vsel %vm95, %v1229, 0.0
    %v1231 = vsel %vm96, %v1228, 0.0
    %v1232 = vstv %s1071
    %v1233 = vmul.f32 %v1230, %v1232
    %v1234 = vmul.f32 %v1231, %v1232
    %v1235 = vadd.f32 %v1212, %v1233
    %v1236 = vadd.f32 %v1213, %v1234
    %v1237 = vstv %s1098
    %v1238 = vmul.f32 %v1230, %v1237
    %v1239 = vmul.f32 %v1231, %v1237
    %v1240 = vadd.f32 %v1217, %v1238
    %v1241 = vadd.f32 %v1218, %v1239
    %v1242 = vstv %s1125
    %v1243 = vmul.f32 %v1230, %v1242
    %v1244 = vmul.f32 %v1231, %v1242
    %v1245 = vadd.f32 %v1222, %v1243
    %v1246 = vadd.f32 %v1223, %v1244
    %v1247 = vstv %s1072
    %v1248 = vmul.f32 %v1062, %v1247
    %v1249 = vmul.f32 %v1063, %v1247
    %v1250 = vadd.f32 %v1235, %v1248
    %v1251 = vadd.f32 %v1236, %v1249
    %v1252 = vstv %s1099
    %v1253 = vmul.f32 %v1062, %v1252
    %v1254 = vmul.f32 %v1063, %v1252
    %v1255 = vadd.f32 %v1240, %v1253
    %v1256 = vadd.f32 %v1241, %v1254
    %v1257 = vstv %s1126
    %v1258 = vmul.f32 %v1062, %v1257
    %v1259 = vmul.f32 %v1063, %v1257
    %v1260 = vadd.f32 %v1245, %v1258
    %v1261 = vadd.f32 %v1246, %v1259
    %1262 = vrot.lane.b32.xlu0 %v1062, 127
    %v1263 = vpop.permute.xlu0 %1262
    %1264 = vrot.lane.b32.xlu0 %v1063, 127
    %v1265 = vpop.permute.xlu0 %1264
    %v1266 = vsel %vm400, %v1263, %v1265
    %v1267 = vsel %vm400, %v1265, %v1263
    %v1268 = vsel %vm97, %v1266, 0.0
    %v1269 = vsel %vm98, %v1267, 0.0
    %v1270 = vstv %s1073
    %v1271 = vmul.f32 %v1268, %v1270
    %v1272 = vmul.f32 %v1269, %v1270
    %v1273 = vadd.f32 %v1250, %v1271
    %v1274 = vadd.f32 %v1251, %v1272
    %v1275 = vstv %s1100
    %v1276 = vmul.f32 %v1268, %v1275
    %v1277 = vmul.f32 %v1269, %v1275
    %v1278 = vadd.f32 %v1255, %v1276
    %v1279 = vadd.f32 %v1256, %v1277
    %v1280 = vstv %s1127
    %v1281 = vmul.f32 %v1268, %v1280
    %v1282 = vmul.f32 %v1269, %v1280
    %v1283 = vadd.f32 %v1260, %v1281
    %v1284 = vadd.f32 %v1261, %v1282
    %1285 = vrot.lane.b32.xlu0 %v1062, 113
    %v1286 = vpop.permute.xlu0 %1285
    %1287 = vrot.lane.b32.xlu0 %v1063, 113
    %v1288 = vpop.permute.xlu0 %1287
    %v1289 = vsel %vm424, %v1286, %v1288
    %v1290 = vsel %vm424, %v1288, %v1286
    %v1291 = vsel %vm103, %v1289, 0.0
    %v1292 = vsel %vm104, %v1290, 0.0
    %v1293 = vstv %s1074
    %v1294 = vmul.f32 %v1291, %v1293
    %v1295 = vmul.f32 %v1292, %v1293
    %v1296 = vadd.f32 %v1273, %v1294
    %v1297 = vadd.f32 %v1274, %v1295
    %v1298 = vstv %s1101
    %v1299 = vmul.f32 %v1291, %v1298
    %v1300 = vmul.f32 %v1292, %v1298
    %v1301 = vadd.f32 %v1278, %v1299
    %v1302 = vadd.f32 %v1279, %v1300
    %v1303 = vstv %s1128
    %v1304 = vmul.f32 %v1291, %v1303
    %v1305 = vmul.f32 %v1292, %v1303
    %v1306 = vadd.f32 %v1283, %v1304
    %v1307 = vadd.f32 %v1284, %v1305
    %1308 = vrot.lane.b32.xlu0 %v1062, 112
    %v1309 = vpop.permute.xlu0 %1308
    %1310 = vrot.lane.b32.xlu0 %v1063, 112
    %v1311 = vpop.permute.xlu0 %1310
    %v1312 = vsel %vm448, %v1309, %v1311
    %v1313 = vsel %vm448, %v1311, %v1309
    %v1314 = vsel %vm93, %v1312, 0.0
    %v1315 = vsel %vm94, %v1313, 0.0
    %v1316 = vstv %s1075
    %v1317 = vmul.f32 %v1314, %v1316
    %v1318 = vmul.f32 %v1315, %v1316
    %v1319 = vadd.f32 %v1296, %v1317
    %v1320 = vadd.f32 %v1297, %v1318
    %v1321 = vstv %s1102
    %v1322 = vmul.f32 %v1314, %v1321
    %v1323 = vmul.f32 %v1315, %v1321
    %v1324 = vadd.f32 %v1301, %v1322
    %v1325 = vadd.f32 %v1302, %v1323
    %v1326 = vstv %s1129
    %v1327 = vmul.f32 %v1314, %v1326
    %v1328 = vmul.f32 %v1315, %v1326
    %v1329 = vadd.f32 %v1306, %v1327
    %v1330 = vadd.f32 %v1307, %v1328
    %1331 = vrot.lane.b32.xlu0 %v1062, 111
    %v1332 = vpop.permute.xlu0 %1331
    %1333 = vrot.lane.b32.xlu0 %v1063, 111
    %v1334 = vpop.permute.xlu0 %1333
    %v1335 = vsel %vm472, %v1332, %v1334
    %v1336 = vsel %vm472, %v1334, %v1332
    %v1337 = vsel %vm105, %v1335, 0.0
    %v1338 = vsel %vm106, %v1336, 0.0
    %v1339 = vstv %s1076
    %v1340 = vmul.f32 %v1337, %v1339
    %v1341 = vmul.f32 %v1338, %v1339
    %v1342 = vadd.f32 %v1319, %v1340
    %v1343 = vadd.f32 %v1320, %v1341
    %v1344 = vstv %s1103
    %v1345 = vmul.f32 %v1337, %v1344
    %v1346 = vmul.f32 %v1338, %v1344
    %v1347 = vadd.f32 %v1324, %v1345
    %v1348 = vadd.f32 %v1325, %v1346
    %v1349 = vstv %s1130
    %v1350 = vmul.f32 %v1337, %v1349
    %v1351 = vmul.f32 %v1338, %v1349
    %v1352 = vadd.f32 %v1329, %v1350
    %v1353 = vadd.f32 %v1330, %v1351
    %1354 = vrot.lane.b32.xlu0 %v1064, 17
    %v1355 = vpop.permute.xlu0 %1354
    %1356 = vrot.lane.b32.xlu0 %v1065, 17
    %v1357 = vpop.permute.xlu0 %1356
    %v1358 = vsel %vm223, %v1355, %v1357
    %v1359 = vsel %vm223, %v1357, %v1355
    %v1360 = vsel %vm99, %v1359, 0.0
    %v1361 = vsel %vm100, %v1358, 0.0
    %v1362 = vstv %s1077
    %v1363 = vmul.f32 %v1360, %v1362
    %v1364 = vmul.f32 %v1361, %v1362
    %v1365 = vadd.f32 %v1342, %v1363
    %v1366 = vadd.f32 %v1343, %v1364
    %v1367 = vstv %s1104
    %v1368 = vmul.f32 %v1360, %v1367
    %v1369 = vmul.f32 %v1361, %v1367
    %v1370 = vadd.f32 %v1347, %v1368
    %v1371 = vadd.f32 %v1348, %v1369
    %v1372 = vstv %s1131
    %v1373 = vmul.f32 %v1360, %v1372
    %v1374 = vmul.f32 %v1361, %v1372
    %v1375 = vadd.f32 %v1352, %v1373
    %v1376 = vadd.f32 %v1353, %v1374
    %1377 = vrot.lane.b32.xlu0 %v1064, 16
    %v1378 = vpop.permute.xlu0 %1377
    %1379 = vrot.lane.b32.xlu0 %v1065, 16
    %v1380 = vpop.permute.xlu0 %1379
    %v1381 = vsel %vm247, %v1378, %v1380
    %v1382 = vsel %vm247, %v1380, %v1378
    %v1383 = vsel %vm91, %v1382, 0.0
    %v1384 = vsel %vm92, %v1381, 0.0
    %v1385 = vstv %s1078
    %v1386 = vmul.f32 %v1383, %v1385
    %v1387 = vmul.f32 %v1384, %v1385
    %v1388 = vadd.f32 %v1365, %v1386
    %v1389 = vadd.f32 %v1366, %v1387
    %v1390 = vstv %s1105
    %v1391 = vmul.f32 %v1383, %v1390
    %v1392 = vmul.f32 %v1384, %v1390
    %v1393 = vadd.f32 %v1370, %v1391
    %v1394 = vadd.f32 %v1371, %v1392
    %v1395 = vstv %s1132
    %v1396 = vmul.f32 %v1383, %v1395
    %v1397 = vmul.f32 %v1384, %v1395
    %v1398 = vadd.f32 %v1375, %v1396
    %v1399 = vadd.f32 %v1376, %v1397
    %1400 = vrot.lane.b32.xlu0 %v1064, 15
    %v1401 = vpop.permute.xlu0 %1400
    %1402 = vrot.lane.b32.xlu0 %v1065, 15
    %v1403 = vpop.permute.xlu0 %1402
    %v1404 = vsel %vm271, %v1401, %v1403
    %v1405 = vsel %vm271, %v1403, %v1401
    %v1406 = vsel %vm101, %v1405, 0.0
    %v1407 = vsel %vm102, %v1404, 0.0
    %v1408 = vstv %s1079
    %v1409 = vmul.f32 %v1406, %v1408
    %v1410 = vmul.f32 %v1407, %v1408
    %v1411 = vadd.f32 %v1388, %v1409
    %v1412 = vadd.f32 %v1389, %v1410
    %v1413 = vstv %s1106
    %v1414 = vmul.f32 %v1406, %v1413
    %v1415 = vmul.f32 %v1407, %v1413
    %v1416 = vadd.f32 %v1393, %v1414
    %v1417 = vadd.f32 %v1394, %v1415
    %v1418 = vstv %s1133
    %v1419 = vmul.f32 %v1406, %v1418
    %v1420 = vmul.f32 %v1407, %v1418
    %v1421 = vadd.f32 %v1398, %v1419
    %v1422 = vadd.f32 %v1399, %v1420
    %1423 = vrot.lane.b32.xlu0 %v1064, 1
    %v1424 = vpop.permute.xlu0 %1423
    %1425 = vrot.lane.b32.xlu0 %v1065, 1
    %v1426 = vpop.permute.xlu0 %1425
    %v1427 = vsel %vm295, %v1424, %v1426
    %v1428 = vsel %vm295, %v1426, %v1424
    %v1429 = vsel %vm95, %v1428, 0.0
    %v1430 = vsel %vm96, %v1427, 0.0
    %v1431 = vstv %s1080
    %v1432 = vmul.f32 %v1429, %v1431
    %v1433 = vmul.f32 %v1430, %v1431
    %v1434 = vadd.f32 %v1411, %v1432
    %v1435 = vadd.f32 %v1412, %v1433
    %v1436 = vstv %s1107
    %v1437 = vmul.f32 %v1429, %v1436
    %v1438 = vmul.f32 %v1430, %v1436
    %v1439 = vadd.f32 %v1416, %v1437
    %v1440 = vadd.f32 %v1417, %v1438
    %v1441 = vstv %s1134
    %v1442 = vmul.f32 %v1429, %v1441
    %v1443 = vmul.f32 %v1430, %v1441
    %v1444 = vadd.f32 %v1421, %v1442
    %v1445 = vadd.f32 %v1422, %v1443
    %v1446 = vstv %s1081
    %v1447 = vmul.f32 %v1064, %v1446
    %v1448 = vmul.f32 %v1065, %v1446
    %v1449 = vadd.f32 %v1434, %v1447
    %v1450 = vadd.f32 %v1435, %v1448
    %v1451 = vstv %s1108
    %v1452 = vmul.f32 %v1064, %v1451
    %v1453 = vmul.f32 %v1065, %v1451
    %v1454 = vadd.f32 %v1439, %v1452
    %v1455 = vadd.f32 %v1440, %v1453
    %v1456 = vstv %s1135
    %v1457 = vmul.f32 %v1064, %v1456
    %v1458 = vmul.f32 %v1065, %v1456
    %v1459 = vadd.f32 %v1444, %v1457
    %v1460 = vadd.f32 %v1445, %v1458
    %1461 = vrot.lane.b32.xlu0 %v1064, 127
    %v1462 = vpop.permute.xlu0 %1461
    %1463 = vrot.lane.b32.xlu0 %v1065, 127
    %v1464 = vpop.permute.xlu0 %1463
    %v1465 = vsel %vm400, %v1462, %v1464
    %v1466 = vsel %vm400, %v1464, %v1462
    %v1467 = vsel %vm97, %v1465, 0.0
    %v1468 = vsel %vm98, %v1466, 0.0
    %v1469 = vstv %s1082
    %v1470 = vmul.f32 %v1467, %v1469
    %v1471 = vmul.f32 %v1468, %v1469
    %v1472 = vadd.f32 %v1449, %v1470
    %v1473 = vadd.f32 %v1450, %v1471
    %v1474 = vstv %s1109
    %v1475 = vmul.f32 %v1467, %v1474
    %v1476 = vmul.f32 %v1468, %v1474
    %v1477 = vadd.f32 %v1454, %v1475
    %v1478 = vadd.f32 %v1455, %v1476
    %v1479 = vstv %s1136
    %v1480 = vmul.f32 %v1467, %v1479
    %v1481 = vmul.f32 %v1468, %v1479
    %v1482 = vadd.f32 %v1459, %v1480
    %v1483 = vadd.f32 %v1460, %v1481
    %1484 = vrot.lane.b32.xlu0 %v1064, 113
    %v1485 = vpop.permute.xlu0 %1484
    %1486 = vrot.lane.b32.xlu0 %v1065, 113
    %v1487 = vpop.permute.xlu0 %1486
    %v1488 = vsel %vm424, %v1485, %v1487
    %v1489 = vsel %vm424, %v1487, %v1485
    %v1490 = vsel %vm103, %v1488, 0.0
    %v1491 = vsel %vm104, %v1489, 0.0
    %v1492 = vstv %s1083
    %v1493 = vmul.f32 %v1490, %v1492
    %v1494 = vmul.f32 %v1491, %v1492
    %v1495 = vadd.f32 %v1472, %v1493
    %v1496 = vadd.f32 %v1473, %v1494
    %v1497 = vstv %s1110
    %v1498 = vmul.f32 %v1490, %v1497
    %v1499 = vmul.f32 %v1491, %v1497
    %v1500 = vadd.f32 %v1477, %v1498
    %v1501 = vadd.f32 %v1478, %v1499
    %v1502 = vstv %s1137
    %v1503 = vmul.f32 %v1490, %v1502
    %v1504 = vmul.f32 %v1491, %v1502
    %v1505 = vadd.f32 %v1482, %v1503
    %v1506 = vadd.f32 %v1483, %v1504
    %1507 = vrot.lane.b32.xlu0 %v1064, 112
    %v1508 = vpop.permute.xlu0 %1507
    %1509 = vrot.lane.b32.xlu0 %v1065, 112
    %v1510 = vpop.permute.xlu0 %1509
    %v1511 = vsel %vm448, %v1508, %v1510
    %v1512 = vsel %vm448, %v1510, %v1508
    %v1513 = vsel %vm93, %v1511, 0.0
    %v1514 = vsel %vm94, %v1512, 0.0
    %v1515 = vstv %s1084
    %v1516 = vmul.f32 %v1513, %v1515
    %v1517 = vmul.f32 %v1514, %v1515
    %v1518 = vadd.f32 %v1495, %v1516
    %v1519 = vadd.f32 %v1496, %v1517
    %v1520 = vstv %s1111
    %v1521 = vmul.f32 %v1513, %v1520
    %v1522 = vmul.f32 %v1514, %v1520
    %v1523 = vadd.f32 %v1500, %v1521
    %v1524 = vadd.f32 %v1501, %v1522
    %v1525 = vstv %s1138
    %v1526 = vmul.f32 %v1513, %v1525
    %v1527 = vmul.f32 %v1514, %v1525
    %v1528 = vadd.f32 %v1505, %v1526
    %v1529 = vadd.f32 %v1506, %v1527
    %1530 = vrot.lane.b32.xlu0 %v1064, 111
    %v1531 = vpop.permute.xlu0 %1530
    %1532 = vrot.lane.b32.xlu0 %v1065, 111
    %v1533 = vpop.permute.xlu0 %1532
    %v1534 = vsel %vm472, %v1531, %v1533
    %v1535 = vsel %vm472, %v1533, %v1531
    %v1536 = vsel %vm105, %v1534, 0.0
    %v1537 = vsel %vm106, %v1535, 0.0
    %v1538 = vstv %s1085
    %v1539 = vmul.f32 %v1536, %v1538
    %v1540 = vmul.f32 %v1537, %v1538
    %v1541 = vadd.f32 %v1518, %v1539
    %v1542 = vadd.f32 %v1519, %v1540
    %v1543 = vstv %s1112
    %v1544 = vmul.f32 %v1536, %v1543
    %v1545 = vmul.f32 %v1537, %v1543
    %v1546 = vadd.f32 %v1523, %v1544
    %v1547 = vadd.f32 %v1524, %v1545
    %v1548 = vstv %s1139
    %v1549 = vmul.f32 %v1536, %v1548
    %v1550 = vmul.f32 %v1537, %v1548
    %v1551 = vadd.f32 %v1528, %v1549
    %v1552 = vadd.f32 %v1529, %v1550
    %1553 = vrot.lane.b32.xlu0 %v1066, 17
    %v1554 = vpop.permute.xlu0 %1553
    %1555 = vrot.lane.b32.xlu0 %v1067, 17
    %v1556 = vpop.permute.xlu0 %1555
    %v1557 = vsel %vm223, %v1554, %v1556
    %v1558 = vsel %vm223, %v1556, %v1554
    %v1559 = vsel %vm99, %v1558, 0.0
    %v1560 = vsel %vm100, %v1557, 0.0
    %v1561 = vstv %s1086
    %v1562 = vmul.f32 %v1559, %v1561
    %v1563 = vmul.f32 %v1560, %v1561
    %v1564 = vadd.f32 %v1541, %v1562
    %v1565 = vadd.f32 %v1542, %v1563
    %v1566 = vstv %s1113
    %v1567 = vmul.f32 %v1559, %v1566
    %v1568 = vmul.f32 %v1560, %v1566
    %v1569 = vadd.f32 %v1546, %v1567
    %v1570 = vadd.f32 %v1547, %v1568
    %v1571 = vstv %s1140
    %v1572 = vmul.f32 %v1559, %v1571
    %v1573 = vmul.f32 %v1560, %v1571
    %v1574 = vadd.f32 %v1551, %v1572
    %v1575 = vadd.f32 %v1552, %v1573
    %1576 = vrot.lane.b32.xlu0 %v1066, 16
    %v1577 = vpop.permute.xlu0 %1576
    %1578 = vrot.lane.b32.xlu0 %v1067, 16
    %v1579 = vpop.permute.xlu0 %1578
    %v1580 = vsel %vm247, %v1577, %v1579
    %v1581 = vsel %vm247, %v1579, %v1577
    %v1582 = vsel %vm91, %v1581, 0.0
    %v1583 = vsel %vm92, %v1580, 0.0
    %v1584 = vstv %s1087
    %v1585 = vmul.f32 %v1582, %v1584
    %v1586 = vmul.f32 %v1583, %v1584
    %v1587 = vadd.f32 %v1564, %v1585
    %v1588 = vadd.f32 %v1565, %v1586
    %v1589 = vstv %s1114
    %v1590 = vmul.f32 %v1582, %v1589
    %v1591 = vmul.f32 %v1583, %v1589
    %v1592 = vadd.f32 %v1569, %v1590
    %v1593 = vadd.f32 %v1570, %v1591
    %v1594 = vstv %s1141
    %v1595 = vmul.f32 %v1582, %v1594
    %v1596 = vmul.f32 %v1583, %v1594
    %v1597 = vadd.f32 %v1574, %v1595
    %v1598 = vadd.f32 %v1575, %v1596
    %1599 = vrot.lane.b32.xlu0 %v1066, 15
    %v1600 = vpop.permute.xlu0 %1599
    %1601 = vrot.lane.b32.xlu0 %v1067, 15
    %v1602 = vpop.permute.xlu0 %1601
    %v1603 = vsel %vm271, %v1600, %v1602
    %v1604 = vsel %vm271, %v1602, %v1600
    %v1605 = vsel %vm101, %v1604, 0.0
    %v1606 = vsel %vm102, %v1603, 0.0
    %v1607 = vstv %s1088
    %v1608 = vmul.f32 %v1605, %v1607
    %v1609 = vmul.f32 %v1606, %v1607
    %v1610 = vadd.f32 %v1587, %v1608
    %v1611 = vadd.f32 %v1588, %v1609
    %v1612 = vstv %s1115
    %v1613 = vmul.f32 %v1605, %v1612
    %v1614 = vmul.f32 %v1606, %v1612
    %v1615 = vadd.f32 %v1592, %v1613
    %v1616 = vadd.f32 %v1593, %v1614
    %v1617 = vstv %s1142
    %v1618 = vmul.f32 %v1605, %v1617
    %v1619 = vmul.f32 %v1606, %v1617
    %v1620 = vadd.f32 %v1597, %v1618
    %v1621 = vadd.f32 %v1598, %v1619
    %1622 = vrot.lane.b32.xlu0 %v1066, 1
    %v1623 = vpop.permute.xlu0 %1622
    %1624 = vrot.lane.b32.xlu0 %v1067, 1
    %v1625 = vpop.permute.xlu0 %1624
    %v1626 = vsel %vm295, %v1623, %v1625
    %v1627 = vsel %vm295, %v1625, %v1623
    %v1628 = vsel %vm95, %v1627, 0.0
    %v1629 = vsel %vm96, %v1626, 0.0
    %v1630 = vstv %s1089
    %v1631 = vmul.f32 %v1628, %v1630
    %v1632 = vmul.f32 %v1629, %v1630
    %v1633 = vadd.f32 %v1610, %v1631
    %v1634 = vadd.f32 %v1611, %v1632
    %v1635 = vstv %s1116
    %v1636 = vmul.f32 %v1628, %v1635
    %v1637 = vmul.f32 %v1629, %v1635
    %v1638 = vadd.f32 %v1615, %v1636
    %v1639 = vadd.f32 %v1616, %v1637
    %v1640 = vstv %s1143
    %v1641 = vmul.f32 %v1628, %v1640
    %v1642 = vmul.f32 %v1629, %v1640
    %v1643 = vadd.f32 %v1620, %v1641
    %v1644 = vadd.f32 %v1621, %v1642
    %v1645 = vstv %s1090
    %v1646 = vmul.f32 %v1066, %v1645
    %v1647 = vmul.f32 %v1067, %v1645
    %v1648 = vadd.f32 %v1633, %v1646
    %v1649 = vadd.f32 %v1634, %v1647
    %v1650 = vstv %s1117
    %v1651 = vmul.f32 %v1066, %v1650
    %v1652 = vmul.f32 %v1067, %v1650
    %v1653 = vadd.f32 %v1638, %v1651
    %v1654 = vadd.f32 %v1639, %v1652
    %v1655 = vstv %s1144
    %v1656 = vmul.f32 %v1066, %v1655
    %v1657 = vmul.f32 %v1067, %v1655
    %v1658 = vadd.f32 %v1643, %v1656
    %v1659 = vadd.f32 %v1644, %v1657
    %1660 = vrot.lane.b32.xlu0 %v1066, 127
    %v1661 = vpop.permute.xlu0 %1660
    %1662 = vrot.lane.b32.xlu0 %v1067, 127
    %v1663 = vpop.permute.xlu0 %1662
    %v1664 = vsel %vm400, %v1661, %v1663
    %v1665 = vsel %vm400, %v1663, %v1661
    %v1666 = vsel %vm97, %v1664, 0.0
    %v1667 = vsel %vm98, %v1665, 0.0
    %v1668 = vstv %s1091
    %v1669 = vmul.f32 %v1666, %v1668
    %v1670 = vmul.f32 %v1667, %v1668
    %v1671 = vadd.f32 %v1648, %v1669
    %v1672 = vadd.f32 %v1649, %v1670
    %v1673 = vstv %s1118
    %v1674 = vmul.f32 %v1666, %v1673
    %v1675 = vmul.f32 %v1667, %v1673
    %v1676 = vadd.f32 %v1653, %v1674
    %v1677 = vadd.f32 %v1654, %v1675
    %v1678 = vstv %s1145
    %v1679 = vmul.f32 %v1666, %v1678
    %v1680 = vmul.f32 %v1667, %v1678
    %v1681 = vadd.f32 %v1658, %v1679
    %v1682 = vadd.f32 %v1659, %v1680
    %1683 = vrot.lane.b32.xlu0 %v1066, 113
    %v1684 = vpop.permute.xlu0 %1683
    %1685 = vrot.lane.b32.xlu0 %v1067, 113
    %v1686 = vpop.permute.xlu0 %1685
    %v1687 = vsel %vm424, %v1684, %v1686
    %v1688 = vsel %vm424, %v1686, %v1684
    %v1689 = vsel %vm103, %v1687, 0.0
    %v1690 = vsel %vm104, %v1688, 0.0
    %v1691 = vstv %s1092
    %v1692 = vmul.f32 %v1689, %v1691
    %v1693 = vmul.f32 %v1690, %v1691
    %v1694 = vadd.f32 %v1671, %v1692
    %v1695 = vadd.f32 %v1672, %v1693
    %v1696 = vstv %s1119
    %v1697 = vmul.f32 %v1689, %v1696
    %v1698 = vmul.f32 %v1690, %v1696
    %v1699 = vadd.f32 %v1676, %v1697
    %v1700 = vadd.f32 %v1677, %v1698
    %v1701 = vstv %s1146
    %v1702 = vmul.f32 %v1689, %v1701
    %v1703 = vmul.f32 %v1690, %v1701
    %v1704 = vadd.f32 %v1681, %v1702
    %v1705 = vadd.f32 %v1682, %v1703
    %1706 = vrot.lane.b32.xlu0 %v1066, 112
    %v1707 = vpop.permute.xlu0 %1706
    %1708 = vrot.lane.b32.xlu0 %v1067, 112
    %v1709 = vpop.permute.xlu0 %1708
    %v1710 = vsel %vm448, %v1707, %v1709
    %v1711 = vsel %vm448, %v1709, %v1707
    %v1712 = vsel %vm93, %v1710, 0.0
    %v1713 = vsel %vm94, %v1711, 0.0
    %v1714 = vstv %s1093
    %v1715 = vmul.f32 %v1712, %v1714
    %v1716 = vmul.f32 %v1713, %v1714
    %v1717 = vadd.f32 %v1694, %v1715
    %v1718 = vadd.f32 %v1695, %v1716
    %v1719 = vstv %s1120
    %v1720 = vmul.f32 %v1712, %v1719
    %v1721 = vmul.f32 %v1713, %v1719
    %v1722 = vadd.f32 %v1699, %v1720
    %v1723 = vadd.f32 %v1700, %v1721
    %v1724 = vstv %s1147
    %v1725 = vmul.f32 %v1712, %v1724
    %v1726 = vmul.f32 %v1713, %v1724
    %v1727 = vadd.f32 %v1704, %v1725
    %v1728 = vadd.f32 %v1705, %v1726
    %1729 = vrot.lane.b32.xlu0 %v1066, 111
    %v1730 = vpop.permute.xlu0 %1729
    %1731 = vrot.lane.b32.xlu0 %v1067, 111
    %v1732 = vpop.permute.xlu0 %1731
    %v1733 = vsel %vm472, %v1730, %v1732
    %v1734 = vsel %vm472, %v1732, %v1730
    %v1735 = vsel %vm105, %v1733, 0.0
    %v1736 = vsel %vm106, %v1734, 0.0
    %v1737 = vstv %s1094
    %v1738 = vmul.f32 %v1735, %v1737
    %v1739 = vmul.f32 %v1736, %v1737
    %v1740 = vadd.f32 %v1717, %v1738
    %v1741 = vadd.f32 %v1718, %v1739
    %v1742 = vstv %s1121
    %v1743 = vmul.f32 %v1735, %v1742
    %v1744 = vmul.f32 %v1736, %v1742
    %v1745 = vadd.f32 %v1722, %v1743
    %v1746 = vadd.f32 %v1723, %v1744
    %v1747 = vstv %s1148
    %v1748 = vmul.f32 %v1735, %v1747
    %v1749 = vmul.f32 %v1736, %v1747
    %v1750 = vadd.f32 %v1727, %v1748
    %v1751 = vadd.f32 %v1728, %v1749
    %v1752 = vmax.f32 %v1740, 0.0
    %v1753 = vmax.f32 %v1741, 0.0
    %v1754 = vmax.f32 %v1745, 0.0
    %v1755 = vmax.f32 %v1746, 0.0
    %v1756 = vmax.f32 %v1750, 0.0
    %v1757 = vmax.f32 %v1751, 0.0
    %s1758 = sld [smem:[#allocation10]]
    %s1759 = sld [smem:[#allocation10 + $0x1]]
    %s1760 = sld [smem:[#allocation10 + $0x2]]
    %s1761 = sld [smem:[#allocation10 + $0x3]]
    %s1762 = sld [smem:[#allocation10 + $0x4]]
    %s1763 = sld [smem:[#allocation10 + $0x5]]
    %s1764 = sld [smem:[#allocation10 + $0x6]]
    %s1765 = sld [smem:[#allocation10 + $0x7]]
    %s1766 = sld [smem:[#allocation10 + $0x8]]
    %s1767 = sld [smem:[#allocation10 + $0x9]]
    %s1768 = sld [smem:[#allocation10 + $0xa]]
    %s1769 = sld [smem:[#allocation10 + $0xb]]
    %s1770 = sld [smem:[#allocation10 + $0xc]]
    %s1771 = sld [smem:[#allocation10 + $0xd]]
    %s1772 = sld [smem:[#allocation10 + $0xe]]
    %s1773 = sld [smem:[#allocation10 + $0xf]]
    %s1774 = sld [smem:[#allocation10 + $0x10]]
    %s1775 = sld [smem:[#allocation10 + $0x11]]
    %s1776 = sld [smem:[#allocation10 + $0x12]]
    %s1777 = sld [smem:[#allocation10 + $0x13]]
    %s1778 = sld [smem:[#allocation10 + $0x14]]
    %s1779 = sld [smem:[#allocation10 + $0x15]]
    %s1780 = sld [smem:[#allocation10 + $0x16]]
    %s1781 = sld [smem:[#allocation10 + $0x17]]
    %s1782 = sld [smem:[#allocation10 + $0x18]]
    %s1783 = sld [smem:[#allocation10 + $0x19]]
    %s1784 = sld [smem:[#allocation10 + $0x1a]]
    %s1785 = sld [smem:[#allocation2]]
    %v1786 = vstv %s1785
    %1787 = vrot.lane.b32.xlu0 %v1752, 17
    %v1788 = vpop.permute.xlu0 %1787
    %1789 = vrot.lane.b32.xlu0 %v1753, 17
    %v1790 = vpop.permute.xlu0 %1789
    %v1791 = vsel %vm223, %v1788, %v1790
    %v1792 = vsel %vm223, %v1790, %v1788
    %v1793 = vsel %vm99, %v1792, 0.0
    %v1794 = vsel %vm100, %v1791, 0.0
    %v1795 = vstv %s1758
    %v1796 = vmul.f32 %v1793, %v1795
    %v1797 = vmul.f32 %v1794, %v1795
    %v1798 = vadd.f32 %v1786, %v1796
    %v1799 = vadd.f32 %v1786, %v1797
    %1800 = vrot.lane.b32.xlu0 %v1752, 16
    %v1801 = vpop.permute.xlu0 %1800
    %1802 = vrot.lane.b32.xlu0 %v1753, 16
    %v1803 = vpop.permute.xlu0 %1802
    %v1804 = vsel %vm247, %v1801, %v1803
    %v1805 = vsel %vm247, %v1803, %v1801
    %v1806 = vsel %vm91, %v1805, 0.0
    %v1807 = vsel %vm92, %v1804, 0.0
    %v1808 = vstv %s1759
    %v1809 = vmul.f32 %v1806, %v1808
    %v1810 = vmul.f32 %v1807, %v1808
    %v1811 = vadd.f32 %v1798, %v1809
    %v1812 = vadd.f32 %v1799, %v1810
    %1813 = vrot.lane.b32.xlu0 %v1752, 15
    %v1814 = vpop.permute.xlu0 %1813
    %1815 = vrot.lane.b32.xlu0 %v1753, 15
    %v1816 = vpop.permute.xlu0 %1815
    %v1817 = vsel %vm271, %v1814, %v1816
    %v1818 = vsel %vm271, %v1816, %v1814
    %v1819 = vsel %vm101, %v1818, 0.0
    %v1820 = vsel %vm102, %v1817, 0.0
    %v1821 = vstv %s1760
    %v1822 = vmul.f32 %v1819, %v1821
    %v1823 = vmul.f32 %v1820, %v1821
    %v1824 = vadd.f32 %v1811, %v1822
    %v1825 = vadd.f32 %v1812, %v1823
    %1826 = vrot.lane.b32.xlu0 %v1752, 1
    %v1827 = vpop.permute.xlu0 %1826
    %1828 = vrot.lane.b32.xlu0 %v1753, 1
    %v1829 = vpop.permute.xlu0 %1828
    %v1830 = vsel %vm295, %v1827, %v1829
    %v1831 = vsel %vm295, %v1829, %v1827
    %v1832 = vsel %vm95, %v1831, 0.0
    %v1833 = vsel %vm96, %v1830, 0.0
    %v1834 = vstv %s1761
    %v1835 = vmul.f32 %v1832, %v1834
    %v1836 = vmul.f32 %v1833, %v1834
    %v1837 = vadd.f32 %v1824, %v1835
    %v1838 = vadd.f32 %v1825, %v1836
    %v1839 = vstv %s1762
    %v1840 = vmul.f32 %v1752, %v1839
    %v1841 = vmul.f32 %v1753, %v1839
    %v1842 = vadd.f32 %v1837, %v1840
    %v1843 = vadd.f32 %v1838, %v1841
    %1844 = vrot.lane.b32.xlu0 %v1752, 127
    %v1845 = vpop.permute.xlu0 %1844
    %1846 = vrot.lane.b32.xlu0 %v1753, 127
    %v1847 = vpop.permute.xlu0 %1846
    %v1848 = vsel %vm400, %v1845, %v1847
    %v1849 = vsel %vm400, %v1847, %v1845
    %v1850 = vsel %vm97, %v1848, 0.0
    %v1851 = vsel %vm98, %v1849, 0.0
    %v1852 = vstv %s1763
    %v1853 = vmul.f32 %v1850, %v1852
    %v1854 = vmul.f32 %v1851, %v1852
    %v1855 = vadd.f32 %v1842, %v1853
    %v1856 = vadd.f32 %v1843, %v1854
    %1857 = vrot.lane.b32.xlu0 %v1752, 113
    %v1858 = vpop.permute.xlu0 %1857
    %1859 = vrot.lane.b32.xlu0 %v1753, 113
    %v1860 = vpop.permute.xlu0 %1859
    %v1861 = vsel %vm424, %v1858, %v1860
    %v1862 = vsel %vm424, %v1860, %v1858
    %v1863 = vsel %vm103, %v1861, 0.0
    %v1864 = vsel %vm104, %v1862, 0.0
    %v1865 = vstv %s1764
    %v1866 = vmul.f32 %v1863, %v1865
    %v1867 = vmul.f32 %v1864, %v1865
    %v1868 = vadd.f32 %v1855, %v1866
    %v1869 = vadd.f32 %v1856, %v1867
    %1870 = vrot.lane.b32.xlu0 %v1752, 112
    %v1871 = vpop.permute.xlu0 %1870
    %1872 = vrot.lane.b32.xlu0 %v1753, 112
    %v1873 = vpop.permute.xlu0 %1872
    %v1874 = vsel %vm448, %v1871, %v1873
    %v1875 = vsel %vm448, %v1873, %v1871
    %v1876 = vsel %vm93, %v1874, 0.0
    %v1877 = vsel %vm94, %v1875, 0.0
    %v1878 = vstv %s1765
    %v1879 = vmul.f32 %v1876, %v1878
    %v1880 = vmul.f32 %v1877, %v1878
    %v1881 = vadd.f32 %v1868, %v1879
    %v1882 = vadd.f32 %v1869, %v1880
    %1883 = vrot.lane.b32.xlu0 %v1752, 111
    %v1884 = vpop.permute.xlu0 %1883
    %1885 = vrot.lane.b32.xlu0 %v1753, 111
    %v1886 = vpop.permute.xlu0 %1885
    %v1887 = vsel %vm472, %v1884, %v1886
    %v1888 = vsel %vm472, %v1886, %v1884
    %v1889 = vsel %vm105, %v1887, 0.0
    %v1890 = vsel %vm106, %v1888, 0.0
    %v1891 = vstv %s1766
    %v1892 = vmul.f32 %v1889, %v1891
    %v1893 = vmul.f32 %v1890, %v1891
    %v1894 = vadd.f32 %v1881, %v1892
    %v1895 = vadd.f32 %v1882, %v1893
    %1896 = vrot.lane.b32.xlu0 %v1754, 17
    %v1897 = vpop.permute.xlu0 %1896
    %1898 = vrot.lane.b32.xlu0 %v1755, 17
    %v1899 = vpop.permute.xlu0 %1898
    %v1900 = vsel %vm223, %v1897, %v1899
    %v1901 = vsel %vm223, %v1899, %v1897
    %v1902 = vsel %vm99, %v1901, 0.0
    %v1903 = vsel %vm100, %v1900, 0.0
    %v1904 = vstv %s1767
    %v1905 = vmul.f32 %v1902, %v1904
    %v1906 = vmul.f32 %v1903, %v1904
    %v1907 = vadd.f32 %v1894, %v1905
    %v1908 = vadd.f32 %v1895, %v1906
    %1909 = vrot.lane.b32.xlu0 %v1754, 16
    %v1910 = vpop.permute.xlu0 %1909
    %1911 = vrot.lane.b32.xlu0 %v1755, 16
    %v1912 = vpop.permute.xlu0 %1911
    %v1913 = vsel %vm247, %v1910, %v1912
    %v1914 = vsel %vm247, %v1912, %v1910
    %v1915 = vsel %vm91, %v1914, 0.0
    %v1916 = vsel %vm92, %v1913, 0.0
    %v1917 = vstv %s1768
    %v1918 = vmul.f32 %v1915, %v1917
    %v1919 = vmul.f32 %v1916, %v1917
    %v1920 = vadd.f32 %v1907, %v1918
    %v1921 = vadd.f32 %v1908, %v1919
    %1922 = vrot.lane.b32.xlu0 %v1754, 15
    %v1923 = vpop.permute.xlu0 %1922
    %1924 = vrot.lane.b32.xlu0 %v1755, 15
    %v1925 = vpop.permute.xlu0 %1924
    %v1926 = vsel %vm271, %v1923, %v1925
    %v1927 = vsel %vm271, %v1925, %v1923
    %v1928 = vsel %vm101, %v1927, 0.0
    %v1929 = vsel %vm102, %v1926, 0.0
    %v1930 = vstv %s1769
    %v1931 = vmul.f32 %v1928, %v1930
    %v1932 = vmul.f32 %v1929, %v1930
    %v1933 = vadd.f32 %v1920, %v1931
    %v1934 = vadd.f32 %v1921, %v1932
    %1935 = vrot.lane.b32.xlu0 %v1754, 1
    %v1936 = vpop.permute.xlu0 %1935
    %1937 = vrot.lane.b32.xlu0 %v1755, 1
    %v1938 = vpop.permute.xlu0 %1937
    %v1939 = vsel %vm295, %v1936, %v1938
    %v1940 = vsel %vm295, %v1938, %v1936
    %v1941 = vsel %vm95, %v1940, 0.0
    %v1942 = vsel %vm96, %v1939, 0.0
    %v1943 = vstv %s1770
    %v1944 = vmul.f32 %v1941, %v1943
    %v1945 = vmul.f32 %v1942, %v1943
    %v1946 = vadd.f32 %v1933, %v1944
    %v1947 = vadd.f32 %v1934, %v1945
    %v1948 = vstv %s1771
    %v1949 = vmul.f32 %v1754, %v1948
    %v1950 = vmul.f32 %v1755, %v1948
    %v1951 = vadd.f32 %v1946, %v1949
    %v1952 = vadd.f32 %v1947, %v1950
    %1953 = vrot.lane.b32.xlu0 %v1754, 127
    %v1954 = vpop.permute.xlu0 %1953
    %1955 = vrot.lane.b32.xlu0 %v1755, 127
    %v1956 = vpop.permute.xlu0 %1955
    %v1957 = vsel %vm400, %v1954, %v1956
    %v1958 = vsel %vm400, %v1956, %v1954
    %v1959 = vsel %vm97, %v1957, 0.0
    %v1960 = vsel %vm98, %v1958, 0.0
    %v1961 = vstv %s1772
    %v1962 = vmul.f32 %v1959, %v1961
    %v1963 = vmul.f32 %v1960, %v1961
    %v1964 = vadd.f32 %v1951, %v1962
    %v1965 = vadd.f32 %v1952, %v1963
    %1966 = vrot.lane.b32.xlu0 %v1754, 113
    %v1967 = vpop.permute.xlu0 %1966
    %1968 = vrot.lane.b32.xlu0 %v1755, 113
    %v1969 = vpop.permute.xlu0 %1968
    %v1970 = vsel %vm424, %v1967, %v1969
    %v1971 = vsel %vm424, %v1969, %v1967
    %v1972 = vsel %vm103, %v1970, 0.0
    %v1973 = vsel %vm104, %v1971, 0.0
    %v1974 = vstv %s1773
    %v1975 = vmul.f32 %v1972, %v1974
    %v1976 = vmul.f32 %v1973, %v1974
    %v1977 = vadd.f32 %v1964, %v1975
    %v1978 = vadd.f32 %v1965, %v1976
    %1979 = vrot.lane.b32.xlu0 %v1754, 112
    %v1980 = vpop.permute.xlu0 %1979
    %1981 = vrot.lane.b32.xlu0 %v1755, 112
    %v1982 = vpop.permute.xlu0 %1981
    %v1983 = vsel %vm448, %v1980, %v1982
    %v1984 = vsel %vm448, %v1982, %v1980
    %v1985 = vsel %vm93, %v1983, 0.0
    %v1986 = vsel %vm94, %v1984, 0.0
    %v1987 = vstv %s1774
    %v1988 = vmul.f32 %v1985, %v1987
    %v1989 = vmul.f32 %v1986, %v1987
    %v1990 = vadd.f32 %v1977, %v1988
    %v1991 = vadd.f32 %v1978, %v1989
    %1992 = vrot.lane.b32.xlu0 %v1754, 111
    %v1993 = vpop.permute.xlu0 %1992
    %1994 = vrot.lane.b32.xlu0 %v1755, 111
    %v1995 = vpop.permute.xlu0 %1994
    %v1996 = vsel %vm472, %v1993, %v1995
    %v1997 = vsel %vm472, %v1995, %v1993
    %v1998 = vsel %vm105, %v1996, 0.0
    %v1999 = vsel %vm106, %v1997, 0.0
    %v2000 = vstv %s1775
    %v2001 = vmul.f32 %v1998, %v2000
    %v2002 = vmul.f32 %v1999, %v2000
    %v2003 = vadd.f32 %v1990, %v2001
    %v2004 = vadd.f32 %v1991, %v2002
    %2005 = vrot.lane.b32.xlu0 %v1756, 17
    %v2006 = vpop.permute.xlu0 %2005
    %2007 = vrot.lane.b32.xlu0 %v1757, 17
    %v2008 = vpop.permute.xlu0 %2007
    %v2009 = vsel %vm223, %v2006, %v2008
    %v2010 = vsel %vm223, %v2008, %v2006
    %v2011 = vsel %vm99, %v2010, 0.0
    %v2012 = vsel %vm100, %v2009, 0.0
    %v2013 = vstv %s1776
    %v2014 = vmul.f32 %v2011, %v2013
    %v2015 = vmul.f32 %v2012, %v2013
    %v2016 = vadd.f32 %v2003, %v2014
    %v2017 = vadd.f32 %v2004, %v2015
    %2018 = vrot.lane.b32.xlu0 %v1756, 16
    %v2019 = vpop.permute.xlu0 %2018
    %2020 = vrot.lane.b32.xlu0 %v1757, 16
    %v2021 = vpop.permute.xlu0 %2020
    %v2022 = vsel %vm247, %v2019, %v2021
    %v2023 = vsel %vm247, %v2021, %v2019
    %v2024 = vsel %vm91, %v2023, 0.0
    %v2025 = vsel %vm92, %v2022, 0.0
    %v2026 = vstv %s1777
    %v2027 = vmul.f32 %v2024, %v2026
    %v2028 = vmul.f32 %v2025, %v2026
    %v2029 = vadd.f32 %v2016, %v2027
    %v2030 = vadd.f32 %v2017, %v2028
    %2031 = vrot.lane.b32.xlu0 %v1756, 15
    %v2032 = vpop.permute.xlu0 %2031
    %2033 = vrot.lane.b32.xlu0 %v1757, 15
    %v2034 = vpop.permute.xlu0 %2033
    %v2035 = vsel %vm271, %v2032, %v2034
    %v2036 = vsel %vm271, %v2034, %v2032
    %v2037 = vsel %vm101, %v2036, 0.0
    %v2038 = vsel %vm102, %v2035, 0.0
    %v2039 = vstv %s1778
    %v2040 = vmul.f32 %v2037, %v2039
    %v2041 = vmul.f32 %v2038, %v2039
    %v2042 = vadd.f32 %v2029, %v2040
    %v2043 = vadd.f32 %v2030, %v2041
    %2044 = vrot.lane.b32.xlu0 %v1756, 1
    %v2045 = vpop.permute.xlu0 %2044
    %2046 = vrot.lane.b32.xlu0 %v1757, 1
    %v2047 = vpop.permute.xlu0 %2046
    %v2048 = vsel %vm295, %v2045, %v2047
    %v2049 = vsel %vm295, %v2047, %v2045
    %v2050 = vsel %vm95, %v2049, 0.0
    %v2051 = vsel %vm96, %v2048, 0.0
    %v2052 = vstv %s1779
    %v2053 = vmul.f32 %v2050, %v2052
    %v2054 = vmul.f32 %v2051, %v2052
    %v2055 = vadd.f32 %v2042, %v2053
    %v2056 = vadd.f32 %v2043, %v2054
    %v2057 = vstv %s1780
    %v2058 = vmul.f32 %v1756, %v2057
    %v2059 = vmul.f32 %v1757, %v2057
    %v2060 = vadd.f32 %v2055, %v2058
    %v2061 = vadd.f32 %v2056, %v2059
    %2062 = vrot.lane.b32.xlu0 %v1756, 127
    %v2063 = vpop.permute.xlu0 %2062
    %2064 = vrot.lane.b32.xlu0 %v1757, 127
    %v2065 = vpop.permute.xlu0 %2064
    %v2066 = vsel %vm400, %v2063, %v2065
    %v2067 = vsel %vm400, %v2065, %v2063
    %v2068 = vsel %vm97, %v2066, 0.0
    %v2069 = vsel %vm98, %v2067, 0.0
    %v2070 = vstv %s1781
    %v2071 = vmul.f32 %v2068, %v2070
    %v2072 = vmul.f32 %v2069, %v2070
    %v2073 = vadd.f32 %v2060, %v2071
    %v2074 = vadd.f32 %v2061, %v2072
    %2075 = vrot.lane.b32.xlu0 %v1756, 113
    %v2076 = vpop.permute.xlu0 %2075
    %2077 = vrot.lane.b32.xlu0 %v1757, 113
    %v2078 = vpop.permute.xlu0 %2077
    %v2079 = vsel %vm424, %v2076, %v2078
    %v2080 = vsel %vm424, %v2078, %v2076
    %v2081 = vsel %vm103, %v2079, 0.0
    %v2082 = vsel %vm104, %v2080, 0.0
    %v2083 = vstv %s1782
    %v2084 = vmul.f32 %v2081, %v2083
    %v2085 = vmul.f32 %v2082, %v2083
    %v2086 = vadd.f32 %v2073, %v2084
    %v2087 = vadd.f32 %v2074, %v2085
    %2088 = vrot.lane.b32.xlu0 %v1756, 112
    %v2089 = vpop.permute.xlu0 %2088
    %2090 = vrot.lane.b32.xlu0 %v1757, 112
    %v2091 = vpop.permute.xlu0 %2090
    %v2092 = vsel %vm448, %v2089, %v2091
    %v2093 = vsel %vm448, %v2091, %v2089
    %v2094 = vsel %vm93, %v2092, 0.0
    %v2095 = vsel %vm94, %v2093, 0.0
    %v2096 = vstv %s1783
    %v2097 = vmul.f32 %v2094, %v2096
    %v2098 = vmul.f32 %v2095, %v2096
    %v2099 = vadd.f32 %v2086, %v2097
    %v2100 = vadd.f32 %v2087, %v2098
    %2101 = vrot.lane.b32.xlu0 %v1756, 111
    %v2102 = vpop.permute.xlu0 %2101
    %2103 = vrot.lane.b32.xlu0 %v1757, 111
    %v2104 = vpop.permute.xlu0 %2103
    %v2105 = vsel %vm472, %v2102, %v2104
    %v2106 = vsel %vm472, %v2104, %v2102
    %v2107 = vsel %vm105, %v2105, 0.0
    %v2108 = vsel %vm106, %v2106, 0.0
    %v2109 = vstv %s1784
    %v2110 = vmul.f32 %v2107, %v2109
    %v2111 = vmul.f32 %v2108, %v2109
    %v2112 = vadd.f32 %v2099, %v2110
    %v2113 = vadd.f32 %v2100, %v2111
    %v2116 = vcombine.low %v2112, %v2113
    %v2118 = vunpack.c.l.s4 1983009808
    %v2119 = vunpack.c.0.s8 %v2118
    %v2120 = vlaneseq
    %v2121 = vshrl.u32 %v2120, 7
    %v2122 = vsub.s32 %v2119, %v2121
    %v2123 = vrot.slane %v2116, %v2122
    %2125 = vst [vmem:[%s7] sm:$0xf] %v2123
    // Predicated region
    $region50: #{l3agg_forward.1} parent=1 // pred_check
      _
    $region51: #{l3agg_forward.1} parent=1 // pred_check_branch
      %2127 = sbr.rel (0) target = $region53
    $region52: #{l3agg_forward.1} parent=1 // pred_region
      _
    $region53: #{l3agg_forward.1} parent=1 // pred_fallthru
      _
    // Predicated region
    $region54: #{l3agg_forward.1} parent=1 // pred_check
      _
    $region55: #{l3agg_forward.1} parent=1 // pred_check_branch
      %2129 = sbr.rel (0) target = $region57
    $region56: #{l3agg_forward.1} parent=1 // pred_region
      _
    $region57: #{l3agg_forward.1} parent=1 // pred_fallthru
      _
    %2130 = vsyncpa [#allocation4], 1
    %2131 = vsyncpa [#allocation6], 1
    %2132 = vsyncpa [#allocation9], 1

</llo_original>
